<compile_context>
chip_gen: v6e
topology: v6e:2x2x1
jax: 0.10.0
libtpu: 0.0.40
codegen_flags: <defaults>
</compile_context>

<pallas_src>
import functools

import jax
import jax.numpy as jnp
from jax import lax
from jax.experimental import pallas as pl
from jax.experimental.pallas import tpu as pltpu

EPS = 1e-5
NEG_SLOPE = 0.2
LANE = 128


def _leaky(z):
    return jnp.where(z > 0, z, NEG_SLOPE * z)


def _round_up(v, m):
    return (v + m - 1) // m * m


def _cdiv(a, b):
    return -(-a // b)


# ---------------------------------------------------------------------------
# Pallas implementation
# ---------------------------------------------------------------------------
def basic_block_forward(x_nchw, params, *, ts=None, max_chunk_lanes=4096,
                        mm_dtype=jnp.bfloat16, out_dtype=jnp.float32,
                        vmem_limit=48 * 1024 * 1024):
    """BasicBlock forward (stride=1). x: (N, Cin, H, W) f32 -> (N, Cout, H, W)."""
    N, Ci, H, W = x_nchw.shape
    Co = params['w1'].shape[-1]
    assert Co % 8 == 0, "out_channels must be a multiple of 8 (sublane tile)"
    Ci_p = _round_up(Ci, 8)                    # pad in-channels to sublane tile
    Hp, Wp = H + 2, W + 2
    Sp = Hp * Wp                               # padded spatial size per sample
    # Halo correctness: every 3x3 tap of an UNMASKED output position stays
    # within +/-(Wp+1) <= 128 lanes of it, and the first/last (Wp+1) positions
    # of every sample are padding-ring positions whose outputs are masked, so
    # clamped / cross-sample halo blocks only ever feed masked outputs.
    assert Wp + 1 <= LANE, "image width too large for the 128-lane conv halo"

    # ---- chunking: J chunks of TS lanes per sample, Spp = J*TS ------------
    KB0 = _cdiv(Sp, LANE)
    if ts is None:
        tb_cap = max(1, max_chunk_lanes // LANE)
        J = _cdiv(KB0, min(KB0, tb_cap))
        TB = _cdiv(KB0, J)                     # pads < J*128 extra lanes
        TS = TB * LANE
    else:
        assert ts % LANE == 0
        TS, TB = ts, ts // LANE
        J = _cdiv(Sp, TS)
    Spp = J * TS
    KB = J * TB                                # 128-lane blocks per sample
    L = N * Spp
    NKB = N * KB

    # tap offsets of a 3x3 conv in the flattened zero-padded spatial axis
    DELTAS = [(ky - 1) * Wp + (kx - 1) for ky in range(3) for kx in range(3)]

    # ---- host-side layout plumbing (pads / reshapes / transposes only) ----
    def to_lanes(a):                           # (N,C,Hp,Wp) -> (C, N*Spp)
        n, c = a.shape[:2]
        a = a.reshape(n, c, Sp)
        a = jnp.pad(a, ((0, 0), (0, 0), (0, Spp - Sp)))
        return jnp.transpose(a, (1, 0, 2)).reshape(c, n * Spp)

    xpad = jnp.pad(x_nchw.astype(jnp.float32),
                   ((0, 0), (0, Ci_p - Ci), (1, 1), (1, 1)))
    xf = to_lanes(xpad).astype(mm_dtype)                        # (Ci_p, L)

    mask2d = jnp.pad(jnp.ones((H, W), jnp.float32), ((1, 1), (1, 1)))
    mask = jnp.pad(mask2d.reshape(1, Sp), ((0, 0), (0, Spp - Sp)))  # (1, Spp)

    # conv weights flattened for a single K=9*Cin contraction per tile
    w1p = jnp.pad(params['w1'], ((0, 0), (0, 0), (0, Ci_p - Ci), (0, 0)))
    w1f = jnp.transpose(w1p.reshape(9, Ci_p, Co),
                        (2, 0, 1)).reshape(Co, 9 * Ci_p).astype(mm_dtype)
    w2f = jnp.transpose(params['w2'].reshape(9, Co, Co),
                        (2, 0, 1)).reshape(Co, 9 * Co).astype(mm_dtype)
    wsp = jnp.pad(params['ws'], ((0, Ci_p - Ci), (0, 0)))       # (Ci_p, Co)
    wst = jnp.transpose(wsp, (1, 0)).astype(mm_dtype)           # (Co, Ci_p)

    cparams2 = pltpu.CompilerParams(
        dimension_semantics=("parallel", "arbitrary"),
        vmem_limit_bytes=vmem_limit)
    cparams3 = pltpu.CompilerParams(
        dimension_semantics=("parallel", "arbitrary", "arbitrary"),
        vmem_limit_bytes=vmem_limit)

    # ---- BlockSpec helpers (2-D grid) -------------------------------------
    def cur_spec(c):
        return pl.BlockSpec((c, TS), lambda n, j: (0, n * J + j))

    def left_spec(c):        # 128-lane halo just before the chunk (clamped)
        return pl.BlockSpec(
            (c, LANE), lambda n, j: (0, jnp.maximum(n * KB + j * TB - 1, 0)))

    def right_spec(c):       # 128-lane halo just after the chunk (clamped)
        return pl.BlockSpec(
            (c, LANE),
            lambda n, j: (0, jnp.minimum(n * KB + (j + 1) * TB, NKB - 1)))

    def mask_cur():
        return pl.BlockSpec((1, TS), lambda n, j: (0, j))

    def mask_left():
        return pl.BlockSpec((1, LANE), lambda n, j: (0, jnp.maximum(j * TB - 1, 0)))

    def mask_right():
        return pl.BlockSpec((1, LANE),
                            lambda n, j: (0, jnp.minimum((j + 1) * TB, KB - 1)))

    def full2(shape):
        return pl.BlockSpec(shape, lambda n, j, _nd=len(shape): (0,) * _nd)

    def conv_cols(halo):
        # halo: (C, TS + 2*LANE) -> (9*C, TS), tap t occupies rows [t*C,(t+1)*C)
        return jnp.concatenate(
            [halo[:, LANE + d: LANE + d + TS] for d in DELTAS], axis=0)

    # =======================================================================
    # Pass 1: conv1 (3x3) as ONE K=9*Cin matmul per tile; shortcut 1x1 conv
    #         computed only for its BN statistics (not written to HBM);
    #         per-sample sum / sumsq accumulated in a resident output block.
    # =======================================================================
    def k_conv1(xl_ref, xc_ref, xr_ref, m_ref, w1_ref, ws_ref,
                z1_ref, st_ref):
        j = pl.program_id(1)
        halo = jnp.concatenate([xl_ref[...], xc_ref[...], xr_ref[...]], axis=1)
        cols = conv_cols(halo)                                   # (9*Ci_p, TS)
        z1 = jnp.dot(w1_ref[...], cols,
                     preferred_element_type=jnp.float32) * m_ref[...]
        zs = jnp.dot(ws_ref[...], xc_ref[...],
                     preferred_element_type=jnp.float32)         # x pad ring is 0
        z1_ref[...] = z1.astype(z1_ref.dtype)
        stat = jnp.concatenate(
            [jnp.sum(z1, axis=1, keepdims=True),
             jnp.sum(z1 * z1, axis=1, keepdims=True),
             jnp.sum(zs, axis=1, keepdims=True),
             jnp.sum(zs * zs, axis=1, keepdims=True)], axis=1)   # (Co, 4)

        @pl.when(j == 0)
        def _():
            st_ref[...] = jnp.zeros_like(st_ref)

        st_ref[0] += stat

    z1f, st1 = pl.pallas_call(
        k_conv1,
        grid=(N, J),
        in_specs=[left_spec(Ci_p), cur_spec(Ci_p), right_spec(Ci_p),
                  mask_cur(), full2((Co, 9 * Ci_p)), full2((Co, Ci_p))],
        out_specs=(cur_spec(Co),
                   pl.BlockSpec((1, Co, 4), lambda n, j: (n, 0, 0))),
        out_shape=(jax.ShapeDtypeStruct((Co, L), mm_dtype),
                   jax.ShapeDtypeStruct((N, Co, 4), jnp.float32)),
        compiler_params=cparams2,
    )(xf, xf, xf, mask, w1f, wst)

    # fold batch stats into per-channel affine (a, c):  BN(z) = a*z + c
    cnt = float(N * H * W)

    def bn_affine(s_sum, s_sq, gamma, beta):
        mean = s_sum / cnt
        var = s_sq / cnt - mean * mean
        a = gamma.reshape(-1) * lax.rsqrt(var + EPS)
        c = beta.reshape(-1) - mean * a
        return jnp.stack([a, c], axis=1).astype(jnp.float32)     # (Co, 2)

    s1 = jnp.sum(st1, axis=0)
    bn1 = bn_affine(s1[:, 0], s1[:, 1], params['g1'], params['b1'])
    bns = bn_affine(s1[:, 2], s1[:, 3], params['gs'], params['bs'])

    # =======================================================================
    # Pass 2: y1 = LeakyReLU(BN1(z1)) fused into the bf16 halo read (no f32
    #         halo temp, y1 never hits HBM); conv2 (3x3) as one K=9*Co dot;
    #         per-sample sum / sumsq of r accumulated for BN2.
    # =======================================================================
    def k_conv2(zl_ref, zc_ref, zr_ref, ml_ref, mc_ref, mr_ref,
                bn1_ref, w2_ref, r_ref, st_ref):
        j = pl.program_id(1)
        zh = jnp.concatenate([zl_ref[...], zc_ref[...], zr_ref[...]], axis=1)
        mh = jnp.concatenate([ml_ref[...], mc_ref[...], mr_ref[...]], axis=1)
        a1 = bn1_ref[:, 0:1]
        c1 = bn1_ref[:, 1:2]
        y = (_leaky(a1 * zh + c1) * mh).astype(mm_dtype)   # zero outside image
        cols = conv_cols(y)                                      # (9*Co, TS)
        r = jnp.dot(w2_ref[...], cols,
                    preferred_element_type=jnp.float32) * mc_ref[...]
        r_ref[...] = r.astype(r_ref.dtype)
        stat = jnp.concatenate(
            [jnp.sum(r, axis=1, keepdims=True),
             jnp.sum(r * r, axis=1, keepdims=True)], axis=1)     # (Co, 2)

        @pl.when(j == 0)
        def _():
            st_ref[...] = jnp.zeros_like(st_ref)

        st_ref[0] += stat

    rf, st2 = pl.pallas_call(
        k_conv2,
        grid=(N, J),
        in_specs=[left_spec(Co), cur_spec(Co), right_spec(Co),
                  mask_left(), mask_cur(), mask_right(),
                  full2((Co, 2)), full2((Co, 9 * Co))],
        out_specs=(cur_spec(Co),
                   pl.BlockSpec((1, Co, 2), lambda n, j: (n, 0, 0))),
        out_shape=(jax.ShapeDtypeStruct((Co, L), mm_dtype),
                   jax.ShapeDtypeStruct((N, Co, 2), jnp.float32)),
        compiler_params=cparams2,
    )(z1f, z1f, z1f, mask, mask, mask, bn1, w2f)

    s2 = jnp.sum(st2, axis=0)
    bn2 = bn_affine(s2[:, 0], s2[:, 1], params['g2'], params['b2'])

    # GAP(BN2(r)) per sample comes straight from the pass-2 channel sums.
    inv_hw = 1.0 / float(H * W)
    gap_raw = (bn2[:, 0][None, :] * st2[:, :, 0] * inv_hw
               + bn2[:, 1][None, :])                              # (N, Co)
    gap_raw_c = gap_raw.reshape(N, Co, 1).astype(jnp.float32)

    # FC weights oriented for (Co,Co)@(Co,1) column matvecs in-kernel
    wfcT = jnp.transpose(params['wfc']).astype(jnp.float32)      # (Co, Co)
    wfc1T = jnp.transpose(params['wfc1']).astype(jnp.float32)
    bfc_c = params['bfc'].reshape(Co, 1).astype(jnp.float32)
    bfc1_c = params['bfc1'].reshape(Co, 1).astype(jnp.float32)

    # =======================================================================
    # Pass 3 (fused epilogue), grid (N, 2, J):
    #   phase 0: accumulate GAP(|BN2(r)|) into VMEM scratch (output window is
    #            parked on a trash tile -> no spurious writeback)
    #   phase boundary (p==1, j==0): run the sigmoid / tanh FCs in-kernel
    #   phase 1: BN2 + shrinkage + recomputed 1x1 shortcut + BNs + LeakyReLU
    # =======================================================================
    TRASH = N * J                              # extra output tile for phase 0

    def cur3(c):
        return pl.BlockSpec((c, TS), lambda n, p, j: (0, n * J + j))

    def x3():
        # phase 0: stay on the sample's first block (prefetched, fetched once)
        return pl.BlockSpec((Ci_p, TS), lambda n, p, j: (0, n * J + p * j))

    def mask3():
        return pl.BlockSpec((1, TS), lambda n, p, j: (0, j))

    def full3(shape):
        return pl.BlockSpec(shape, lambda n, p, j, _nd=len(shape): (0,) * _nd)

    def per_sample3(shape):
        return pl.BlockSpec(shape,
                            lambda n, p, j, _nd=len(shape): (n,) + (0,) * (_nd - 1))

    def out3():
        return pl.BlockSpec(
            (Co, TS),
            lambda n, p, j: (0, p * (n * J + j) + (1 - p) * TRASH))

    def k_epilogue(r_ref, x_ref, m_ref, bn2_ref, bns_ref, gapr_ref,
                   wfc_ref, bfc_ref, wfc1_ref, bfc1_ref, ws_ref,
                   o_ref, gap_sc, thr_sc, tv_sc):
        p = pl.program_id(1)
        j = pl.program_id(2)
        a2 = bn2_ref[:, 0:1]
        c2 = bn2_ref[:, 1:2]

        @pl.when(p == 0)
        def _gap_phase():
            rn = (a2 * r_ref[...] + c2) * m_ref[...]

            @pl.when(j == 0)
            def _():
                gap_sc[...] = jnp.zeros_like(gap_sc)

            gap_sc[...] += jnp.sum(jnp.abs(rn), axis=1, keepdims=True)

        @pl.when(p == 1)
        def _out_phase():
            @pl.when(j == 0)
            def _fc():
                avg = gap_sc[...] * inv_hw                       # (Co, 1)
                sig = jax.nn.sigmoid(
                    jnp.dot(wfc_ref[...], avg,
                            preferred_element_type=jnp.float32) + bfc_ref[...])
                thr_sc[...] = avg * sig                          # >= 0
                tv_sc[...] = jnp.tanh(
                    jnp.dot(wfc1_ref[...], gapr_ref[0],
                            preferred_element_type=jnp.float32) + bfc1_ref[...])

            rn = a2 * r_ref[...] + c2
            zs = jnp.dot(ws_ref[...], x_ref[...],
                         preferred_element_type=jnp.float32)     # 1x1 shortcut
            sc = bns_ref[:, 0:1] * zs + bns_ref[:, 1:2]
            thr = thr_sc[...]
            nsub = jnp.maximum(jnp.abs(rn) - thr, 0.0)
            # sign(rn)*nsub == where(rn>=0, nsub, -nsub) since nsub==0 at rn==0
            res = rn * tv_sc[...] + jnp.where(rn >= 0, nsub, -nsub)
            o_ref[...] = _leaky(res + sc).astype(o_ref.dtype)

    outf = pl.pallas_call(
        k_epilogue,
        grid=(N, 2, J),
        in_specs=[cur3(Co), x3(), mask3(),
                  full3((Co, 2)), full3((Co, 2)),
                  per_sample3((1, Co, 1)),
                  full3((Co, Co)), full3((Co, 1)),
                  full3((Co, Co)), full3((Co, 1)),
                  full3((Co, Ci_p))],
        out_specs=out3(),
        out_shape=jax.ShapeDtypeStruct((Co, L + TS), out_dtype),
        scratch_shapes=[pltpu.VMEM((Co, 1), jnp.float32),
                        pltpu.VMEM((Co, 1), jnp.float32),
                        pltpu.VMEM((Co, 1), jnp.float32)],
        compiler_params=cparams3,
    )(rf, xf, mask, bn2, bns, gap_raw_c, wfcT, bfc_c, wfc1T, bfc1_c, wst)

    # back to NCHW, drop trash tile, conv padding ring and lane padding
    out = outf[:, :L].reshape(Co, N, Spp)[:, :, :Sp].reshape(Co, N, Hp, Wp)
    out = jnp.transpose(out, (1, 0, 2, 3))[:, :, 1:H + 1, 1:W + 1]
    return out


# ---------------------------------------------------------------------------
# Pure-JAX reference (correctness check)
# ---------------------------------------------------------------------------
def reference_nhwc(x, p, stride=1):
    def bn4(z, g, b):
        mean = jnp.mean(z, axis=(0, 1, 2), keepdims=True)
        var = jnp.mean(z * z, axis=(0, 1, 2), keepdims=True) - mean * mean
        return (z - mean) * lax.rsqrt(var + EPS) * g.reshape(1, 1, 1, -1) \
            + b.reshape(1, 1, 1, -1)

    dn = ('NHWC', 'HWIO', 'NHWC')
    y = lax.conv_general_dilated(x, p['w1'], (stride, stride),
                                 [(1, 1), (1, 1)], dimension_numbers=dn)
    y = _leaky(bn4(y, p['g1'], p['b1']))
    r = lax.conv_general_dilated(y, p['w2'], (1, 1),
                                 [(1, 1), (1, 1)], dimension_numbers=dn)
    r = bn4(r, p['g2'], p['b2'])
    x_abs = jnp.abs(r)
    average = jnp.mean(x_abs, axis=(1, 2))
    gap_raw = jnp.mean(r, axis=(1, 2))
    s = jax.nn.sigmoid(average @ p['wfc'] + p['bfc'])
    t = jnp.tanh(gap_raw @ p['wfc1'] + p['bfc1'])
    thr = (average * s)[:, None, None, :]
    n_sub = jnp.maximum(x_abs - thr, 0.0)
    res = r * t[:, None, None, :] + jnp.sign(r) * n_sub
    sc = lax.conv_general_dilated(x, p['ws'][None, None], (stride, stride),
                                  [(0, 0), (0, 0)], dimension_numbers=dn)
    sc = bn4(sc, p['gs'], p['bs'])
    return _leaky(res + sc)


def init_params(key, c_in, c_out):
    ks = jax.random.split(key, 12)
    f32 = jnp.float32
    return {
        'w1': jax.random.normal(ks[0], (3, 3, c_in, c_out), f32) * 0.2,
        'g1': 1.0 + 0.1 * jax.random.normal(ks[1], (1, c_out), f32),
        'b1': 0.1 * jax.random.normal(ks[2], (1, c_out), f32),
        'w2': jax.random.normal(ks[3], (3, 3, c_out, c_out), f32) * 0.2,
        'g2': 1.0 + 0.1 * jax.random.normal(ks[4], (1, c_out), f32),
        'b2': 0.1 * jax.random.normal(ks[5], (1, c_out), f32),
        'wfc': jax.random.normal(ks[6], (c_out, c_out), f32) * 0.3,
        'bfc': 0.1 * jax.random.normal(ks[7], (1, c_out), f32),
        'wfc1': jax.random.normal(ks[8], (c_out, c_out), f32) * 0.3,
        'bfc1': 0.1 * jax.random.normal(ks[9], (1, c_out), f32),
        'ws': jax.random.normal(ks[10], (c_in, c_out), f32) * 0.3,
        'gs': jnp.ones((1, c_out), f32),
        'bs': jnp.zeros((1, c_out), f32),
    }


if __name__ == "__main__":
    key = jax.random.PRNGKey(0)
    k_x, k_p = jax.random.split(key)

    N, C_in, C_out, H, W = 2, 4, 8, 16, 16
    x_nchw = jax.random.normal(k_x, (N, C_in, H, W), jnp.float32)
    params = init_params(k_p, C_in, C_out)

    # ts=128 forces J=3 spatial chunks per sample so the halo'd pipelined path
    # and the two-phase epilogue are exercised; the default-ts bf16 run
    # exercises the auto single-chunk (J=1) tiling.
    fwd_f32 = jax.jit(functools.partial(basic_block_forward, ts=128,
                                        mm_dtype=jnp.float32))
    fwd_bf16 = jax.jit(functools.partial(basic_block_forward,
                                         mm_dtype=jnp.bfloat16))

    out_f32 = jax.block_until_ready(fwd_f32(x_nchw, params))   # exact path
    out_b16 = jax.block_until_ready(fwd_bf16(x_nchw, params))  # fast path

    x_nhwc = jnp.transpose(x_nchw, (0, 2, 3, 1))
    ref = jnp.transpose(reference_nhwc(x_nhwc, params, 1), (0, 3, 1, 2))

    assert out_f32.shape == (N, C_out, H, W)
    # f32 kernel path must match the reference tightly (structure check)
    err32 = jnp.max(jnp.abs(out_f32 - ref))
    assert jnp.allclose(out_f32, ref, atol=1e-3, rtol=1e-3), \
        f"f32 path max diff {err32}"
    # bf16-operand path: loose check (bf16 rounding of conv operands)
    err16 = jnp.max(jnp.abs(out_b16 - ref))
    assert jnp.allclose(out_b16, ref, atol=1e-1, rtol=1e-1), \
        f"bf16 path max diff {err16}"

    print("KERNEL_OK")
</pallas_src>

<mosaic_0001>
module attributes {stable_mosaic.version = 11 : i64} {
  func.func @k_conv1(%arg0: i32, %arg1: i32, %arg2: memref<8x128xf32, #tpu.memory_space<vmem>>, %arg3: memref<8x128xf32, #tpu.memory_space<vmem>>, %arg4: memref<8x128xf32, #tpu.memory_space<vmem>>, %arg5: memref<1x128xf32, #tpu.memory_space<vmem>>, %arg6: memref<8x72xf32, #tpu.memory_space<vmem>>, %arg7: memref<8x8xf32, #tpu.memory_space<vmem>>, %arg8: memref<8x128xf32, #tpu.memory_space<vmem>>, %arg9: memref<1x8x4xf32, #tpu.memory_space<vmem>>) attributes {dimension_semantics = [#tpu.dimension_semantics<parallel>, #tpu.dimension_semantics<arbitrary>], iteration_bounds = array<i64: 2, 3>, scalar_prefetch = 0 : i64, scratch_operands = 0 : i64, tpu.core_type = #tpu.core_type<tc>, window_params = [{transform_indices = @transform_0, window_bounds = array<i64: 8, 128>}, {transform_indices = @transform_1, window_bounds = array<i64: 8, 128>}, {transform_indices = @transform_2, window_bounds = array<i64: 8, 128>}, {transform_indices = @transform_3, window_bounds = array<i64: 1, 128>}, {pipeline_mode = #tpu.pipeline_mode<synchronous>, transform_indices = @transform_4, window_bounds = array<i64: 8, 72>}, {pipeline_mode = #tpu.pipeline_mode<synchronous>, transform_indices = @transform_5, window_bounds = array<i64: 8, 8>}, {transform_indices = @transform_6, window_bounds = array<i64: 8, 128>}, {transform_indices = @transform_7, window_bounds = array<i64: 1, 8, 4>}]} {
    %c0 = arith.constant 0 : index
    %c0_0 = arith.constant 0 : index
    %0 = vector.load %arg2[%c0, %c0_0] : memref<8x128xf32, #tpu.memory_space<vmem>>, vector<8x128xf32>
    %c0_1 = arith.constant 0 : index
    %c0_2 = arith.constant 0 : index
    %1 = vector.load %arg3[%c0_1, %c0_2] : memref<8x128xf32, #tpu.memory_space<vmem>>, vector<8x128xf32>
    %c0_3 = arith.constant 0 : index
    %c0_4 = arith.constant 0 : index
    %2 = vector.load %arg4[%c0_3, %c0_4] : memref<8x128xf32, #tpu.memory_space<vmem>>, vector<8x128xf32>
    %3 = tpu.concatenate %0, %1, %2 in 1 : vector<8x128xf32>, vector<8x128xf32>, vector<8x128xf32> -> vector<8x384xf32>
    %4 = vector.extract_strided_slice %3 {offsets = [0, 109], sizes = [8, 128], strides = [1, 1]} : vector<8x384xf32> to vector<8x128xf32>
    %5 = vector.extract_strided_slice %3 {offsets = [0, 110], sizes = [8, 128], strides = [1, 1]} : vector<8x384xf32> to vector<8x128xf32>
    %6 = vector.extract_strided_slice %3 {offsets = [0, 111], sizes = [8, 128], strides = [1, 1]} : vector<8x384xf32> to vector<8x128xf32>
    %7 = vector.extract_strided_slice %3 {offsets = [0, 127], sizes = [8, 128], strides = [1, 1]} : vector<8x384xf32> to vector<8x128xf32>
    %8 = vector.extract_strided_slice %3 {offsets = [0, 128], sizes = [8, 128], strides = [1, 1]} : vector<8x384xf32> to vector<8x128xf32>
    %9 = vector.extract_strided_slice %3 {offsets = [0, 129], sizes = [8, 128], strides = [1, 1]} : vector<8x384xf32> to vector<8x128xf32>
    %10 = vector.extract_strided_slice %3 {offsets = [0, 145], sizes = [8, 128], strides = [1, 1]} : vector<8x384xf32> to vector<8x128xf32>
    %11 = vector.extract_strided_slice %3 {offsets = [0, 146], sizes = [8, 128], strides = [1, 1]} : vector<8x384xf32> to vector<8x128xf32>
    %12 = vector.extract_strided_slice %3 {offsets = [0, 147], sizes = [8, 128], strides = [1, 1]} : vector<8x384xf32> to vector<8x128xf32>
    %13 = tpu.concatenate %4, %5, %6, %7, %8, %9, %10, %11, %12 in 0 : vector<8x128xf32>, vector<8x128xf32>, vector<8x128xf32>, vector<8x128xf32>, vector<8x128xf32>, vector<8x128xf32>, vector<8x128xf32>, vector<8x128xf32>, vector<8x128xf32> -> vector<72x128xf32>
    %c0_5 = arith.constant 0 : index
    %c0_6 = arith.constant 0 : index
    %14 = vector.load %arg6[%c0_5, %c0_6] : memref<8x72xf32, #tpu.memory_space<vmem>>, vector<8x72xf32>
    %cst = arith.constant dense<0.000000e+00> : vector<8x128xf32>
    %15 = tpu.matmul %14, %13, %cst {dimension_numbers = #tpu.dot_dimension_numbers<[1], [0], [0], [1], [0, 0, 1, 1], [], []>} : vector<8x72xf32>, vector<72x128xf32>, vector<8x128xf32> -> vector<8x128xf32>
    %c0_7 = arith.constant 0 : index
    %c0_8 = arith.constant 0 : index
    %16 = vector.load %arg5[%c0_7, %c0_8] : memref<1x128xf32, #tpu.memory_space<vmem>>, vector<1x128xf32>
    %17 = vector.broadcast %16 : vector<1x128xf32> to vector<8x128xf32>
    %18 = arith.mulf %15, %17 : vector<8x128xf32>
    %c0_9 = arith.constant 0 : index
    %c0_10 = arith.constant 0 : index
    %19 = vector.load %arg7[%c0_9, %c0_10] : memref<8x8xf32, #tpu.memory_space<vmem>>, vector<8x8xf32>
    %c0_11 = arith.constant 0 : index
    %c0_12 = arith.constant 0 : index
    %20 = vector.load %arg3[%c0_11, %c0_12] : memref<8x128xf32, #tpu.memory_space<vmem>>, vector<8x128xf32>
    %cst_13 = arith.constant dense<0.000000e+00> : vector<8x128xf32>
    %21 = tpu.matmul %19, %20, %cst_13 {dimension_numbers = #tpu.dot_dimension_numbers<[1], [0], [0], [1], [0, 0, 1, 1], [], []>} : vector<8x8xf32>, vector<8x128xf32>, vector<8x128xf32> -> vector<8x128xf32>
    %c0_14 = arith.constant 0 : index
    %c0_15 = arith.constant 0 : index
    %22 = vector.load %arg8[%c0_14, %c0_15] : memref<8x128xf32, #tpu.memory_space<vmem>>, vector<8x128xf32>
    tpu.vector_store %arg8[%c0_14, %c0_15], %18 {strides = array<i32>} : memref<8x128xf32, #tpu.memory_space<vmem>>, vector<8x128xf32>,
    %cst_16 = arith.constant dense<0.000000e+00> : vector<8xf32>
    %23 = vector.multi_reduction <add>, %18, %cst_16 [1] : vector<8x128xf32> to vector<8xf32>
    %24 = vector.shape_cast %23 : vector<8xf32> to vector<8x1xf32>
    %25 = arith.mulf %18, %18 : vector<8x128xf32>
    %cst_17 = arith.constant dense<0.000000e+00> : vector<8xf32>
    %26 = vector.multi_reduction <add>, %25, %cst_17 [1] : vector<8x128xf32> to vector<8xf32>
    %27 = vector.shape_cast %26 : vector<8xf32> to vector<8x1xf32>
    %cst_18 = arith.constant dense<0.000000e+00> : vector<8xf32>
    %28 = vector.multi_reduction <add>, %21, %cst_18 [1] : vector<8x128xf32> to vector<8xf32>
    %29 = vector.shape_cast %28 : vector<8xf32> to vector<8x1xf32>
    %30 = arith.mulf %21, %21 : vector<8x128xf32>
    %cst_19 = arith.constant dense<0.000000e+00> : vector<8xf32>
    %31 = vector.multi_reduction <add>, %30, %cst_19 [1] : vector<8x128xf32> to vector<8xf32>
    %32 = vector.shape_cast %31 : vector<8xf32> to vector<8x1xf32>
    %33 = tpu.concatenate %24, %27, %29, %32 in 1 : vector<8x1xf32>, vector<8x1xf32>, vector<8x1xf32>, vector<8x1xf32> -> vector<8x4xf32>
    %c0_i32 = arith.constant 0 : i32
    %34 = arith.cmpi eq, %arg1, %c0_i32 : i32
    %35 = arith.extui %34 : i1 to i32
    %c0_i32_20 = arith.constant 0 : i32
    %36 = arith.cmpi ne, %35, %c0_i32_20 : i32
    scf.if %36 {
      %cst_27 = arith.constant 0.000000e+00 : f32
      %43 = vector.broadcast %cst_27 : f32 to vector<1x8x4xf32>
      %c0_28 = arith.constant 0 : index
      %c0_29 = arith.constant 0 : index
      %c0_30 = arith.constant 0 : index
      %44 = vector.load %arg9[%c0_28, %c0_29, %c0_30] : memref<1x8x4xf32, #tpu.memory_space<vmem>>, vector<1x8x4xf32>
      tpu.vector_store %arg9[%c0_28, %c0_29, %c0_30], %43 {strides = array<i32>} : memref<1x8x4xf32, #tpu.memory_space<vmem>>, vector<1x8x4xf32>,
    } else {
    }
    %c0_21 = arith.constant 0 : index
    %c0_22 = arith.constant 0 : index
    %c0_23 = arith.constant 0 : index
    %37 = vector.load %arg9[%c0_21, %c0_22, %c0_23] : memref<1x8x4xf32, #tpu.memory_space<vmem>>, vector<1x8x4xf32>
    %38 = vector.shape_cast %37 : vector<1x8x4xf32> to vector<8x4xf32>
    %39 = arith.addf %38, %33 : vector<8x4xf32>
    %c0_24 = arith.constant 0 : index
    %c0_25 = arith.constant 0 : index
    %c0_26 = arith.constant 0 : index
    %40 = vector.load %arg9[%c0_24, %c0_25, %c0_26] : memref<1x8x4xf32, #tpu.memory_space<vmem>>, vector<1x8x4xf32>
    %41 = vector.shape_cast %40 : vector<1x8x4xf32> to vector<8x4xf32>
    %42 = vector.shape_cast %39 : vector<8x4xf32> to vector<1x8x4xf32>
    tpu.vector_store %arg9[%c0_24, %c0_25, %c0_26], %42 {strides = array<i32>} : memref<1x8x4xf32, #tpu.memory_space<vmem>>, vector<1x8x4xf32>,
    return
  }
  func.func @transform_0(%arg0: i32, %arg1: i32) -> (i32, i32) {
    %c3_i32 = arith.constant 3 : i32
    %0 = arith.muli %arg0, %c3_i32 : i32
    %c1_i32 = arith.constant 1 : i32
    %1 = arith.muli %arg1, %c1_i32 : i32
    %2 = arith.addi %0, %1 : i32
    %c1_i32_0 = arith.constant 1 : i32
    %3 = arith.subi %2, %c1_i32_0 : i32
    %c0_i32 = arith.constant 0 : i32
    %4 = arith.maxsi %3, %c0_i32 : i32
    %c0_i32_1 = arith.constant 0 : i32
    %c0_i32_2 = arith.constant 0 : i32
    return %c0_i32_1, %4 : i32, i32
  }
  func.func @transform_1(%arg0: i32, %arg1: i32) -> (i32, i32) {
    %c3_i32 = arith.constant 3 : i32
    %0 = arith.muli %arg0, %c3_i32 : i32
    %1 = arith.addi %0, %arg1 : i32
    %c0_i32 = arith.constant 0 : i32
    %c0_i32_0 = arith.constant 0 : i32
    return %c0_i32, %1 : i32, i32
  }
  func.func @transform_2(%arg0: i32, %arg1: i32) -> (i32, i32) {
    %c3_i32 = arith.constant 3 : i32
    %0 = arith.muli %arg0, %c3_i32 : i32
    %c1_i32 = arith.constant 1 : i32
    %1 = arith.addi %arg1, %c1_i32 : i32
    %c1_i32_0 = arith.constant 1 : i32
    %2 = arith.muli %1, %c1_i32_0 : i32
    %3 = arith.addi %0, %2 : i32
    %c5_i32 = arith.constant 5 : i32
    %4 = arith.minsi %3, %c5_i32 : i32
    %c0_i32 = arith.constant 0 : i32
    %c0_i32_1 = arith.constant 0 : i32
    return %c0_i32, %4 : i32, i32
  }
  func.func @transform_3(%arg0: i32, %arg1: i32) -> (i32, i32) {
    %c0_i32 = arith.constant 0 : i32
    %c0_i32_0 = arith.constant 0 : i32
    return %c0_i32, %arg1 : i32, i32
  }
  func.func @transform_4(%arg0: i32, %arg1: i32) -> (i32, i32) {
    %c0_i32 = arith.constant 0 : i32
    %c0_i32_0 = arith.constant 0 : i32
    %c0_i32_1 = arith.constant 0 : i32
    return %c0_i32, %c0_i32_0 : i32, i32
  }
  func.func @transform_5(%arg0: i32, %arg1: i32) -> (i32, i32) {
    %c0_i32 = arith.constant 0 : i32
    %c0_i32_0 = arith.constant 0 : i32
    %c0_i32_1 = arith.constant 0 : i32
    return %c0_i32, %c0_i32_0 : i32, i32
  }
  func.func @transform_6(%arg0: i32, %arg1: i32) -> (i32, i32) {
    %c3_i32 = arith.constant 3 : i32
    %0 = arith.muli %arg0, %c3_i32 : i32
    %1 = arith.addi %0, %arg1 : i32
    %c0_i32 = arith.constant 0 : i32
    %c0_i32_0 = arith.constant 0 : i32
    return %c0_i32, %1 : i32, i32
  }
  func.func @transform_7(%arg0: i32, %arg1: i32) -> (i32, i32, i32) {
    %c0_i32 = arith.constant 0 : i32
    %c0_i32_0 = arith.constant 0 : i32
    %c0_i32_1 = arith.constant 0 : i32
    return %arg0, %c0_i32, %c0_i32_0 : i32, i32, i32
  }
}

module attributes {stable_mosaic.version = 11 : i64} {
  func.func @k_conv2(%arg0: i32, %arg1: i32, %arg2: memref<8x128xf32, #tpu.memory_space<vmem>>, %arg3: memref<8x128xf32, #tpu.memory_space<vmem>>, %arg4: memref<8x128xf32, #tpu.memory_space<vmem>>, %arg5: memref<1x128xf32, #tpu.memory_space<vmem>>, %arg6: memref<1x128xf32, #tpu.memory_space<vmem>>, %arg7: memref<1x128xf32, #tpu.memory_space<vmem>>, %arg8: memref<8x2xf32, #tpu.memory_space<vmem>>, %arg9: memref<8x72xf32, #tpu.memory_space<vmem>>, %arg10: memref<8x128xf32, #tpu.memory_space<vmem>>, %arg11: memref<1x8x2xf32, #tpu.memory_space<vmem>>) attributes {dimension_semantics = [#tpu.dimension_semantics<parallel>, #tpu.dimension_semantics<arbitrary>], iteration_bounds = array<i64: 2, 3>, scalar_prefetch = 0 : i64, scratch_operands = 0 : i64, tpu.core_type = #tpu.core_type<tc>, window_params = [{transform_indices = @transform_0, window_bounds = array<i64: 8, 128>}, {transform_indices = @transform_1, window_bounds = array<i64: 8, 128>}, {transform_indices = @transform_2, window_bounds = array<i64: 8, 128>}, {transform_indices = @transform_3, window_bounds = array<i64: 1, 128>}, {transform_indices = @transform_4, window_bounds = array<i64: 1, 128>}, {transform_indices = @transform_5, window_bounds = array<i64: 1, 128>}, {pipeline_mode = #tpu.pipeline_mode<synchronous>, transform_indices = @transform_6, window_bounds = array<i64: 8, 2>}, {pipeline_mode = #tpu.pipeline_mode<synchronous>, transform_indices = @transform_7, window_bounds = array<i64: 8, 72>}, {transform_indices = @transform_8, window_bounds = array<i64: 8, 128>}, {transform_indices = @transform_9, window_bounds = array<i64: 1, 8, 2>}]} {
    %c0 = arith.constant 0 : index
    %c0_0 = arith.constant 0 : index
    %0 = vector.load %arg2[%c0, %c0_0] : memref<8x128xf32, #tpu.memory_space<vmem>>, vector<8x128xf32>
    %c0_1 = arith.constant 0 : index
    %c0_2 = arith.constant 0 : index
    %1 = vector.load %arg3[%c0_1, %c0_2] : memref<8x128xf32, #tpu.memory_space<vmem>>, vector<8x128xf32>
    %c0_3 = arith.constant 0 : index
    %c0_4 = arith.constant 0 : index
    %2 = vector.load %arg4[%c0_3, %c0_4] : memref<8x128xf32, #tpu.memory_space<vmem>>, vector<8x128xf32>
    %3 = tpu.concatenate %0, %1, %2 in 1 : vector<8x128xf32>, vector<8x128xf32>, vector<8x128xf32> -> vector<8x384xf32>
    %c0_5 = arith.constant 0 : index
    %c0_6 = arith.constant 0 : index
    %4 = vector.load %arg5[%c0_5, %c0_6] : memref<1x128xf32, #tpu.memory_space<vmem>>, vector<1x128xf32>
    %c0_7 = arith.constant 0 : index
    %c0_8 = arith.constant 0 : index
    %5 = vector.load %arg6[%c0_7, %c0_8] : memref<1x128xf32, #tpu.memory_space<vmem>>, vector<1x128xf32>
    %c0_9 = arith.constant 0 : index
    %c0_10 = arith.constant 0 : index
    %6 = vector.load %arg7[%c0_9, %c0_10] : memref<1x128xf32, #tpu.memory_space<vmem>>, vector<1x128xf32>
    %7 = tpu.concatenate %4, %5, %6 in 1 : vector<1x128xf32>, vector<1x128xf32>, vector<1x128xf32> -> vector<1x384xf32>
    %c0_11 = arith.constant 0 : index
    %c0_12 = arith.constant 0 : index
    %8 = vector.load %arg8[%c0_11, %c0_12] : memref<8x2xf32, #tpu.memory_space<vmem>>, vector<8x1xf32>
    %c0_13 = arith.constant 0 : index
    %c1 = arith.constant 1 : index
    %9 = vector.load %arg8[%c0_13, %c1] : memref<8x2xf32, #tpu.memory_space<vmem>>, vector<8x1xf32>
    %10 = vector.broadcast %8 : vector<8x1xf32> to vector<8x384xf32>
    %11 = arith.mulf %10, %3 : vector<8x384xf32>
    %12 = vector.broadcast %9 : vector<8x1xf32> to vector<8x384xf32>
    %13 = arith.addf %11, %12 : vector<8x384xf32>
    %cst = arith.constant 0.000000e+00 : f32
    %14 = vector.broadcast %cst : f32 to vector<8x384xf32>
    %15 = arith.cmpf ogt, %13, %14 : vector<8x384xf32>
    %cst_14 = arith.constant 2.000000e-01 : f32
    %16 = vector.broadcast %cst_14 : f32 to vector<8x384xf32>
    %17 = arith.mulf %16, %13 : vector<8x384xf32>
    %18 = arith.select %15, %13, %17 : vector<8x384xi1>, vector<8x384xf32>
    %19 = vector.broadcast %7 : vector<1x384xf32> to vector<8x384xf32>
    %20 = arith.mulf %18, %19 : vector<8x384xf32>
    %21 = vector.extract_strided_slice %20 {offsets = [0, 109], sizes = [8, 128], strides = [1, 1]} : vector<8x384xf32> to vector<8x128xf32>
    %22 = vector.extract_strided_slice %20 {offsets = [0, 110], sizes = [8, 128], strides = [1, 1]} : vector<8x384xf32> to vector<8x128xf32>
    %23 = vector.extract_strided_slice %20 {offsets = [0, 111], sizes = [8, 128], strides = [1, 1]} : vector<8x384xf32> to vector<8x128xf32>
    %24 = vector.extract_strided_slice %20 {offsets = [0, 127], sizes = [8, 128], strides = [1, 1]} : vector<8x384xf32> to vector<8x128xf32>
    %25 = vector.extract_strided_slice %20 {offsets = [0, 128], sizes = [8, 128], strides = [1, 1]} : vector<8x384xf32> to vector<8x128xf32>
    %26 = vector.extract_strided_slice %20 {offsets = [0, 129], sizes = [8, 128], strides = [1, 1]} : vector<8x384xf32> to vector<8x128xf32>
    %27 = vector.extract_strided_slice %20 {offsets = [0, 145], sizes = [8, 128], strides = [1, 1]} : vector<8x384xf32> to vector<8x128xf32>
    %28 = vector.extract_strided_slice %20 {offsets = [0, 146], sizes = [8, 128], strides = [1, 1]} : vector<8x384xf32> to vector<8x128xf32>
    %29 = vector.extract_strided_slice %20 {offsets = [0, 147], sizes = [8, 128], strides = [1, 1]} : vector<8x384xf32> to vector<8x128xf32>
    %30 = tpu.concatenate %21, %22, %23, %24, %25, %26, %27, %28, %29 in 0 : vector<8x128xf32>, vector<8x128xf32>, vector<8x128xf32>, vector<8x128xf32>, vector<8x128xf32>, vector<8x128xf32>, vector<8x128xf32>, vector<8x128xf32>, vector<8x128xf32> -> vector<72x128xf32>
    %c0_15 = arith.constant 0 : index
    %c0_16 = arith.constant 0 : index
    %31 = vector.load %arg9[%c0_15, %c0_16] : memref<8x72xf32, #tpu.memory_space<vmem>>, vector<8x72xf32>
    %cst_17 = arith.constant dense<0.000000e+00> : vector<8x128xf32>
    %32 = tpu.matmul %31, %30, %cst_17 {dimension_numbers = #tpu.dot_dimension_numbers<[1], [0], [0], [1], [0, 0, 1, 1], [], []>} : vector<8x72xf32>, vector<72x128xf32>, vector<8x128xf32> -> vector<8x128xf32>
    %c0_18 = arith.constant 0 : index
    %c0_19 = arith.constant 0 : index
    %33 = vector.load %arg6[%c0_18, %c0_19] : memref<1x128xf32, #tpu.memory_space<vmem>>, vector<1x128xf32>
    %34 = vector.broadcast %33 : vector<1x128xf32> to vector<8x128xf32>
    %35 = arith.mulf %32, %34 : vector<8x128xf32>
    %c0_20 = arith.constant 0 : index
    %c0_21 = arith.constant 0 : index
    %36 = vector.load %arg10[%c0_20, %c0_21] : memref<8x128xf32, #tpu.memory_space<vmem>>, vector<8x128xf32>
    tpu.vector_store %arg10[%c0_20, %c0_21], %35 {strides = array<i32>} : memref<8x128xf32, #tpu.memory_space<vmem>>, vector<8x128xf32>,
    %cst_22 = arith.constant dense<0.000000e+00> : vector<8xf32>
    %37 = vector.multi_reduction <add>, %35, %cst_22 [1] : vector<8x128xf32> to vector<8xf32>
    %38 = vector.shape_cast %37 : vector<8xf32> to vector<8x1xf32>
    %39 = arith.mulf %35, %35 : vector<8x128xf32>
    %cst_23 = arith.constant dense<0.000000e+00> : vector<8xf32>
    %40 = vector.multi_reduction <add>, %39, %cst_23 [1] : vector<8x128xf32> to vector<8xf32>
    %41 = vector.shape_cast %40 : vector<8xf32> to vector<8x1xf32>
    %42 = tpu.concatenate %38, %41 in 1 : vector<8x1xf32>, vector<8x1xf32> -> vector<8x2xf32>
    %c0_i32 = arith.constant 0 : i32
    %43 = arith.cmpi eq, %arg1, %c0_i32 : i32
    %44 = arith.extui %43 : i1 to i32
    %c0_i32_24 = arith.constant 0 : i32
    %45 = arith.cmpi ne, %44, %c0_i32_24 : i32
    scf.if %45 {
      %cst_31 = arith.constant 0.000000e+00 : f32
      %52 = vector.broadcast %cst_31 : f32 to vector<1x8x2xf32>
      %c0_32 = arith.constant 0 : index
      %c0_33 = arith.constant 0 : index
      %c0_34 = arith.constant 0 : index
      %53 = vector.load %arg11[%c0_32, %c0_33, %c0_34] : memref<1x8x2xf32, #tpu.memory_space<vmem>>, vector<1x8x2xf32>
      tpu.vector_store %arg11[%c0_32, %c0_33, %c0_34], %52 {strides = array<i32>} : memref<1x8x2xf32, #tpu.memory_space<vmem>>, vector<1x8x2xf32>,
    } else {
    }
    %c0_25 = arith.constant 0 : index
    %c0_26 = arith.constant 0 : index
    %c0_27 = arith.constant 0 : index
    %46 = vector.load %arg11[%c0_25, %c0_26, %c0_27] : memref<1x8x2xf32, #tpu.memory_space<vmem>>, vector<1x8x2xf32>
    %47 = vector.shape_cast %46 : vector<1x8x2xf32> to vector<8x2xf32>
    %48 = arith.addf %47, %42 : vector<8x2xf32>
    %c0_28 = arith.constant 0 : index
    %c0_29 = arith.constant 0 : index
    %c0_30 = arith.constant 0 : index
    %49 = vector.load %arg11[%c0_28, %c0_29, %c0_30] : memref<1x8x2xf32, #tpu.memory_space<vmem>>, vector<1x8x2xf32>
    %50 = vector.shape_cast %49 : vector<1x8x2xf32> to vector<8x2xf32>
    %51 = vector.shape_cast %48 : vector<8x2xf32> to vector<1x8x2xf32>
    tpu.vector_store %arg11[%c0_28, %c0_29, %c0_30], %51 {strides = array<i32>} : memref<1x8x2xf32, #tpu.memory_space<vmem>>, vector<1x8x2xf32>,
    return
  }
  func.func @transform_0(%arg0: i32, %arg1: i32) -> (i32, i32) {
    %c3_i32 = arith.constant 3 : i32
    %0 = arith.muli %arg0, %c3_i32 : i32
    %c1_i32 = arith.constant 1 : i32
    %1 = arith.muli %arg1, %c1_i32 : i32
    %2 = arith.addi %0, %1 : i32
    %c1_i32_0 = arith.constant 1 : i32
    %3 = arith.subi %2, %c1_i32_0 : i32
    %c0_i32 = arith.constant 0 : i32
    %4 = arith.maxsi %3, %c0_i32 : i32
    %c0_i32_1 = arith.constant 0 : i32
    %c0_i32_2 = arith.constant 0 : i32
    return %c0_i32_1, %4 : i32, i32
  }
  func.func @transform_1(%arg0: i32, %arg1: i32) -> (i32, i32) {
    %c3_i32 = arith.constant 3 : i32
    %0 = arith.muli %arg0, %c3_i32 : i32
    %1 = arith.addi %0, %arg1 : i32
    %c0_i32 = arith.constant 0 : i32
    %c0_i32_0 = arith.constant 0 : i32
    return %c0_i32, %1 : i32, i32
  }
  func.func @transform_2(%arg0: i32, %arg1: i32) -> (i32, i32) {
    %c3_i32 = arith.constant 3 : i32
    %0 = arith.muli %arg0, %c3_i32 : i32
    %c1_i32 = arith.constant 1 : i32
    %1 = arith.addi %arg1, %c1_i32 : i32
    %c1_i32_0 = arith.constant 1 : i32
    %2 = arith.muli %1, %c1_i32_0 : i32
    %3 = arith.addi %0, %2 : i32
    %c5_i32 = arith.constant 5 : i32
    %4 = arith.minsi %3, %c5_i32 : i32
    %c0_i32 = arith.constant 0 : i32
    %c0_i32_1 = arith.constant 0 : i32
    return %c0_i32, %4 : i32, i32
  }
  func.func @transform_3(%arg0: i32, %arg1: i32) -> (i32, i32) {
    %c1_i32 = arith.constant 1 : i32
    %0 = arith.muli %arg1, %c1_i32 : i32
    %c1_i32_0 = arith.constant 1 : i32
    %1 = arith.subi %0, %c1_i32_0 : i32
    %c0_i32 = arith.constant 0 : i32
    %2 = arith.maxsi %1, %c0_i32 : i32
    %c0_i32_1 = arith.constant 0 : i32
    %c0_i32_2 = arith.constant 0 : i32
    return %c0_i32_1, %2 : i32, i32
  }
  func.func @transform_4(%arg0: i32, %arg1: i32) -> (i32, i32) {
    %c0_i32 = arith.constant 0 : i32
    %c0_i32_0 = arith.constant 0 : i32
    return %c0_i32, %arg1 : i32, i32
  }
  func.func @transform_5(%arg0: i32, %arg1: i32) -> (i32, i32) {
    %c1_i32 = arith.constant 1 : i32
    %0 = arith.addi %arg1, %c1_i32 : i32
    %c1_i32_0 = arith.constant 1 : i32
    %1 = arith.muli %0, %c1_i32_0 : i32
    %c2_i32 = arith.constant 2 : i32
    %2 = arith.minsi %1, %c2_i32 : i32
    %c0_i32 = arith.constant 0 : i32
    %c0_i32_1 = arith.constant 0 : i32
    return %c0_i32, %2 : i32, i32
  }
  func.func @transform_6(%arg0: i32, %arg1: i32) -> (i32, i32) {
    %c0_i32 = arith.constant 0 : i32
    %c0_i32_0 = arith.constant 0 : i32
    %c0_i32_1 = arith.constant 0 : i32
    return %c0_i32, %c0_i32_0 : i32, i32
  }
  func.func @transform_7(%arg0: i32, %arg1: i32) -> (i32, i32) {
    %c0_i32 = arith.constant 0 : i32
    %c0_i32_0 = arith.constant 0 : i32
    %c0_i32_1 = arith.constant 0 : i32
    return %c0_i32, %c0_i32_0 : i32, i32
  }
  func.func @transform_8(%arg0: i32, %arg1: i32) -> (i32, i32) {
    %c3_i32 = arith.constant 3 : i32
    %0 = arith.muli %arg0, %c3_i32 : i32
    %1 = arith.addi %0, %arg1 : i32
    %c0_i32 = arith.constant 0 : i32
    %c0_i32_0 = arith.constant 0 : i32
    return %c0_i32, %1 : i32, i32
  }
  func.func @transform_9(%arg0: i32, %arg1: i32) -> (i32, i32, i32) {
    %c0_i32 = arith.constant 0 : i32
    %c0_i32_0 = arith.constant 0 : i32
    %c0_i32_1 = arith.constant 0 : i32
    return %arg0, %c0_i32, %c0_i32_0 : i32, i32, i32
  }
}

module attributes {stable_mosaic.version = 11 : i64} {
  func.func @k_epilogue(%arg0: i32, %arg1: i32, %arg2: i32, %arg3: memref<8x128xf32, #tpu.memory_space<vmem>>, %arg4: memref<8x128xf32, #tpu.memory_space<vmem>>, %arg5: memref<1x128xf32, #tpu.memory_space<vmem>>, %arg6: memref<8x2xf32, #tpu.memory_space<vmem>>, %arg7: memref<8x2xf32, #tpu.memory_space<vmem>>, %arg8: memref<1x8x1xf32, #tpu.memory_space<vmem>>, %arg9: memref<8x8xf32, #tpu.memory_space<vmem>>, %arg10: memref<8x1xf32, #tpu.memory_space<vmem>>, %arg11: memref<8x8xf32, #tpu.memory_space<vmem>>, %arg12: memref<8x1xf32, #tpu.memory_space<vmem>>, %arg13: memref<8x8xf32, #tpu.memory_space<vmem>>, %arg14: memref<8x128xf32, #tpu.memory_space<vmem>>, %arg15: memref<8x1xf32, #tpu.memory_space<vmem>>, %arg16: memref<8x1xf32, #tpu.memory_space<vmem>>, %arg17: memref<8x1xf32, #tpu.memory_space<vmem>>) attributes {dimension_semantics = [#tpu.dimension_semantics<parallel>, #tpu.dimension_semantics<arbitrary>, #tpu.dimension_semantics<arbitrary>], iteration_bounds = array<i64: 2, 2, 3>, scalar_prefetch = 0 : i64, scratch_operands = 3 : i64, tpu.core_type = #tpu.core_type<tc>, window_params = [{transform_indices = @transform_0, window_bounds = array<i64: 8, 128>}, {transform_indices = @transform_1, window_bounds = array<i64: 8, 128>}, {transform_indices = @transform_2, window_bounds = array<i64: 1, 128>}, {pipeline_mode = #tpu.pipeline_mode<synchronous>, transform_indices = @transform_3, window_bounds = array<i64: 8, 2>}, {pipeline_mode = #tpu.pipeline_mode<synchronous>, transform_indices = @transform_4, window_bounds = array<i64: 8, 2>}, {transform_indices = @transform_5, window_bounds = array<i64: 1, 8, 1>}, {pipeline_mode = #tpu.pipeline_mode<synchronous>, transform_indices = @transform_6, window_bounds = array<i64: 8, 8>}, {pipeline_mode = #tpu.pipeline_mode<synchronous>, transform_indices = @transform_7, window_bounds = array<i64: 8, 1>}, {pipeline_mode = #tpu.pipeline_mode<synchronous>, transform_indices = @transform_8, window_bounds = array<i64: 8, 8>}, {pipeline_mode = #tpu.pipeline_mode<synchronous>, transform_indices = @transform_9, window_bounds = array<i64: 8, 1>}, {pipeline_mode = #tpu.pipeline_mode<synchronous>, transform_indices = @transform_10, window_bounds = array<i64: 8, 8>}, {transform_indices = @transform_11, window_bounds = array<i64: 8, 128>}]} {
    %c0 = arith.constant 0 : index
    %c0_0 = arith.constant 0 : index
    %0 = vector.load %arg6[%c0, %c0_0] : memref<8x2xf32, #tpu.memory_space<vmem>>, vector<8x1xf32>
    %c0_1 = arith.constant 0 : index
    %c1 = arith.constant 1 : index
    %1 = vector.load %arg6[%c0_1, %c1] : memref<8x2xf32, #tpu.memory_space<vmem>>, vector<8x1xf32>
    %c0_i32 = arith.constant 0 : i32
    %2 = arith.cmpi eq, %arg1, %c0_i32 : i32
    %3 = arith.extui %2 : i1 to i32
    %c0_i32_2 = arith.constant 0 : i32
    %4 = arith.cmpi ne, %3, %c0_i32_2 : i32
    scf.if %4 {
      %c0_4 = arith.constant 0 : index
      %c0_5 = arith.constant 0 : index
      %8 = vector.load %arg3[%c0_4, %c0_5] : memref<8x128xf32, #tpu.memory_space<vmem>>, vector<8x128xf32>
      %9 = vector.broadcast %0 : vector<8x1xf32> to vector<8x128xf32>
      %10 = arith.mulf %9, %8 : vector<8x128xf32>
      %11 = vector.broadcast %1 : vector<8x1xf32> to vector<8x128xf32>
      %12 = arith.addf %10, %11 : vector<8x128xf32>
      %c0_6 = arith.constant 0 : index
      %c0_7 = arith.constant 0 : index
      %13 = vector.load %arg5[%c0_6, %c0_7] : memref<1x128xf32, #tpu.memory_space<vmem>>, vector<1x128xf32>
      %14 = vector.broadcast %13 : vector<1x128xf32> to vector<8x128xf32>
      %15 = arith.mulf %12, %14 : vector<8x128xf32>
      %c0_i32_8 = arith.constant 0 : i32
      %16 = arith.cmpi eq, %arg2, %c0_i32_8 : i32
      %17 = arith.extui %16 : i1 to i32
      %c0_i32_9 = arith.constant 0 : i32
      %18 = arith.cmpi ne, %17, %c0_i32_9 : i32
      scf.if %18 {
        %cst_14 = arith.constant 0.000000e+00 : f32
        %25 = vector.broadcast %cst_14 : f32 to vector<8x1xf32>
        %c0_15 = arith.constant 0 : index
        %c0_16 = arith.constant 0 : index
        %26 = vector.load %arg15[%c0_15, %c0_16] : memref<8x1xf32, #tpu.memory_space<vmem>>, vector<8x1xf32>
        tpu.vector_store %arg15[%c0_15, %c0_16], %25 {strides = array<i32>} : memref<8x1xf32, #tpu.memory_space<vmem>>, vector<8x1xf32>,
      } else {
      }
      %c0_10 = arith.constant 0 : index
      %c0_11 = arith.constant 0 : index
      %19 = vector.load %arg15[%c0_10, %c0_11] : memref<8x1xf32, #tpu.memory_space<vmem>>, vector<8x1xf32>
      %20 = math.absf %15 : vector<8x128xf32>
      %cst = arith.constant dense<0.000000e+00> : vector<8xf32>
      %21 = vector.multi_reduction <add>, %20, %cst [1] : vector<8x128xf32> to vector<8xf32>
      %22 = vector.shape_cast %21 : vector<8xf32> to vector<8x1xf32>
      %23 = arith.addf %19, %22 : vector<8x1xf32>
      %c0_12 = arith.constant 0 : index
      %c0_13 = arith.constant 0 : index
      %24 = vector.load %arg15[%c0_12, %c0_13] : memref<8x1xf32, #tpu.memory_space<vmem>>, vector<8x1xf32>
      tpu.vector_store %arg15[%c0_12, %c0_13], %23 {strides = array<i32>} : memref<8x1xf32, #tpu.memory_space<vmem>>, vector<8x1xf32>,
    } else {
    }
    %c1_i32 = arith.constant 1 : i32
    %5 = arith.cmpi eq, %arg1, %c1_i32 : i32
    %6 = arith.extui %5 : i1 to i32
    %c0_i32_3 = arith.constant 0 : i32
    %7 = arith.cmpi ne, %6, %c0_i32_3 : i32
    scf.if %7 {
      %c0_i32_4 = arith.constant 0 : i32
      %8 = arith.cmpi eq, %arg2, %c0_i32_4 : i32
      %9 = arith.extui %8 : i1 to i32
      %c0_i32_5 = arith.constant 0 : i32
      %10 = arith.cmpi ne, %9, %c0_i32_5 : i32
      scf.if %10 {
        %c0_27 = arith.constant 0 : index
        %c0_28 = arith.constant 0 : index
        %47 = vector.load %arg15[%c0_27, %c0_28] : memref<8x1xf32, #tpu.memory_space<vmem>>, vector<8x1xf32>
        %cst_29 = arith.constant 3.906250e-03 : f32
        %48 = vector.broadcast %cst_29 : f32 to vector<8x1xf32>
        %49 = arith.mulf %47, %48 : vector<8x1xf32>
        %c0_30 = arith.constant 0 : index
        %c0_31 = arith.constant 0 : index
        %50 = vector.load %arg9[%c0_30, %c0_31] : memref<8x8xf32, #tpu.memory_space<vmem>>, vector<8x8xf32>
        %cst_32 = arith.constant dense<0.000000e+00> : vector<8x1xf32>
        %51 = tpu.matmul %50, %49, %cst_32 {dimension_numbers = #tpu.dot_dimension_numbers<[1], [0], [0], [1], [0, 0, 1, 1], [], []>} : vector<8x8xf32>, vector<8x1xf32>, vector<8x1xf32> -> vector<8x1xf32>
        %c0_33 = arith.constant 0 : index
        %c0_34 = arith.constant 0 : index
        %52 = vector.load %arg10[%c0_33, %c0_34] : memref<8x1xf32, #tpu.memory_space<vmem>>, vector<8x1xf32>
        %53 = arith.addf %51, %52 : vector<8x1xf32>
        %54 = arith.negf %53 : vector<8x1xf32>
        %55 = math.exp %54 : vector<8x1xf32>
        %cst_35 = arith.constant 1.000000e+00 : f32
        %56 = vector.broadcast %cst_35 : f32 to vector<8x1xf32>
        %57 = arith.addf %56, %55 : vector<8x1xf32>
        %58 = arith.divf %56, %57 : vector<8x1xf32>
        %59 = arith.mulf %49, %58 : vector<8x1xf32>
        %c0_36 = arith.constant 0 : index
        %c0_37 = arith.constant 0 : index
        %60 = vector.load %arg16[%c0_36, %c0_37] : memref<8x1xf32, #tpu.memory_space<vmem>>, vector<8x1xf32>
        tpu.vector_store %arg16[%c0_36, %c0_37], %59 {strides = array<i32>} : memref<8x1xf32, #tpu.memory_space<vmem>>, vector<8x1xf32>,
        %c0_38 = arith.constant 0 : index
        %c0_39 = arith.constant 0 : index
        %61 = vector.load %arg11[%c0_38, %c0_39] : memref<8x8xf32, #tpu.memory_space<vmem>>, vector<8x8xf32>
        %c0_40 = arith.constant 0 : index
        %c0_41 = arith.constant 0 : index
        %c0_42 = arith.constant 0 : index
        %62 = vector.load %arg8[%c0_40, %c0_41, %c0_42] : memref<1x8x1xf32, #tpu.memory_space<vmem>>, vector<1x8x1xf32>
        %63 = vector.shape_cast %62 : vector<1x8x1xf32> to vector<8x1xf32>
        %cst_43 = arith.constant dense<0.000000e+00> : vector<8x1xf32>
        %64 = tpu.matmul %61, %63, %cst_43 {dimension_numbers = #tpu.dot_dimension_numbers<[1], [0], [0], [1], [0, 0, 1, 1], [], []>} : vector<8x8xf32>, vector<8x1xf32>, vector<8x1xf32> -> vector<8x1xf32>
        %c0_44 = arith.constant 0 : index
        %c0_45 = arith.constant 0 : index
        %65 = vector.load %arg12[%c0_44, %c0_45] : memref<8x1xf32, #tpu.memory_space<vmem>>, vector<8x1xf32>
        %66 = arith.addf %64, %65 : vector<8x1xf32>
        %67 = math.tanh %66 : vector<8x1xf32>
        %c0_46 = arith.constant 0 : index
        %c0_47 = arith.constant 0 : index
        %68 = vector.load %arg17[%c0_46, %c0_47] : memref<8x1xf32, #tpu.memory_space<vmem>>, vector<8x1xf32>
        tpu.vector_store %arg17[%c0_46, %c0_47], %67 {strides = array<i32>} : memref<8x1xf32, #tpu.memory_space<vmem>>, vector<8x1xf32>,
      } else {
      }
      %c0_6 = arith.constant 0 : index
      %c0_7 = arith.constant 0 : index
      %11 = vector.load %arg3[%c0_6, %c0_7] : memref<8x128xf32, #tpu.memory_space<vmem>>, vector<8x128xf32>
      %12 = vector.broadcast %0 : vector<8x1xf32> to vector<8x128xf32>
      %13 = arith.mulf %12, %11 : vector<8x128xf32>
      %14 = vector.broadcast %1 : vector<8x1xf32> to vector<8x128xf32>
      %15 = arith.addf %13, %14 : vector<8x128xf32>
      %c0_8 = arith.constant 0 : index
      %c0_9 = arith.constant 0 : index
      %16 = vector.load %arg13[%c0_8, %c0_9] : memref<8x8xf32, #tpu.memory_space<vmem>>, vector<8x8xf32>
      %c0_10 = arith.constant 0 : index
      %c0_11 = arith.constant 0 : index
      %17 = vector.load %arg4[%c0_10, %c0_11] : memref<8x128xf32, #tpu.memory_space<vmem>>, vector<8x128xf32>
      %cst = arith.constant dense<0.000000e+00> : vector<8x128xf32>
      %18 = tpu.matmul %16, %17, %cst {dimension_numbers = #tpu.dot_dimension_numbers<[1], [0], [0], [1], [0, 0, 1, 1], [], []>} : vector<8x8xf32>, vector<8x128xf32>, vector<8x128xf32> -> vector<8x128xf32>
      %c0_12 = arith.constant 0 : index
      %c0_13 = arith.constant 0 : index
      %19 = vector.load %arg7[%c0_12, %c0_13] : memref<8x2xf32, #tpu.memory_space<vmem>>, vector<8x1xf32>
      %20 = vector.broadcast %19 : vector<8x1xf32> to vector<8x128xf32>
      %21 = arith.mulf %20, %18 : vector<8x128xf32>
      %c0_14 = arith.constant 0 : index
      %c1_15 = arith.constant 1 : index
      %22 = vector.load %arg7[%c0_14, %c1_15] : memref<8x2xf32, #tpu.memory_space<vmem>>, vector<8x1xf32>
      %23 = vector.broadcast %22 : vector<8x1xf32> to vector<8x128xf32>
      %24 = arith.addf %21, %23 : vector<8x128xf32>
      %c0_16 = arith.constant 0 : index
      %c0_17 = arith.constant 0 : index
      %25 = vector.load %arg16[%c0_16, %c0_17] : memref<8x1xf32, #tpu.memory_space<vmem>>, vector<8x1xf32>
      %26 = math.absf %15 : vector<8x128xf32>
      %27 = vector.broadcast %25 : vector<8x1xf32> to vector<8x128xf32>
      %28 = arith.subf %26, %27 : vector<8x128xf32>
      %cst_18 = arith.constant 0.000000e+00 : f32
      %29 = vector.broadcast %cst_18 : f32 to vector<8x128xf32>
      %30 = arith.maximumf %28, %29 : vector<8x128xf32>
      %c0_19 = arith.constant 0 : index
      %c0_20 = arith.constant 0 : index
      %31 = vector.load %arg17[%c0_19, %c0_20] : memref<8x1xf32, #tpu.memory_space<vmem>>, vector<8x1xf32>
      %32 = vector.broadcast %31 : vector<8x1xf32> to vector<8x128xf32>
      %33 = arith.mulf %15, %32 : vector<8x128xf32>
      %cst_21 = arith.constant 0.000000e+00 : f32
      %34 = vector.broadcast %cst_21 : f32 to vector<8x128xf32>
      %35 = arith.cmpf oge, %15, %34 : vector<8x128xf32>
      %cst_22 = arith.constant 0.000000e+00 : f32
      %36 = vector.broadcast %cst_22 : f32 to vector<8x128xf32>
      %37 = arith.subf %36, %30 : vector<8x128xf32>
      %38 = arith.select %35, %30, %37 : vector<8x128xi1>, vector<8x128xf32>
      %39 = arith.addf %33, %38 : vector<8x128xf32>
      %40 = arith.addf %39, %24 : vector<8x128xf32>
      %cst_23 = arith.constant 0.000000e+00 : f32
      %41 = vector.broadcast %cst_23 : f32 to vector<8x128xf32>
      %42 = arith.cmpf ogt, %40, %41 : vector<8x128xf32>
      %cst_24 = arith.constant 2.000000e-01 : f32
      %43 = vector.broadcast %cst_24 : f32 to vector<8x128xf32>
      %44 = arith.mulf %43, %40 : vector<8x128xf32>
      %45 = arith.select %42, %40, %44 : vector<8x128xi1>, vector<8x128xf32>
      %c0_25 = arith.constant 0 : index
      %c0_26 = arith.constant 0 : index
      %46 = vector.load %arg14[%c0_25, %c0_26] : memref<8x128xf32, #tpu.memory_space<vmem>>, vector<8x128xf32>
      tpu.vector_store %arg14[%c0_25, %c0_26], %45 {strides = array<i32>} : memref<8x128xf32, #tpu.memory_space<vmem>>, vector<8x128xf32>,
    } else {
    }
    return
  }
  func.func @transform_0(%arg0: i32, %arg1: i32, %arg2: i32) -> (i32, i32) {
    %c3_i32 = arith.constant 3 : i32
    %0 = arith.muli %arg0, %c3_i32 : i32
    %1 = arith.addi %0, %arg2 : i32
    %c0_i32 = arith.constant 0 : i32
    %c0_i32_0 = arith.constant 0 : i32
    return %c0_i32, %1 : i32, i32
  }
  func.func @transform_1(%arg0: i32, %arg1: i32, %arg2: i32) -> (i32, i32) {
    %c3_i32 = arith.constant 3 : i32
    %0 = arith.muli %arg0, %c3_i32 : i32
    %1 = arith.muli %arg1, %arg2 : i32
    %2 = arith.addi %0, %1 : i32
    %c0_i32 = arith.constant 0 : i32
    %c0_i32_0 = arith.constant 0 : i32
    return %c0_i32, %2 : i32, i32
  }
  func.func @transform_2(%arg0: i32, %arg1: i32, %arg2: i32) -> (i32, i32) {
    %c0_i32 = arith.constant 0 : i32
    %c0_i32_0 = arith.constant 0 : i32
    return %c0_i32, %arg2 : i32, i32
  }
  func.func @transform_3(%arg0: i32, %arg1: i32, %arg2: i32) -> (i32, i32) {
    %c0_i32 = arith.constant 0 : i32
    %c0_i32_0 = arith.constant 0 : i32
    %c0_i32_1 = arith.constant 0 : i32
    return %c0_i32, %c0_i32_0 : i32, i32
  }
  func.func @transform_4(%arg0: i32, %arg1: i32, %arg2: i32) -> (i32, i32) {
    %c0_i32 = arith.constant 0 : i32
    %c0_i32_0 = arith.constant 0 : i32
    %c0_i32_1 = arith.constant 0 : i32
    return %c0_i32, %c0_i32_0 : i32, i32
  }
  func.func @transform_5(%arg0: i32, %arg1: i32, %arg2: i32) -> (i32, i32, i32) {
    %c0_i32 = arith.constant 0 : i32
    %c0_i32_0 = arith.constant 0 : i32
    %c0_i32_1 = arith.constant 0 : i32
    return %arg0, %c0_i32, %c0_i32_0 : i32, i32, i32
  }
  func.func @transform_6(%arg0: i32, %arg1: i32, %arg2: i32) -> (i32, i32) {
    %c0_i32 = arith.constant 0 : i32
    %c0_i32_0 = arith.constant 0 : i32
    %c0_i32_1 = arith.constant 0 : i32
    return %c0_i32, %c0_i32_0 : i32, i32
  }
  func.func @transform_7(%arg0: i32, %arg1: i32, %arg2: i32) -> (i32, i32) {
    %c0_i32 = arith.constant 0 : i32
    %c0_i32_0 = arith.constant 0 : i32
    %c0_i32_1 = arith.constant 0 : i32
    return %c0_i32, %c0_i32_0 : i32, i32
  }
  func.func @transform_8(%arg0: i32, %arg1: i32, %arg2: i32) -> (i32, i32) {
    %c0_i32 = arith.constant 0 : i32
    %c0_i32_0 = arith.constant 0 : i32
    %c0_i32_1 = arith.constant 0 : i32
    return %c0_i32, %c0_i32_0 : i32, i32
  }
  func.func @transform_9(%arg0: i32, %arg1: i32, %arg2: i32) -> (i32, i32) {
    %c0_i32 = arith.constant 0 : i32
    %c0_i32_0 = arith.constant 0 : i32
    %c0_i32_1 = arith.constant 0 : i32
    return %c0_i32, %c0_i32_0 : i32, i32
  }
  func.func @transform_10(%arg0: i32, %arg1: i32, %arg2: i32) -> (i32, i32) {
    %c0_i32 = arith.constant 0 : i32
    %c0_i32_0 = arith.constant 0 : i32
    %c0_i32_1 = arith.constant 0 : i32
    return %c0_i32, %c0_i32_0 : i32, i32
  }
  func.func @transform_11(%arg0: i32, %arg1: i32, %arg2: i32) -> (i32, i32) {
    %c3_i32 = arith.constant 3 : i32
    %0 = arith.muli %arg0, %c3_i32 : i32
    %1 = arith.addi %0, %arg2 : i32
    %2 = arith.muli %arg1, %1 : i32
    %c1_i32 = arith.constant 1 : i32
    %3 = arith.subi %c1_i32, %arg1 : i32
    %c6_i32 = arith.constant 6 : i32
    %4 = arith.muli %3, %c6_i32 : i32
    %5 = arith.addi %2, %4 : i32
    %c0_i32 = arith.constant 0 : i32
    %c0_i32_0 = arith.constant 0 : i32
    return %c0_i32, %5 : i32, i32
  }
}

</mosaic_0001>

<llo_original>
// kernel: basic_block_forward.3
$region0: #{basic_block_forward.3}
  #allocation0 [shape = 'u32[]', space=smem, size = 0x4, offset = 0x4, fixed_abs, tag = 'smem constant byte address 0x4 - core index']
  #allocation1 [shape = 'u32[144,128]{1,0:T(1,128)}', space=vmem, size = 0x12000, scoped, tag = 'internal scratch']
  %s0 = inlined_call_operand.vmem [shape: f32[8,768], index: 0, kind: input, shape index: {}, may-alias: {0,1,2}]
  %s1 = inlined_call_operand.vmem [shape: f32[8,768], index: 1, kind: input, shape index: {}, may-alias: {0,1,2}]
  %s2 = inlined_call_operand.vmem [shape: f32[8,768], index: 2, kind: input, shape index: {}, may-alias: {0,1,2}]
  %s3 = inlined_call_operand.vmem [shape: f32[1,384], index: 3, kind: input, shape index: {}]
  %s4 = inlined_call_operand.vmem [shape: f32[8,72], index: 4, kind: input, shape index: {}]
  %s5 = inlined_call_operand.vmem [shape: f32[8,8], index: 5, kind: input, shape index: {}]
  %s6 = inlined_call_operand.vmem [shape: f32[8,768], index: 6, kind: output, shape index: {0}]
  %s7 = inlined_call_operand.vmem [shape: f32[2,8,4], index: 7, kind: output, shape index: {1}]
  %8 = xla_tuple %s6, %s7
  %s9 = sld [smem:[#allocation0]]
  $region69: #{basic_block_forward.3} parent=0
    _
  %s11 = ssub.s32 1, %s9
  %s12 = scalar_select 0, %s11, %s9
  loop: start=0, step=1, limit=8
  $region2: #{basic_block_forward.3} parent=0 // loop_pre_header
    _
  $region3: #{basic_block_forward.3} parent=0 // loop_header
    %s14 = sphi 0, %s18
    %p15 = scmp.ge.s32.totalorder %s14, 8
    %s21 = sphi 0, %s33
    %s22 = sphi 0, %s29
    %s23 = sphi 0, %s21
    %s24 = sphi 0, %s22
    %s25 = sphi 0, %s23
    %s26 = sphi 0, %s24
    %s46 = sphi 0, %s48
    %s49 = sphi 0, %s46
    %s50 = sphi 0, %s49
    %s66 = sphi 0, %s50
    %s76 = sphi 0, %s78
    %s79 = sphi 0, %s76
    %s80 = sphi 0, %s79
    %s96 = sphi 0, %s80
    %s112 = sphi 0, %s114
    %s115 = sphi 0, %s112
    %s116 = sphi 0, %s115
    %s132 = sphi 0, %s116
    %s138 = sphi 0, %s140
    %s141 = sphi 0, %s138
    %s142 = sphi 0, %s141
    %s158 = sphi 0, %s142
    %s162 = sphi 0, %s162
    %s164 = sphi 0, %s162
    %s165 = sphi 0, %s164
    %s179 = sphi 0, %s165
    %s183 = sphi 0, %s183
    %s185 = sphi 0, %s183
    %s186 = sphi 0, %s185
    %s200 = sphi 0, %s186
    %s210 = sphi 0, %s212
    %s213 = sphi 0, %s210
    %s214 = sphi 0, %s213
    %s230 = sphi 0, %s214
    %s236 = sphi 0, %s238
    %s239 = sphi 0, %s236
    %s240 = sphi 0, %s239
    %s256 = sphi 0, %s240
  $region4: #{basic_block_forward.3} parent=0 // loop_header_branch
    %17 = sbr.rel (%p15) target = $region8
  $region5: #{basic_block_forward.3} parent=0 // loop_body
    %s19 = ssub.s32 %s14, 1
    %s20 = ssub.s32 %s14, 2
    %s27 = sadd.s32 1, %s22
    %p28 = scmp.ge.s32.totalorder %s27, 3
    %s29 = scalar_select %p28, 0, %s27
    %s30 = sadd.s32 1, %s21
    %s31 = scalar_select %p28, %s30, %s21
    %p32 = scmp.ge.s32.totalorder %s31, 2
    %s33 = scalar_select %p32, 0, %s31
    %s34 = smul.u32 %s21, 3
    %s35 = sadd.s32 %s34, %s22
    %s36 = ssub.s32 %s35, 1
    %p37 = scmp.gt.s32.totalorder %s36, 0
    %s38 = scalar_select %p37, %s36, 0
    %s39 = smul.u32 %s33, 3
    %s40 = sadd.s32 %s39, %s29
    %s41 = ssub.s32 %s40, 1
    %p42 = scmp.gt.s32.totalorder %s41, 0
    %s43 = scalar_select %p42, %s41, 0
    %s44 = ssub.s32 %s38, %s43
    %p45 = scmp.eq.s32.totalorder %s44, 0
    %s47 = sadd.s32 %s46, 1
    %s48 = scalar_select %p45, %s46, %s47
    %p51 = pneg %p45
    %p52 = scmp.eq.s32.totalorder %s14, 5
    %p53 = por %p51, %p52
    %p54 = scmp.ne.s32.totalorder %s46, %s49
    %p55 = scmp.eq.s32.totalorder %s14, 0
    %p56 = por %p54, %p55
    %p57 = scmp.ne.s32.totalorder %s46, %s49
    %p58 = scmp.eq.s32.totalorder %s19, 5
    %p59 = por %p57, %p58
    %p60 = scmp.ne.s32.totalorder %s49, %s50
    %p61 = scmp.eq.s32.totalorder %s19, 0
    %p62 = por %p60, %p61
    %p63 = scmp.ne.s32.totalorder %s49, %s50
    %p64 = scmp.eq.s32.totalorder %s20, 5
    %p65 = por %p63, %p64
    %p67 = scmp.ne.s32.totalorder %s50, %s66
    %p68 = scmp.eq.s32.totalorder %s20, 0
    %p69 = por %p67, %p68
    %s70 = smul.u32 %s21, 3
    %s71 = sadd.s32 %s70, %s22
    %s72 = smul.u32 %s33, 3
    %s73 = sadd.s32 %s72, %s29
    %s74 = ssub.s32 %s71, %s73
    %p75 = scmp.eq.s32.totalorder %s74, 0
    %s77 = sadd.s32 %s76, 1
    %s78 = scalar_select %p75, %s76, %s77
    %p81 = pneg %p75
    %p82 = scmp.eq.s32.totalorder %s14, 5
    %p83 = por %p81, %p82
    %p84 = scmp.ne.s32.totalorder %s76, %s79
    %p85 = scmp.eq.s32.totalorder %s14, 0
    %p86 = por %p84, %p85
    %p87 = scmp.ne.s32.totalorder %s76, %s79
    %p88 = scmp.eq.s32.totalorder %s19, 5
    %p89 = por %p87, %p88
    %p90 = scmp.ne.s32.totalorder %s79, %s80
    %p91 = scmp.eq.s32.totalorder %s19, 0
    %p92 = por %p90, %p91
    %p93 = scmp.ne.s32.totalorder %s79, %s80
    %p94 = scmp.eq.s32.totalorder %s20, 5
    %p95 = por %p93, %p94
    %p97 = scmp.ne.s32.totalorder %s80, %s96
    %p98 = scmp.eq.s32.totalorder %s20, 0
    %p99 = por %p97, %p98
    %s100 = smul.u32 %s21, 3
    %s101 = sadd.s32 %s22, 1
    %s102 = sadd.s32 %s100, %s101
    %p103 = scmp.lt.s32.totalorder %s102, 5
    %s104 = scalar_select %p103, %s102, 5
    %s105 = smul.u32 %s33, 3
    %s106 = sadd.s32 %s29, 1
    %s107 = sadd.s32 %s105, %s106
    %p108 = scmp.lt.s32.totalorder %s107, 5
    %s109 = scalar_select %p108, %s107, 5
    %s110 = ssub.s32 %s104, %s109
    %p111 = scmp.eq.s32.totalorder %s110, 0
    %s113 = sadd.s32 %s112, 1
    %s114 = scalar_select %p111, %s112, %s113
    %p117 = pneg %p111
    %p118 = scmp.eq.s32.totalorder %s14, 5
    %p119 = por %p117, %p118
    %p120 = scmp.ne.s32.totalorder %s112, %s115
    %p121 = scmp.eq.s32.totalorder %s14, 0
    %p122 = por %p120, %p121
    %p123 = scmp.ne.s32.totalorder %s112, %s115
    %p124 = scmp.eq.s32.totalorder %s19, 5
    %p125 = por %p123, %p124
    %p126 = scmp.ne.s32.totalorder %s115, %s116
    %p127 = scmp.eq.s32.totalorder %s19, 0
    %p128 = por %p126, %p127
    %p129 = scmp.ne.s32.totalorder %s115, %s116
    %p130 = scmp.eq.s32.totalorder %s20, 5
    %p131 = por %p129, %p130
    %p133 = scmp.ne.s32.totalorder %s116, %s132
    %p134 = scmp.eq.s32.totalorder %s20, 0
    %p135 = por %p133, %p134
    %s136 = ssub.s32 %s22, %s29
    %p137 = scmp.eq.s32.totalorder %s136, 0
    %s139 = sadd.s32 %s138, 1
    %s140 = scalar_select %p137, %s138, %s139
    %p143 = pneg %p137
    %p144 = scmp.eq.s32.totalorder %s14, 5
    %p145 = por %p143, %p144
    %p146 = scmp.ne.s32.totalorder %s138, %s141
    %p147 = scmp.eq.s32.totalorder %s14, 0
    %p148 = por %p146, %p147
    %p149 = scmp.ne.s32.totalorder %s138, %s141
    %p150 = scmp.eq.s32.totalorder %s19, 5
    %p151 = por %p149, %p150
    %p152 = scmp.ne.s32.totalorder %s141, %s142
    %p153 = scmp.eq.s32.totalorder %s19, 0
    %p154 = por %p152, %p153
    %p155 = scmp.ne.s32.totalorder %s141, %s142
    %p156 = scmp.eq.s32.totalorder %s20, 5
    %p157 = por %p155, %p156
    %p159 = scmp.ne.s32.totalorder %s142, %s158
    %p160 = scmp.eq.s32.totalorder %s20, 0
    %p161 = por %p159, %p160
    %s163 = sadd.s32 %s162, 1
    %p166 = scmp.eq.s32.totalorder %s14, 5
    %p167 = scmp.ne.s32.totalorder %s162, %s164
    %p168 = scmp.eq.s32.totalorder %s14, 0
    %p169 = por %p167, %p168
    %p170 = scmp.ne.s32.totalorder %s162, %s164
    %p171 = scmp.eq.s32.totalorder %s19, 5
    %p172 = por %p170, %p171
    %p173 = scmp.ne.s32.totalorder %s164, %s165
    %p174 = scmp.eq.s32.totalorder %s19, 0
    %p175 = por %p173, %p174
    %p176 = scmp.ne.s32.totalorder %s164, %s165
    %p177 = scmp.eq.s32.totalorder %s20, 5
    %p178 = por %p176, %p177
    %p180 = scmp.ne.s32.totalorder %s165, %s179
    %p181 = scmp.eq.s32.totalorder %s20, 0
    %p182 = por %p180, %p181
    %s184 = sadd.s32 %s183, 1
    %p187 = scmp.eq.s32.totalorder %s14, 5
    %p188 = scmp.ne.s32.totalorder %s183, %s185
    %p189 = scmp.eq.s32.totalorder %s14, 0
    %p190 = por %p188, %p189
    %p191 = scmp.ne.s32.totalorder %s183, %s185
    %p192 = scmp.eq.s32.totalorder %s19, 5
    %p193 = por %p191, %p192
    %p194 = scmp.ne.s32.totalorder %s185, %s186
    %p195 = scmp.eq.s32.totalorder %s19, 0
    %p196 = por %p194, %p195
    %p197 = scmp.ne.s32.totalorder %s185, %s186
    %p198 = scmp.eq.s32.totalorder %s20, 5
    %p199 = por %p197, %p198
    %p201 = scmp.ne.s32.totalorder %s186, %s200
    %p202 = scmp.eq.s32.totalorder %s20, 0
    %p203 = por %p201, %p202
    %s204 = smul.u32 %s21, 3
    %s205 = sadd.s32 %s204, %s22
    %s206 = smul.u32 %s33, 3
    %s207 = sadd.s32 %s206, %s29
    %s208 = ssub.s32 %s205, %s207
    %p209 = scmp.eq.s32.totalorder %s208, 0
    %s211 = sadd.s32 %s210, 1
    %s212 = scalar_select %p209, %s210, %s211
    %p215 = pneg %p209
    %p216 = scmp.eq.s32.totalorder %s14, 5
    %p217 = por %p215, %p216
    %p218 = scmp.ne.s32.totalorder %s210, %s213
    %p219 = scmp.eq.s32.totalorder %s14, 0
    %p220 = por %p218, %p219
    %p221 = scmp.ne.s32.totalorder %s210, %s213
    %p222 = scmp.eq.s32.totalorder %s19, 5
    %p223 = por %p221, %p222
    %p224 = scmp.ne.s32.totalorder %s213, %s214
    %p225 = scmp.eq.s32.totalorder %s19, 0
    %p226 = por %p224, %p225
    %p227 = scmp.ne.s32.totalorder %s213, %s214
    %p228 = scmp.eq.s32.totalorder %s20, 5
    %p229 = por %p227, %p228
    %p231 = scmp.ne.s32.totalorder %s214, %s230
    %p232 = scmp.eq.s32.totalorder %s20, 0
    %p233 = por %p231, %p232
    %s234 = ssub.s32 %s21, %s33
    %p235 = scmp.eq.s32.totalorder %s234, 0
    %s237 = sadd.s32 %s236, 1
    %s238 = scalar_select %p235, %s236, %s237
    %p241 = pneg %p235
    %p242 = scmp.eq.s32.totalorder %s14, 5
    %p243 = por %p241, %p242
    %p244 = scmp.ne.s32.totalorder %s236, %s239
    %p245 = scmp.eq.s32.totalorder %s14, 0
    %p246 = por %p244, %p245
    %p247 = scmp.ne.s32.totalorder %s236, %s239
    %p248 = scmp.eq.s32.totalorder %s19, 5
    %p249 = por %p247, %p248
    %p250 = scmp.ne.s32.totalorder %s239, %s240
    %p251 = scmp.eq.s32.totalorder %s19, 0
    %p252 = por %p250, %p251
    %p253 = scmp.ne.s32.totalorder %s239, %s240
    %p254 = scmp.eq.s32.totalorder %s20, 5
    %p255 = por %p253, %p254
    %p257 = scmp.ne.s32.totalorder %s240, %s256
    %p258 = scmp.eq.s32.totalorder %s20, 0
    %p259 = por %p257, %p258
    %p260 = scmp.le.s32.totalorder 1, %s14
    %p261 = scmp.lt.s32.totalorder %s14, 7
    %p262 = pnand %p260, %p261
    %p263 = pneg %p262
    // Predicated region
    $region9: #{basic_block_forward.3} parent=5 // pred_check
      _
    $region10: #{basic_block_forward.3} parent=5 // pred_check_branch
      %265 = sbr.rel (%p262) target = $region12
    $region11: #{basic_block_forward.3} parent=5 // pred_region
      %s266 = ssub.s32 %s14, 1
      // Predicated region
      $region13: #{basic_block_forward.3} parent=11 // pred_check
        %p267 = pneg %p175
      $region14: #{basic_block_forward.3} parent=11 // pred_check_branch
        %269 = sbr.rel (%p267) target = $region16
      $region15: #{basic_block_forward.3} parent=11 // pred_region
        _
      $region16: #{basic_block_forward.3} parent=11 // pred_fallthru
        _
      // Predicated region
      $region17: #{basic_block_forward.3} parent=11 // pred_check
        %p270 = pneg %p196
      $region18: #{basic_block_forward.3} parent=11 // pred_check_branch
        %272 = sbr.rel (%p270) target = $region20
      $region19: #{basic_block_forward.3} parent=11 // pred_region
        _
      $region20: #{basic_block_forward.3} parent=11 // pred_fallthru
        _
    $region12: #{basic_block_forward.3} parent=5 // pred_fallthru
      _
    %p273 = scmp.lt.s32.totalorder %s14, 6
    // Predicated region
    $region21: #{basic_block_forward.3} parent=5 // pred_check
      %p274 = pneg %p273
    $region22: #{basic_block_forward.3} parent=5 // pred_check_branch
      %276 = sbr.rel (%p274) target = $region24
    $region23: #{basic_block_forward.3} parent=5 // pred_region
      // Predicated region
      $region25: #{basic_block_forward.3} parent=23 // pred_check
        %p277 = pneg %p56
      $region26: #{basic_block_forward.3} parent=23 // pred_check_branch
        %279 = sbr.rel (%p277) target = $region28
      $region27: #{basic_block_forward.3} parent=23 // pred_region
        %s280 = smul.u32 %s21, 3
        %s281 = sadd.s32 %s280, %s22
        %s282 = ssub.s32 %s281, 1
        %p283 = scmp.gt.s32.totalorder %s282, 0
        %s284 = scalar_select %p283, %s282, 0
        %p285 = scmp.lt.s32.totalorder %s284, 5
        %s286 = scalar_select %p285, %s284, 5
        %s287 = smul.addr %s286, 8
        %s288 = scalar_lea.vmem %s0, %s287
        %s289 = smul.u32 %s21, 3
        %s290 = sadd.s32 %s289, %s22
        %s291 = ssub.s32 %s290, 1
        %p292 = scmp.gt.s32.totalorder %s291, 0
        %s293 = scalar_select %p292, %s291, 0
      $region28: #{basic_block_forward.3} parent=23 // pred_fallthru
        _
      // Predicated region
      $region29: #{basic_block_forward.3} parent=23 // pred_check
        %p294 = pneg %p86
      $region30: #{basic_block_forward.3} parent=23 // pred_check_branch
        %296 = sbr.rel (%p294) target = $region32
      $region31: #{basic_block_forward.3} parent=23 // pred_region
        %s297 = smul.u32 %s21, 3
        %s298 = sadd.s32 %s297, %s22
        %p299 = scmp.lt.s32.totalorder %s298, 5
        %s300 = scalar_select %p299, %s298, 5
        %s301 = smul.addr %s300, 8
        %s302 = scalar_lea.vmem %s1, %s301
        %s303 = smul.u32 %s21, 3
        %s304 = sadd.s32 %s303, %s22
      $region32: #{basic_block_forward.3} parent=23 // pred_fallthru
        _
      // Predicated region
      $region33: #{basic_block_forward.3} parent=23 // pred_check
        %p305 = pneg %p122
      $region34: #{basic_block_forward.3} parent=23 // pred_check_branch
        %307 = sbr.rel (%p305) target = $region36
      $region35: #{basic_block_forward.3} parent=23 // pred_region
        %s308 = smul.u32 %s21, 3
        %s309 = sadd.s32 %s22, 1
        %s310 = sadd.s32 %s308, %s309
        %p311 = scmp.lt.s32.totalorder %s310, 5
        %s312 = scalar_select %p311, %s310, 5
        %p313 = scmp.lt.s32.totalorder %s312, 5
        %s314 = scalar_select %p313, %s312, 5
        %s315 = smul.addr %s314, 8
        %s316 = scalar_lea.vmem %s2, %s315
        %s317 = smul.u32 %s21, 3
        %s318 = sadd.s32 %s22, 1
        %s319 = sadd.s32 %s317, %s318
        %p320 = scmp.lt.s32.totalorder %s319, 5
        %s321 = scalar_select %p320, %s319, 5
      $region36: #{basic_block_forward.3} parent=23 // pred_fallthru
        _
      // Predicated region
      $region37: #{basic_block_forward.3} parent=23 // pred_check
        %p322 = pneg %p148
      $region38: #{basic_block_forward.3} parent=23 // pred_check_branch
        %324 = sbr.rel (%p322) target = $region40
      $region39: #{basic_block_forward.3} parent=23 // pred_region
        %p325 = scmp.lt.s32.totalorder %s22, 2
        %s326 = scalar_select %p325, %s22, 2
        %s327 = scalar_lea.vmem %s3, %s326
      $region40: #{basic_block_forward.3} parent=23 // pred_fallthru
        _
    $region24: #{basic_block_forward.3} parent=5 // pred_fallthru
      _
    %p328 = scmp.le.s32.totalorder 1, %s14
    %p329 = scmp.lt.s32.totalorder %s14, 7
    %p330 = pnand %p328, %p329
    %p331 = pneg %p330
    // Predicated region
    $region41: #{basic_block_forward.3} parent=5 // pred_check
      _
    $region42: #{basic_block_forward.3} parent=5 // pred_check_branch
      %333 = sbr.rel (%p330) target = $region44
    $region43: #{basic_block_forward.3} parent=5 // pred_region
      %s334 = ssub.s32 %s14, 1
      %s335 = smul.u32 %s23, 3
      %s336 = sadd.s32 %s335, %s24
      %s337 = ssub.s32 %s336, 1
      %p338 = scmp.gt.s32.totalorder %s337, 0
      %s339 = scalar_select %p338, %s337, 0
      %p340 = scmp.lt.s32.totalorder %s339, 5
      %s341 = scalar_select %p340, %s339, 5
      %s342 = smul.addr %s341, 8
      %s343 = scalar_lea.vmem %s0, %s342
      %p344 = pneg %p62
      %p345 = pneg %p59
      %s346 = smul.u32 %s23, 3
      %s347 = sadd.s32 %s346, %s24
      %p348 = scmp.lt.s32.totalorder %s347, 5
      %s349 = scalar_select %p348, %s347, 5
      %s350 = smul.addr %s349, 8
      %s351 = scalar_lea.vmem %s1, %s350
      %p352 = pneg %p92
      %p353 = pneg %p89
      %s354 = smul.u32 %s23, 3
      %s355 = sadd.s32 %s24, 1
      %s356 = sadd.s32 %s354, %s355
      %p357 = scmp.lt.s32.totalorder %s356, 5
      %s358 = scalar_select %p357, %s356, 5
      %p359 = scmp.lt.s32.totalorder %s358, 5
      %s360 = scalar_select %p359, %s358, 5
      %s361 = smul.addr %s360, 8
      %s362 = scalar_lea.vmem %s2, %s361
      %p363 = pneg %p128
      %p364 = pneg %p125
      %p365 = scmp.lt.s32.totalorder %s24, 2
      %s366 = scalar_select %p365, %s24, 2
      %s367 = scalar_lea.vmem %s3, %s366
      %p368 = pneg %p154
      %p369 = pneg %p151
      %p370 = pneg %p175
      %p371 = pneg %p172
      %p372 = pneg %p196
      %p373 = pneg %p193
      %p374 = pneg %p226
      %p375 = pneg %p223
      %s376 = smul.u32 %s23, 3
      %s377 = sadd.s32 %s376, %s24
      %p378 = scmp.lt.s32.totalorder %s377, 5
      %s379 = scalar_select %p378, %s377, 5
      %s380 = smul.addr %s379, 8
      %s381 = scalar_lea.vmem %s6, %s380
      %p382 = pneg %p252
      %p383 = pneg %p249
      %p384 = scmp.lt.s32.totalorder %s23, 1
      %s385 = scalar_select %p384, %s23, 1
      %s386 = smul.addr %s385, 8
      %s387 = scalar_lea.vmem %s7, %s386
      %s388 = smul.u32 %s23, 3
      %s389 = sadd.s32 %s388, %s24
      %s390 = ssub.s32 %s389, 1
      %p391 = scmp.gt.s32.totalorder %s390, 0
      %s392 = scalar_select %p391, %s390, 0
      %p393 = scmp.lt.s32.totalorder %s392, 5
      %s394 = scalar_select %p393, %s392, 5
      %s395 = smul.addr %s394, 8
      %s396 = scalar_lea.vmem %s0, %s395
      %s397 = smul.u32 %s23, 3
      %s398 = sadd.s32 %s397, %s24
      %s399 = ssub.s32 %s398, 1
      %p400 = scmp.gt.s32.totalorder %s399, 0
      %s401 = scalar_select %p400, %s399, 0
      %s402 = smul.u32 %s23, 3
      %s403 = sadd.s32 %s402, %s24
      %p404 = scmp.lt.s32.totalorder %s403, 5
      %s405 = scalar_select %p404, %s403, 5
      %s406 = smul.addr %s405, 8
      %s407 = scalar_lea.vmem %s1, %s406
      %s408 = smul.u32 %s23, 3
      %s409 = sadd.s32 %s408, %s24
      %s410 = smul.u32 %s23, 3
      %s411 = sadd.s32 %s24, 1
      %s412 = sadd.s32 %s410, %s411
      %p413 = scmp.lt.s32.totalorder %s412, 5
      %s414 = scalar_select %p413, %s412, 5
      %p415 = scmp.lt.s32.totalorder %s414, 5
      %s416 = scalar_select %p415, %s414, 5
      %s417 = smul.addr %s416, 8
      %s418 = scalar_lea.vmem %s2, %s417
      %s419 = smul.u32 %s23, 3
      %s420 = sadd.s32 %s24, 1
      %s421 = sadd.s32 %s419, %s420
      %p422 = scmp.lt.s32.totalorder %s421, 5
      %s423 = scalar_select %p422, %s421, 5
      %p424 = scmp.lt.s32.totalorder %s24, 2
      %s425 = scalar_select %p424, %s24, 2
      %s426 = scalar_lea.vmem %s3, %s425
      %s427 = smul.u32 %s23, 3
      %s428 = sadd.s32 %s427, %s24
      %p429 = scmp.lt.s32.totalorder %s428, 5
      %s430 = scalar_select %p429, %s428, 5
      %s431 = smul.addr %s430, 8
      %s432 = scalar_lea.vmem %s6, %s431
      %s433 = smul.u32 %s23, 3
      %s434 = sadd.s32 %s433, %s24
      %p435 = scmp.lt.s32.totalorder %s23, 1
      %s436 = scalar_select %p435, %s23, 1
      %s437 = smul.addr %s436, 8
      %s438 = scalar_lea.vmem %s7, %s437
      %v439 = vld [vmem:[%s396] sm:$0xff]
      %v440 = vld [vmem:[%s407] sm:$0xff]
      %v441 = vld [vmem:[%s418] sm:$0xff]
      %444 = vrot.lane.b32.xlu0 %v439, 127
      %v445 = vpop.permute.xlu0 %444
      %446 = vrot.lane.b32.xlu0 %v440, 127
      %v447 = vpop.permute.xlu0 %446
      %vm448 = vcmask 1039360
      %v449 = vsel %vm448, %v445, %v447
      %450 = vrot.lane.b32.xlu0 %v439, 126
      %v451 = vpop.permute.xlu0 %450
      %452 = vrot.lane.b32.xlu0 %v440, 126
      %v453 = vpop.permute.xlu0 %452
      %vm454 = vcmask 1031168
      %v455 = vsel %vm454, %v451, %v453
      %456 = vrot.lane.b32.xlu0 %v439, 110
      %v457 = vpop.permute.xlu0 %456
      %458 = vrot.lane.b32.xlu0 %v440, 110
      %v459 = vpop.permute.xlu0 %458
      %vm460 = vcmask 900096
      %v461 = vsel %vm460, %v457, %v459
      %462 = vrot.lane.b32.xlu0 %v440, 109
      %v463 = vpop.permute.xlu0 %462
      %465 = vrot.lane.b32.xlu0 %v440, 108
      %v466 = vpop.permute.xlu0 %465
      %467 = vrot.lane.b32.xlu0 %v441, 108
      %v468 = vpop.permute.xlu0 %467
      %vm469 = vcmask 883712
      %v470 = vsel %vm469, %v466, %v468
      %471 = vrot.lane.b32.xlu0 %v440, 92
      %v472 = vpop.permute.xlu0 %471
      %473 = vrot.lane.b32.xlu0 %v441, 92
      %v474 = vpop.permute.xlu0 %473
      %vm475 = vcmask 752640
      %v476 = vsel %vm475, %v472, %v474
      %477 = vrot.lane.b32.xlu0 %v440, 91
      %v478 = vpop.permute.xlu0 %477
      %479 = vrot.lane.b32.xlu0 %v441, 91
      %v480 = vpop.permute.xlu0 %479
      %vm481 = vcmask 744448
      %v482 = vsel %vm481, %v478, %v480
      %483 = vrot.lane.b32.xlu0 %v440, 90
      %v484 = vpop.permute.xlu0 %483
      %485 = vrot.lane.b32.xlu0 %v441, 90
      %v486 = vpop.permute.xlu0 %485
      %vm487 = vcmask 736256
      %v488 = vsel %vm487, %v484, %v486
      %v489 = vld [vmem:[%s4] sm:$0xff]
      %490 = vrot.lane.b32.xlu0 %v439, 19
      %v491 = vpop.permute.xlu0 %490
      %492 = vrot.lane.b32.xlu0 %v440, 19
      %v493 = vpop.permute.xlu0 %492
      %494 = vrot.lane.b32.xlu0 %v449, 19
      %v495 = vpop.permute.xlu0 %494
      %496 = vrot.lane.b32.xlu0 %v447, 19
      %v497 = vpop.permute.xlu0 %496
      %498 = vrot.lane.b32.xlu0 %v455, 19
      %v499 = vpop.permute.xlu0 %498
      %500 = vrot.lane.b32.xlu0 %v453, 19
      %v501 = vpop.permute.xlu0 %500
      %502 = vrot.lane.b32.xlu0 %v461, 19
      %v503 = vpop.permute.xlu0 %502
      %504 = vrot.lane.b32.xlu0 %v459, 19
      %v505 = vpop.permute.xlu0 %504
      %506 = vrot.lane.b32.xlu0 %v463, 19
      %v507 = vpop.permute.xlu0 %506
      %508 = vrot.lane.b32.xlu0 %v466, 19
      %v509 = vpop.permute.xlu0 %508
      %510 = vrot.lane.b32.xlu0 %v470, 19
      %v511 = vpop.permute.xlu0 %510
      %512 = vrot.lane.b32.xlu0 %v472, 19
      %v513 = vpop.permute.xlu0 %512
      %514 = vrot.lane.b32.xlu0 %v476, 19
      %v515 = vpop.permute.xlu0 %514
      %516 = vrot.lane.b32.xlu0 %v478, 19
      %v517 = vpop.permute.xlu0 %516
      %518 = vrot.lane.b32.xlu0 %v482, 19
      %v519 = vpop.permute.xlu0 %518
      %520 = vrot.lane.b32.xlu0 %v484, 19
      %v521 = vpop.permute.xlu0 %520
      %522 = vrot.lane.b32.xlu0 %v488, 19
      %v523 = vpop.permute.xlu0 %522
      %vm524 = vcmask 154624
      %v525 = vsel %vm524, %v491, %v493
      %v526 = vsel %vm524, %v495, %v497
      %v527 = vsel %vm524, %v499, %v501
      %v528 = vsel %vm524, %v503, %v505
      %v529 = vsel %vm524, %v509, %v511
      %v530 = vsel %vm524, %v513, %v515
      %v531 = vsel %vm524, %v517, %v519
      %v532 = vsel %vm524, %v521, %v523
      %vm542 = vcmask 588800
      %v544 = vsel %vm542, %v489, 0
      %546 = vmatprep.subr.mxu0 0.0
      %547 = vmatpush1.msra.mxu0 0.0
      %548 = vmatprep.subr.mxu0 0.0
      %549 = vmatpush1.msra.mxu0 0.0
      %550 = vmatprep.subr.mxu0 0.0
      %551 = vmatpush1.msra.mxu0 0.0
      %552 = vmatprep.subr.mxu0 0.0
      %553 = vmatpush1.msra.mxu0 0.0
      %554 = vmatprep.subr.mxu0 0.0
      %555 = vmatpush1.msra.mxu0 0.0
      %556 = vmatprep.subr.mxu0 0.0
      %557 = vmatpush1.msra.mxu0 0.0
      %558 = vmatprep.subr.mxu0 0.0
      %559 = vmatpush1.msra.mxu0 0.0
      %560 = vmatprep.subr.mxu0 0.0
      %561 = vmatpush1.msra.mxu0 %v532
      %562 = vmatprep.subr.mxu0 0.0
      %563 = vmatpush1.msra.mxu0 %v531
      %564 = vmatprep.subr.mxu0 0.0
      %565 = vmatpush1.msra.mxu0 %v530
      %566 = vmatprep.subr.mxu0 0.0
      %567 = vmatpush1.msra.mxu0 %v529
      %568 = vmatprep.subr.mxu0 0.0
      %569 = vmatpush1.msra.mxu0 %v507
      %570 = vmatprep.subr.mxu0 0.0
      %571 = vmatpush1.msra.mxu0 %v528
      %572 = vmatprep.subr.mxu0 0.0
      %573 = vmatpush1.msra.mxu0 %v527
      %574 = vmatprep.subr.mxu0 0.0
      %575 = vmatpush1.msra.mxu0 %v526
      %576 = vmatprep.subr.mxu0 0.0
      %577 = vmatpush1.msra.mxu0 %v525
      %578 = vmatprep.subr.mxu0 0.0
      %579 = vmatpush2.msra.mxu0 0.0
      %580 = vmatprep.subr.mxu0 0.0
      %581 = vmatpush2.msra.mxu0 0.0
      %582 = vmatprep.subr.mxu0 0.0
      %583 = vmatpush2.msra.mxu0 0.0
      %584 = vmatprep.subr.mxu0 0.0
      %585 = vmatpush2.msra.mxu0 0.0
      %586 = vmatprep.subr.mxu0 0.0
      %587 = vmatpush2.msra.mxu0 0.0
      %588 = vmatprep.subr.mxu0 0.0
      %589 = vmatpush2.msra.mxu0 0.0
      %590 = vmatprep.subr.mxu0 0.0
      %591 = vmatpush2.msra.mxu0 0.0
      %592 = vmatprep.subr.mxu0 0.0
      %593 = vmatpush2.msra.mxu0 0.0
      %594 = vmatprep.subr.mxu0 0.0
      %595 = vmatpush2.msra.mxu0 0.0
      %596 = vmatprep.subr.mxu0 0.0
      %597 = vmatpush2.msra.mxu0 0.0
      %598 = vmatprep.subr.mxu0 0.0
      %599 = vmatpush2.msra.mxu0 0.0
      %600 = vmatprep.subr.mxu0 0.0
      %601 = vmatpush2.msra.mxu0 0.0
      %602 = vmatprep.subr.mxu0 0.0
      %603 = vmatpush2.msra.mxu0 0.0
      %604 = vmatprep.subr.mxu0 0.0
      %605 = vmatpush2.msra.mxu0 0.0
      %606 = vmatprep.subr.mxu0 0.0
      %607 = vmatpush2.msra.mxu0 0.0
      %608 = vmatprep.subr.mxu0 0.0
      %609 = vmatpush2.msra.mxu0 0.0
      %610 = vmatprep.mubr.f32.mxu0 0.0
      %611 = vmatmul.mubr.f32.gmra.mxu0 %v544
      %v612 = vpop.f32.mrf.mxu0
      %v613 = vadd.f32 0.0, %v612
      %v614 = vpop.f32.mrf.mxu0
      %615 = vdwg.mxu0
      %v616 = vld [vmem:[%s426] sm:$0x1]
      %v618 = vlaneseq
      %v619 = vshrl.u32 %v618, 7
      %v620 = vsub.s32 0, %v619
      %v621 = vrot.slane %v616, %v620
      %v623 = vmul.f32 %v613, %v621
      %v624 = vld [vmem:[%s5] sm:$0xff]
      %vm625 = vcmask 64512
      %v627 = vsel %vm625, %v624, 0
      %629 = vmatprep.subr.mxu0 0.0
      %630 = vmatpush1.msra.mxu0 0.0
      %631 = vmatprep.subr.mxu0 0.0
      %632 = vmatpush1.msra.mxu0 0.0
      %633 = vmatprep.subr.mxu0 0.0
      %634 = vmatpush1.msra.mxu0 0.0
      %635 = vmatprep.subr.mxu0 0.0
      %636 = vmatpush1.msra.mxu0 0.0
      %637 = vmatprep.subr.mxu0 0.0
      %638 = vmatpush1.msra.mxu0 0.0
      %639 = vmatprep.subr.mxu0 0.0
      %640 = vmatpush1.msra.mxu0 0.0
      %641 = vmatprep.subr.mxu0 0.0
      %642 = vmatpush1.msra.mxu0 0.0
      %643 = vmatprep.subr.mxu0 0.0
      %644 = vmatpush1.msra.mxu0 0.0
      %645 = vmatprep.subr.mxu0 0.0
      %646 = vmatpush1.msra.mxu0 0.0
      %647 = vmatprep.subr.mxu0 0.0
      %648 = vmatpush1.msra.mxu0 0.0
      %649 = vmatprep.subr.mxu0 0.0
      %650 = vmatpush1.msra.mxu0 0.0
      %651 = vmatprep.subr.mxu0 0.0
      %652 = vmatpush1.msra.mxu0 0.0
      %653 = vmatprep.subr.mxu0 0.0
      %654 = vmatpush1.msra.mxu0 0.0
      %655 = vmatprep.subr.mxu0 0.0
      %656 = vmatpush1.msra.mxu0 0.0
      %657 = vmatprep.subr.mxu0 0.0
      %658 = vmatpush1.msra.mxu0 0.0
      %659 = vmatprep.subr.mxu0 0.0
      %660 = vmatpush1.msra.mxu0 %v440
      %661 = vmatprep.subr.mxu0 0.0
      %662 = vmatpush2.msra.mxu0 0.0
      %663 = vmatprep.subr.mxu0 0.0
      %664 = vmatpush2.msra.mxu0 0.0
      %665 = vmatprep.subr.mxu0 0.0
      %666 = vmatpush2.msra.mxu0 0.0
      %667 = vmatprep.subr.mxu0 0.0
      %668 = vmatpush2.msra.mxu0 0.0
      %669 = vmatprep.subr.mxu0 0.0
      %670 = vmatpush2.msra.mxu0 0.0
      %671 = vmatprep.subr.mxu0 0.0
      %672 = vmatpush2.msra.mxu0 0.0
      %673 = vmatprep.subr.mxu0 0.0
      %674 = vmatpush2.msra.mxu0 0.0
      %675 = vmatprep.subr.mxu0 0.0
      %676 = vmatpush2.msra.mxu0 0.0
      %677 = vmatprep.subr.mxu0 0.0
      %678 = vmatpush2.msra.mxu0 0.0
      %679 = vmatprep.subr.mxu0 0.0
      %680 = vmatpush2.msra.mxu0 0.0
      %681 = vmatprep.subr.mxu0 0.0
      %682 = vmatpush2.msra.mxu0 0.0
      %683 = vmatprep.subr.mxu0 0.0
      %684 = vmatpush2.msra.mxu0 0.0
      %685 = vmatprep.subr.mxu0 0.0
      %686 = vmatpush2.msra.mxu0 0.0
      %687 = vmatprep.subr.mxu0 0.0
      %688 = vmatpush2.msra.mxu0 0.0
      %689 = vmatprep.subr.mxu0 0.0
      %690 = vmatpush2.msra.mxu0 0.0
      %691 = vmatprep.subr.mxu0 0.0
      %692 = vmatpush2.msra.mxu0 0.0
      %693 = vmatprep.mubr.f32.mxu0 0.0
      %694 = vmatmul.mubr.f32.gmra.mxu0 %v627
      %v695 = vpop.f32.mrf.mxu0
      %v696 = vadd.f32 0.0, %v695
      %v697 = vpop.f32.mrf.mxu0
      %698 = vdwg.mxu0
      %699 = vst [vmem:[%s432] sm:$0xff] %v623
      %700 = vadd.xlane.f32.xlu0 %v623
      %v701 = vpop.xlane.xlu0 %700
      %v702 = vmul.f32 %v623, %v623
      %703 = vadd.xlane.f32.xlu0 %v702
      %v704 = vpop.xlane.xlu0 %703
      %705 = vadd.xlane.f32.xlu0 %v696
      %v706 = vpop.xlane.xlu0 %705
      %v707 = vmul.f32 %v696, %v696
      %708 = vadd.xlane.f32.xlu0 %v707
      %v709 = vpop.xlane.xlu0 %708
      %vm710 = vcmask 7168
      %v711 = vsel %vm710, %v701, %v704
      %vm712 = vcmask 15360
      %v713 = vsel %vm712, %v711, %v706
      %vm714 = vcmask 23552
      %v715 = vsel %vm714, %v713, %v709
      %p716 = scmp.eq.s32.totalorder %s24, 0
      // Predicated region
      $region45: #{basic_block_forward.3} parent=43 // pred_check
        %p717 = pneg %p716
      $region46: #{basic_block_forward.3} parent=43 // pred_check_branch
        %719 = sbr.rel (%p717) target = $region48
      $region47: #{basic_block_forward.3} parent=43 // pred_region
        %vm720 = vcmask 31744
        %721 = vst.msk [vmem:[%s438] sm:$0xff] %vm720, 0.0
      $region48: #{basic_block_forward.3} parent=43 // pred_fallthru
        _
      %v722 = vld [vmem:[%s438] sm:$0xff]
      %v723 = vadd.f32 %v722, %v715
      %vm724 = vcmask 31744
      %725 = vst.msk [vmem:[%s438] sm:$0xff] %vm724, %v723
      %s726 = smul.u32 %s23, 3
      %s727 = sadd.s32 %s726, %s24
      %p728 = scmp.lt.s32.totalorder %s727, 5
      %s729 = scalar_select %p728, %s727, 5
      %s730 = smul.addr %s729, 8
      %s731 = scalar_lea.vmem %s6, %s730
      %p732 = scmp.lt.s32.totalorder %s23, 1
      %s733 = scalar_select %p732, %s23, 1
      %s734 = smul.addr %s733, 8
      %s735 = scalar_lea.vmem %s7, %s734
      // Predicated region
      $region49: #{basic_block_forward.3} parent=43 // pred_check
        %p736 = pneg %p223
      $region50: #{basic_block_forward.3} parent=43 // pred_check_branch
        %738 = sbr.rel (%p736) target = $region52
      $region51: #{basic_block_forward.3} parent=43 // pred_region
        %s739 = smul.u32 %s23, 3
        %s740 = sadd.s32 %s739, %s24
      $region52: #{basic_block_forward.3} parent=43 // pred_fallthru
        _
      // Predicated region
      $region53: #{basic_block_forward.3} parent=43 // pred_check
        %p741 = pneg %p249
      $region54: #{basic_block_forward.3} parent=43 // pred_check_branch
        %743 = sbr.rel (%p741) target = $region56
      $region55: #{basic_block_forward.3} parent=43 // pred_region
        _
      $region56: #{basic_block_forward.3} parent=43 // pred_fallthru
        _
    $region44: #{basic_block_forward.3} parent=5 // pred_fallthru
      _
    %p744 = scmp.le.s32.totalorder 2, %s14
    // Predicated region
    $region57: #{basic_block_forward.3} parent=5 // pred_check
      %p745 = pneg %p744
    $region58: #{basic_block_forward.3} parent=5 // pred_check_branch
      %747 = sbr.rel (%p745) target = $region60
    $region59: #{basic_block_forward.3} parent=5 // pred_region
      %s748 = ssub.s32 %s14, 2
      // Predicated region
      $region61: #{basic_block_forward.3} parent=59 // pred_check
        %p749 = pneg %p229
      $region62: #{basic_block_forward.3} parent=59 // pred_check_branch
        %751 = sbr.rel (%p749) target = $region64
      $region63: #{basic_block_forward.3} parent=59 // pred_region
        %s752 = smul.u32 %s25, 3
        %s753 = sadd.s32 %s752, %s26
        %p754 = scmp.lt.s32.totalorder %s753, 5
        %s755 = scalar_select %p754, %s753, 5
        %s756 = smul.addr %s755, 8
        %s757 = scalar_lea.vmem %s6, %s756
      $region64: #{basic_block_forward.3} parent=59 // pred_fallthru
        _
      // Predicated region
      $region65: #{basic_block_forward.3} parent=59 // pred_check
        %p758 = pneg %p255
      $region66: #{basic_block_forward.3} parent=59 // pred_check_branch
        %760 = sbr.rel (%p758) target = $region68
      $region67: #{basic_block_forward.3} parent=59 // pred_region
        %p761 = scmp.lt.s32.totalorder %s25, 1
        %s762 = scalar_select %p761, %s25, 1
        %s763 = smul.addr %s762, 8
        %s764 = scalar_lea.vmem %s7, %s763
      $region68: #{basic_block_forward.3} parent=59 // pred_fallthru
        _
    $region60: #{basic_block_forward.3} parent=5 // pred_fallthru
      _
  $region6: #{basic_block_forward.3} parent=0 // loop_footer
    %s18 = sadd.s32 1, %s14
  $region7: #{basic_block_forward.3} parent=0 // loop_footer_branch
    %13 = sbr.rel target = $region3
  $region8: #{basic_block_forward.3} parent=0 // loop_exit
    _

// kernel: basic_block_forward.4
$region0: #{basic_block_forward.4}
  #allocation0 [shape = 'u32[]', space=smem, size = 0x4, offset = 0x4, fixed_abs, tag = 'smem constant byte address 0x4 - core index']
  #allocation1 [shape = 'u32[144,128]{1,0:T(1,128)}', space=vmem, size = 0x12000, scoped, tag = 'internal scratch']
  %s0 = inlined_call_operand.vmem [shape: f32[8,768], index: 0, kind: input, shape index: {}, may-alias: {0,1,2}]
  %s1 = inlined_call_operand.vmem [shape: f32[8,768], index: 1, kind: input, shape index: {}, may-alias: {0,1,2}]
  %s2 = inlined_call_operand.vmem [shape: f32[8,768], index: 2, kind: input, shape index: {}, may-alias: {0,1,2}]
  %s3 = inlined_call_operand.vmem [shape: f32[1,384], index: 3, kind: input, shape index: {}, may-alias: {3,4,5}]
  %s4 = inlined_call_operand.vmem [shape: f32[1,384], index: 4, kind: input, shape index: {}, may-alias: {3,4,5}]
  %s5 = inlined_call_operand.vmem [shape: f32[1,384], index: 5, kind: input, shape index: {}, may-alias: {3,4,5}]
  %s6 = inlined_call_operand.vmem [shape: f32[8,2], index: 6, kind: input, shape index: {}]
  %s7 = inlined_call_operand.vmem [shape: f32[8,72], index: 7, kind: input, shape index: {}]
  %s8 = inlined_call_operand.vmem [shape: f32[8,768], index: 8, kind: output, shape index: {0}]
  %s9 = inlined_call_operand.vmem [shape: f32[2,8,2], index: 9, kind: output, shape index: {1}]
  %10 = xla_tuple %s8, %s9
  %s11 = sld [smem:[#allocation0]]
  $region77: #{basic_block_forward.4} parent=0
    _
  %s13 = ssub.s32 1, %s11
  %s14 = scalar_select 0, %s13, %s11
  loop: start=0, step=1, limit=8
  $region2: #{basic_block_forward.4} parent=0 // loop_pre_header
    _
  $region3: #{basic_block_forward.4} parent=0 // loop_header
    %s16 = sphi 0, %s20
    %p17 = scmp.ge.s32.totalorder %s16, 8
    %s23 = sphi 0, %s35
    %s24 = sphi 0, %s31
    %s25 = sphi 0, %s23
    %s26 = sphi 0, %s24
    %s27 = sphi 0, %s25
    %s28 = sphi 0, %s26
    %s48 = sphi 0, %s50
    %s51 = sphi 0, %s48
    %s52 = sphi 0, %s51
    %s68 = sphi 0, %s52
    %s78 = sphi 0, %s80
    %s81 = sphi 0, %s78
    %s82 = sphi 0, %s81
    %s98 = sphi 0, %s82
    %s114 = sphi 0, %s116
    %s117 = sphi 0, %s114
    %s118 = sphi 0, %s117
    %s134 = sphi 0, %s118
    %s146 = sphi 0, %s148
    %s149 = sphi 0, %s146
    %s150 = sphi 0, %s149
    %s166 = sphi 0, %s150
    %s172 = sphi 0, %s174
    %s175 = sphi 0, %s172
    %s176 = sphi 0, %s175
    %s192 = sphi 0, %s176
    %s204 = sphi 0, %s206
    %s207 = sphi 0, %s204
    %s208 = sphi 0, %s207
    %s224 = sphi 0, %s208
    %s228 = sphi 0, %s228
    %s230 = sphi 0, %s228
    %s231 = sphi 0, %s230
    %s245 = sphi 0, %s231
    %s249 = sphi 0, %s249
    %s251 = sphi 0, %s249
    %s252 = sphi 0, %s251
    %s266 = sphi 0, %s252
    %s276 = sphi 0, %s278
    %s279 = sphi 0, %s276
    %s280 = sphi 0, %s279
    %s296 = sphi 0, %s280
    %s302 = sphi 0, %s304
    %s305 = sphi 0, %s302
    %s306 = sphi 0, %s305
    %s322 = sphi 0, %s306
  $region4: #{basic_block_forward.4} parent=0 // loop_header_branch
    %19 = sbr.rel (%p17) target = $region8
  $region5: #{basic_block_forward.4} parent=0 // loop_body
    %s21 = ssub.s32 %s16, 1
    %s22 = ssub.s32 %s16, 2
    %s29 = sadd.s32 1, %s24
    %p30 = scmp.ge.s32.totalorder %s29, 3
    %s31 = scalar_select %p30, 0, %s29
    %s32 = sadd.s32 1, %s23
    %s33 = scalar_select %p30, %s32, %s23
    %p34 = scmp.ge.s32.totalorder %s33, 2
    %s35 = scalar_select %p34, 0, %s33
    %s36 = smul.u32 %s23, 3
    %s37 = sadd.s32 %s36, %s24
    %s38 = ssub.s32 %s37, 1
    %p39 = scmp.gt.s32.totalorder %s38, 0
    %s40 = scalar_select %p39, %s38, 0
    %s41 = smul.u32 %s35, 3
    %s42 = sadd.s32 %s41, %s31
    %s43 = ssub.s32 %s42, 1
    %p44 = scmp.gt.s32.totalorder %s43, 0
    %s45 = scalar_select %p44, %s43, 0
    %s46 = ssub.s32 %s40, %s45
    %p47 = scmp.eq.s32.totalorder %s46, 0
    %s49 = sadd.s32 %s48, 1
    %s50 = scalar_select %p47, %s48, %s49
    %p53 = pneg %p47
    %p54 = scmp.eq.s32.totalorder %s16, 5
    %p55 = por %p53, %p54
    %p56 = scmp.ne.s32.totalorder %s48, %s51
    %p57 = scmp.eq.s32.totalorder %s16, 0
    %p58 = por %p56, %p57
    %p59 = scmp.ne.s32.totalorder %s48, %s51
    %p60 = scmp.eq.s32.totalorder %s21, 5
    %p61 = por %p59, %p60
    %p62 = scmp.ne.s32.totalorder %s51, %s52
    %p63 = scmp.eq.s32.totalorder %s21, 0
    %p64 = por %p62, %p63
    %p65 = scmp.ne.s32.totalorder %s51, %s52
    %p66 = scmp.eq.s32.totalorder %s22, 5
    %p67 = por %p65, %p66
    %p69 = scmp.ne.s32.totalorder %s52, %s68
    %p70 = scmp.eq.s32.totalorder %s22, 0
    %p71 = por %p69, %p70
    %s72 = smul.u32 %s23, 3
    %s73 = sadd.s32 %s72, %s24
    %s74 = smul.u32 %s35, 3
    %s75 = sadd.s32 %s74, %s31
    %s76 = ssub.s32 %s73, %s75
    %p77 = scmp.eq.s32.totalorder %s76, 0
    %s79 = sadd.s32 %s78, 1
    %s80 = scalar_select %p77, %s78, %s79
    %p83 = pneg %p77
    %p84 = scmp.eq.s32.totalorder %s16, 5
    %p85 = por %p83, %p84
    %p86 = scmp.ne.s32.totalorder %s78, %s81
    %p87 = scmp.eq.s32.totalorder %s16, 0
    %p88 = por %p86, %p87
    %p89 = scmp.ne.s32.totalorder %s78, %s81
    %p90 = scmp.eq.s32.totalorder %s21, 5
    %p91 = por %p89, %p90
    %p92 = scmp.ne.s32.totalorder %s81, %s82
    %p93 = scmp.eq.s32.totalorder %s21, 0
    %p94 = por %p92, %p93
    %p95 = scmp.ne.s32.totalorder %s81, %s82
    %p96 = scmp.eq.s32.totalorder %s22, 5
    %p97 = por %p95, %p96
    %p99 = scmp.ne.s32.totalorder %s82, %s98
    %p100 = scmp.eq.s32.totalorder %s22, 0
    %p101 = por %p99, %p100
    %s102 = smul.u32 %s23, 3
    %s103 = sadd.s32 %s24, 1
    %s104 = sadd.s32 %s102, %s103
    %p105 = scmp.lt.s32.totalorder %s104, 5
    %s106 = scalar_select %p105, %s104, 5
    %s107 = smul.u32 %s35, 3
    %s108 = sadd.s32 %s31, 1
    %s109 = sadd.s32 %s107, %s108
    %p110 = scmp.lt.s32.totalorder %s109, 5
    %s111 = scalar_select %p110, %s109, 5
    %s112 = ssub.s32 %s106, %s111
    %p113 = scmp.eq.s32.totalorder %s112, 0
    %s115 = sadd.s32 %s114, 1
    %s116 = scalar_select %p113, %s114, %s115
    %p119 = pneg %p113
    %p120 = scmp.eq.s32.totalorder %s16, 5
    %p121 = por %p119, %p120
    %p122 = scmp.ne.s32.totalorder %s114, %s117
    %p123 = scmp.eq.s32.totalorder %s16, 0
    %p124 = por %p122, %p123
    %p125 = scmp.ne.s32.totalorder %s114, %s117
    %p126 = scmp.eq.s32.totalorder %s21, 5
    %p127 = por %p125, %p126
    %p128 = scmp.ne.s32.totalorder %s117, %s118
    %p129 = scmp.eq.s32.totalorder %s21, 0
    %p130 = por %p128, %p129
    %p131 = scmp.ne.s32.totalorder %s117, %s118
    %p132 = scmp.eq.s32.totalorder %s22, 5
    %p133 = por %p131, %p132
    %p135 = scmp.ne.s32.totalorder %s118, %s134
    %p136 = scmp.eq.s32.totalorder %s22, 0
    %p137 = por %p135, %p136
    %s138 = ssub.s32 %s24, 1
    %p139 = scmp.gt.s32.totalorder %s138, 0
    %s140 = scalar_select %p139, %s138, 0
    %s141 = ssub.s32 %s31, 1
    %p142 = scmp.gt.s32.totalorder %s141, 0
    %s143 = scalar_select %p142, %s141, 0
    %s144 = ssub.s32 %s140, %s143
    %p145 = scmp.eq.s32.totalorder %s144, 0
    %s147 = sadd.s32 %s146, 1
    %s148 = scalar_select %p145, %s146, %s147
    %p151 = pneg %p145
    %p152 = scmp.eq.s32.totalorder %s16, 5
    %p153 = por %p151, %p152
    %p154 = scmp.ne.s32.totalorder %s146, %s149
    %p155 = scmp.eq.s32.totalorder %s16, 0
    %p156 = por %p154, %p155
    %p157 = scmp.ne.s32.totalorder %s146, %s149
    %p158 = scmp.eq.s32.totalorder %s21, 5
    %p159 = por %p157, %p158
    %p160 = scmp.ne.s32.totalorder %s149, %s150
    %p161 = scmp.eq.s32.totalorder %s21, 0
    %p162 = por %p160, %p161
    %p163 = scmp.ne.s32.totalorder %s149, %s150
    %p164 = scmp.eq.s32.totalorder %s22, 5
    %p165 = por %p163, %p164
    %p167 = scmp.ne.s32.totalorder %s150, %s166
    %p168 = scmp.eq.s32.totalorder %s22, 0
    %p169 = por %p167, %p168
    %s170 = ssub.s32 %s24, %s31
    %p171 = scmp.eq.s32.totalorder %s170, 0
    %s173 = sadd.s32 %s172, 1
    %s174 = scalar_select %p171, %s172, %s173
    %p177 = pneg %p171
    %p178 = scmp.eq.s32.totalorder %s16, 5
    %p179 = por %p177, %p178
    %p180 = scmp.ne.s32.totalorder %s172, %s175
    %p181 = scmp.eq.s32.totalorder %s16, 0
    %p182 = por %p180, %p181
    %p183 = scmp.ne.s32.totalorder %s172, %s175
    %p184 = scmp.eq.s32.totalorder %s21, 5
    %p185 = por %p183, %p184
    %p186 = scmp.ne.s32.totalorder %s175, %s176
    %p187 = scmp.eq.s32.totalorder %s21, 0
    %p188 = por %p186, %p187
    %p189 = scmp.ne.s32.totalorder %s175, %s176
    %p190 = scmp.eq.s32.totalorder %s22, 5
    %p191 = por %p189, %p190
    %p193 = scmp.ne.s32.totalorder %s176, %s192
    %p194 = scmp.eq.s32.totalorder %s22, 0
    %p195 = por %p193, %p194
    %s196 = sadd.s32 %s24, 1
    %p197 = scmp.lt.s32.totalorder %s196, 2
    %s198 = scalar_select %p197, %s196, 2
    %s199 = sadd.s32 %s31, 1
    %p200 = scmp.lt.s32.totalorder %s199, 2
    %s201 = scalar_select %p200, %s199, 2
    %s202 = ssub.s32 %s198, %s201
    %p203 = scmp.eq.s32.totalorder %s202, 0
    %s205 = sadd.s32 %s204, 1
    %s206 = scalar_select %p203, %s204, %s205
    %p209 = pneg %p203
    %p210 = scmp.eq.s32.totalorder %s16, 5
    %p211 = por %p209, %p210
    %p212 = scmp.ne.s32.totalorder %s204, %s207
    %p213 = scmp.eq.s32.totalorder %s16, 0
    %p214 = por %p212, %p213
    %p215 = scmp.ne.s32.totalorder %s204, %s207
    %p216 = scmp.eq.s32.totalorder %s21, 5
    %p217 = por %p215, %p216
    %p218 = scmp.ne.s32.totalorder %s207, %s208
    %p219 = scmp.eq.s32.totalorder %s21, 0
    %p220 = por %p218, %p219
    %p221 = scmp.ne.s32.totalorder %s207, %s208
    %p222 = scmp.eq.s32.totalorder %s22, 5
    %p223 = por %p221, %p222
    %p225 = scmp.ne.s32.totalorder %s208, %s224
    %p226 = scmp.eq.s32.totalorder %s22, 0
    %p227 = por %p225, %p226
    %s229 = sadd.s32 %s228, 1
    %p232 = scmp.eq.s32.totalorder %s16, 5
    %p233 = scmp.ne.s32.totalorder %s228, %s230
    %p234 = scmp.eq.s32.totalorder %s16, 0
    %p235 = por %p233, %p234
    %p236 = scmp.ne.s32.totalorder %s228, %s230
    %p237 = scmp.eq.s32.totalorder %s21, 5
    %p238 = por %p236, %p237
    %p239 = scmp.ne.s32.totalorder %s230, %s231
    %p240 = scmp.eq.s32.totalorder %s21, 0
    %p241 = por %p239, %p240
    %p242 = scmp.ne.s32.totalorder %s230, %s231
    %p243 = scmp.eq.s32.totalorder %s22, 5
    %p244 = por %p242, %p243
    %p246 = scmp.ne.s32.totalorder %s231, %s245
    %p247 = scmp.eq.s32.totalorder %s22, 0
    %p248 = por %p246, %p247
    %s250 = sadd.s32 %s249, 1
    %p253 = scmp.eq.s32.totalorder %s16, 5
    %p254 = scmp.ne.s32.totalorder %s249, %s251
    %p255 = scmp.eq.s32.totalorder %s16, 0
    %p256 = por %p254, %p255
    %p257 = scmp.ne.s32.totalorder %s249, %s251
    %p258 = scmp.eq.s32.totalorder %s21, 5
    %p259 = por %p257, %p258
    %p260 = scmp.ne.s32.totalorder %s251, %s252
    %p261 = scmp.eq.s32.totalorder %s21, 0
    %p262 = por %p260, %p261
    %p263 = scmp.ne.s32.totalorder %s251, %s252
    %p264 = scmp.eq.s32.totalorder %s22, 5
    %p265 = por %p263, %p264
    %p267 = scmp.ne.s32.totalorder %s252, %s266
    %p268 = scmp.eq.s32.totalorder %s22, 0
    %p269 = por %p267, %p268
    %s270 = smul.u32 %s23, 3
    %s271 = sadd.s32 %s270, %s24
    %s272 = smul.u32 %s35, 3
    %s273 = sadd.s32 %s272, %s31
    %s274 = ssub.s32 %s271, %s273
    %p275 = scmp.eq.s32.totalorder %s274, 0
    %s277 = sadd.s32 %s276, 1
    %s278 = scalar_select %p275, %s276, %s277
    %p281 = pneg %p275
    %p282 = scmp.eq.s32.totalorder %s16, 5
    %p283 = por %p281, %p282
    %p284 = scmp.ne.s32.totalorder %s276, %s279
    %p285 = scmp.eq.s32.totalorder %s16, 0
    %p286 = por %p284, %p285
    %p287 = scmp.ne.s32.totalorder %s276, %s279
    %p288 = scmp.eq.s32.totalorder %s21, 5
    %p289 = por %p287, %p288
    %p290 = scmp.ne.s32.totalorder %s279, %s280
    %p291 = scmp.eq.s32.totalorder %s21, 0
    %p292 = por %p290, %p291
    %p293 = scmp.ne.s32.totalorder %s279, %s280
    %p294 = scmp.eq.s32.totalorder %s22, 5
    %p295 = por %p293, %p294
    %p297 = scmp.ne.s32.totalorder %s280, %s296
    %p298 = scmp.eq.s32.totalorder %s22, 0
    %p299 = por %p297, %p298
    %s300 = ssub.s32 %s23, %s35
    %p301 = scmp.eq.s32.totalorder %s300, 0
    %s303 = sadd.s32 %s302, 1
    %s304 = scalar_select %p301, %s302, %s303
    %p307 = pneg %p301
    %p308 = scmp.eq.s32.totalorder %s16, 5
    %p309 = por %p307, %p308
    %p310 = scmp.ne.s32.totalorder %s302, %s305
    %p311 = scmp.eq.s32.totalorder %s16, 0
    %p312 = por %p310, %p311
    %p313 = scmp.ne.s32.totalorder %s302, %s305
    %p314 = scmp.eq.s32.totalorder %s21, 5
    %p315 = por %p313, %p314
    %p316 = scmp.ne.s32.totalorder %s305, %s306
    %p317 = scmp.eq.s32.totalorder %s21, 0
    %p318 = por %p316, %p317
    %p319 = scmp.ne.s32.totalorder %s305, %s306
    %p320 = scmp.eq.s32.totalorder %s22, 5
    %p321 = por %p319, %p320
    %p323 = scmp.ne.s32.totalorder %s306, %s322
    %p324 = scmp.eq.s32.totalorder %s22, 0
    %p325 = por %p323, %p324
    %p326 = scmp.le.s32.totalorder 1, %s16
    %p327 = scmp.lt.s32.totalorder %s16, 7
    %p328 = pnand %p326, %p327
    %p329 = pneg %p328
    // Predicated region
    $region9: #{basic_block_forward.4} parent=5 // pred_check
      _
    $region10: #{basic_block_forward.4} parent=5 // pred_check_branch
      %331 = sbr.rel (%p328) target = $region12
    $region11: #{basic_block_forward.4} parent=5 // pred_region
      %s332 = ssub.s32 %s16, 1
      // Predicated region
      $region13: #{basic_block_forward.4} parent=11 // pred_check
        %p333 = pneg %p241
      $region14: #{basic_block_forward.4} parent=11 // pred_check_branch
        %335 = sbr.rel (%p333) target = $region16
      $region15: #{basic_block_forward.4} parent=11 // pred_region
        _
      $region16: #{basic_block_forward.4} parent=11 // pred_fallthru
        _
      // Predicated region
      $region17: #{basic_block_forward.4} parent=11 // pred_check
        %p336 = pneg %p262
      $region18: #{basic_block_forward.4} parent=11 // pred_check_branch
        %338 = sbr.rel (%p336) target = $region20
      $region19: #{basic_block_forward.4} parent=11 // pred_region
        _
      $region20: #{basic_block_forward.4} parent=11 // pred_fallthru
        _
    $region12: #{basic_block_forward.4} parent=5 // pred_fallthru
      _
    %p339 = scmp.lt.s32.totalorder %s16, 6
    // Predicated region
    $region21: #{basic_block_forward.4} parent=5 // pred_check
      %p340 = pneg %p339
    $region22: #{basic_block_forward.4} parent=5 // pred_check_branch
      %342 = sbr.rel (%p340) target = $region24
    $region23: #{basic_block_forward.4} parent=5 // pred_region
      // Predicated region
      $region25: #{basic_block_forward.4} parent=23 // pred_check
        %p343 = pneg %p58
      $region26: #{basic_block_forward.4} parent=23 // pred_check_branch
        %345 = sbr.rel (%p343) target = $region28
      $region27: #{basic_block_forward.4} parent=23 // pred_region
        %s346 = smul.u32 %s23, 3
        %s347 = sadd.s32 %s346, %s24
        %s348 = ssub.s32 %s347, 1
        %p349 = scmp.gt.s32.totalorder %s348, 0
        %s350 = scalar_select %p349, %s348, 0
        %p351 = scmp.lt.s32.totalorder %s350, 5
        %s352 = scalar_select %p351, %s350, 5
        %s353 = smul.addr %s352, 8
        %s354 = scalar_lea.vmem %s0, %s353
        %s355 = smul.u32 %s23, 3
        %s356 = sadd.s32 %s355, %s24
        %s357 = ssub.s32 %s356, 1
        %p358 = scmp.gt.s32.totalorder %s357, 0
        %s359 = scalar_select %p358, %s357, 0
      $region28: #{basic_block_forward.4} parent=23 // pred_fallthru
        _
      // Predicated region
      $region29: #{basic_block_forward.4} parent=23 // pred_check
        %p360 = pneg %p88
      $region30: #{basic_block_forward.4} parent=23 // pred_check_branch
        %362 = sbr.rel (%p360) target = $region32
      $region31: #{basic_block_forward.4} parent=23 // pred_region
        %s363 = smul.u32 %s23, 3
        %s364 = sadd.s32 %s363, %s24
        %p365 = scmp.lt.s32.totalorder %s364, 5
        %s366 = scalar_select %p365, %s364, 5
        %s367 = smul.addr %s366, 8
        %s368 = scalar_lea.vmem %s1, %s367
        %s369 = smul.u32 %s23, 3
        %s370 = sadd.s32 %s369, %s24
      $region32: #{basic_block_forward.4} parent=23 // pred_fallthru
        _
      // Predicated region
      $region33: #{basic_block_forward.4} parent=23 // pred_check
        %p371 = pneg %p124
      $region34: #{basic_block_forward.4} parent=23 // pred_check_branch
        %373 = sbr.rel (%p371) target = $region36
      $region35: #{basic_block_forward.4} parent=23 // pred_region
        %s374 = smul.u32 %s23, 3
        %s375 = sadd.s32 %s24, 1
        %s376 = sadd.s32 %s374, %s375
        %p377 = scmp.lt.s32.totalorder %s376, 5
        %s378 = scalar_select %p377, %s376, 5
        %p379 = scmp.lt.s32.totalorder %s378, 5
        %s380 = scalar_select %p379, %s378, 5
        %s381 = smul.addr %s380, 8
        %s382 = scalar_lea.vmem %s2, %s381
        %s383 = smul.u32 %s23, 3
        %s384 = sadd.s32 %s24, 1
        %s385 = sadd.s32 %s383, %s384
        %p386 = scmp.lt.s32.totalorder %s385, 5
        %s387 = scalar_select %p386, %s385, 5
      $region36: #{basic_block_forward.4} parent=23 // pred_fallthru
        _
      // Predicated region
      $region37: #{basic_block_forward.4} parent=23 // pred_check
        %p388 = pneg %p156
      $region38: #{basic_block_forward.4} parent=23 // pred_check_branch
        %390 = sbr.rel (%p388) target = $region40
      $region39: #{basic_block_forward.4} parent=23 // pred_region
        %s391 = ssub.s32 %s24, 1
        %p392 = scmp.gt.s32.totalorder %s391, 0
        %s393 = scalar_select %p392, %s391, 0
        %p394 = scmp.lt.s32.totalorder %s393, 2
        %s395 = scalar_select %p394, %s393, 2
        %s396 = scalar_lea.vmem %s3, %s395
        %s397 = ssub.s32 %s24, 1
        %p398 = scmp.gt.s32.totalorder %s397, 0
        %s399 = scalar_select %p398, %s397, 0
      $region40: #{basic_block_forward.4} parent=23 // pred_fallthru
        _
      // Predicated region
      $region41: #{basic_block_forward.4} parent=23 // pred_check
        %p400 = pneg %p182
      $region42: #{basic_block_forward.4} parent=23 // pred_check_branch
        %402 = sbr.rel (%p400) target = $region44
      $region43: #{basic_block_forward.4} parent=23 // pred_region
        %p403 = scmp.lt.s32.totalorder %s24, 2
        %s404 = scalar_select %p403, %s24, 2
        %s405 = scalar_lea.vmem %s4, %s404
      $region44: #{basic_block_forward.4} parent=23 // pred_fallthru
        _
      // Predicated region
      $region45: #{basic_block_forward.4} parent=23 // pred_check
        %p406 = pneg %p214
      $region46: #{basic_block_forward.4} parent=23 // pred_check_branch
        %408 = sbr.rel (%p406) target = $region48
      $region47: #{basic_block_forward.4} parent=23 // pred_region
        %s409 = sadd.s32 %s24, 1
        %p410 = scmp.lt.s32.totalorder %s409, 2
        %s411 = scalar_select %p410, %s409, 2
        %p412 = scmp.lt.s32.totalorder %s411, 2
        %s413 = scalar_select %p412, %s411, 2
        %s414 = scalar_lea.vmem %s5, %s413
        %s415 = sadd.s32 %s24, 1
        %p416 = scmp.lt.s32.totalorder %s415, 2
        %s417 = scalar_select %p416, %s415, 2
      $region48: #{basic_block_forward.4} parent=23 // pred_fallthru
        _
    $region24: #{basic_block_forward.4} parent=5 // pred_fallthru
      _
    %p418 = scmp.le.s32.totalorder 1, %s16
    %p419 = scmp.lt.s32.totalorder %s16, 7
    %p420 = pnand %p418, %p419
    %p421 = pneg %p420
    // Predicated region
    $region49: #{basic_block_forward.4} parent=5 // pred_check
      _
    $region50: #{basic_block_forward.4} parent=5 // pred_check_branch
      %423 = sbr.rel (%p420) target = $region52
    $region51: #{basic_block_forward.4} parent=5 // pred_region
      %s424 = ssub.s32 %s16, 1
      %s425 = smul.u32 %s25, 3
      %s426 = sadd.s32 %s425, %s26
      %s427 = ssub.s32 %s426, 1
      %p428 = scmp.gt.s32.totalorder %s427, 0
      %s429 = scalar_select %p428, %s427, 0
      %p430 = scmp.lt.s32.totalorder %s429, 5
      %s431 = scalar_select %p430, %s429, 5
      %s432 = smul.addr %s431, 8
      %s433 = scalar_lea.vmem %s0, %s432
      %p434 = pneg %p64
      %p435 = pneg %p61
      %s436 = smul.u32 %s25, 3
      %s437 = sadd.s32 %s436, %s26
      %p438 = scmp.lt.s32.totalorder %s437, 5
      %s439 = scalar_select %p438, %s437, 5
      %s440 = smul.addr %s439, 8
      %s441 = scalar_lea.vmem %s1, %s440
      %p442 = pneg %p94
      %p443 = pneg %p91
      %s444 = smul.u32 %s25, 3
      %s445 = sadd.s32 %s26, 1
      %s446 = sadd.s32 %s444, %s445
      %p447 = scmp.lt.s32.totalorder %s446, 5
      %s448 = scalar_select %p447, %s446, 5
      %p449 = scmp.lt.s32.totalorder %s448, 5
      %s450 = scalar_select %p449, %s448, 5
      %s451 = smul.addr %s450, 8
      %s452 = scalar_lea.vmem %s2, %s451
      %p453 = pneg %p130
      %p454 = pneg %p127
      %s455 = ssub.s32 %s26, 1
      %p456 = scmp.gt.s32.totalorder %s455, 0
      %s457 = scalar_select %p456, %s455, 0
      %p458 = scmp.lt.s32.totalorder %s457, 2
      %s459 = scalar_select %p458, %s457, 2
      %s460 = scalar_lea.vmem %s3, %s459
      %p461 = pneg %p162
      %p462 = pneg %p159
      %p463 = scmp.lt.s32.totalorder %s26, 2
      %s464 = scalar_select %p463, %s26, 2
      %s465 = scalar_lea.vmem %s4, %s464
      %p466 = pneg %p188
      %p467 = pneg %p185
      %s468 = sadd.s32 %s26, 1
      %p469 = scmp.lt.s32.totalorder %s468, 2
      %s470 = scalar_select %p469, %s468, 2
      %p471 = scmp.lt.s32.totalorder %s470, 2
      %s472 = scalar_select %p471, %s470, 2
      %s473 = scalar_lea.vmem %s5, %s472
      %p474 = pneg %p220
      %p475 = pneg %p217
      %p476 = pneg %p241
      %p477 = pneg %p238
      %p478 = pneg %p262
      %p479 = pneg %p259
      %p480 = pneg %p292
      %p481 = pneg %p289
      %s482 = smul.u32 %s25, 3
      %s483 = sadd.s32 %s482, %s26
      %p484 = scmp.lt.s32.totalorder %s483, 5
      %s485 = scalar_select %p484, %s483, 5
      %s486 = smul.addr %s485, 8
      %s487 = scalar_lea.vmem %s8, %s486
      %p488 = pneg %p318
      %p489 = pneg %p315
      %p490 = scmp.lt.s32.totalorder %s25, 1
      %s491 = scalar_select %p490, %s25, 1
      %s492 = smul.addr %s491, 8
      %s493 = scalar_lea.vmem %s9, %s492
      %s494 = smul.u32 %s25, 3
      %s495 = sadd.s32 %s494, %s26
      %s496 = ssub.s32 %s495, 1
      %p497 = scmp.gt.s32.totalorder %s496, 0
      %s498 = scalar_select %p497, %s496, 0
      %p499 = scmp.lt.s32.totalorder %s498, 5
      %s500 = scalar_select %p499, %s498, 5
      %s501 = smul.addr %s500, 8
      %s502 = scalar_lea.vmem %s0, %s501
      %s503 = smul.u32 %s25, 3
      %s504 = sadd.s32 %s503, %s26
      %s505 = ssub.s32 %s504, 1
      %p506 = scmp.gt.s32.totalorder %s505, 0
      %s507 = scalar_select %p506, %s505, 0
      %s508 = smul.u32 %s25, 3
      %s509 = sadd.s32 %s508, %s26
      %p510 = scmp.lt.s32.totalorder %s509, 5
      %s511 = scalar_select %p510, %s509, 5
      %s512 = smul.addr %s511, 8
      %s513 = scalar_lea.vmem %s1, %s512
      %s514 = smul.u32 %s25, 3
      %s515 = sadd.s32 %s514, %s26
      %s516 = smul.u32 %s25, 3
      %s517 = sadd.s32 %s26, 1
      %s518 = sadd.s32 %s516, %s517
      %p519 = scmp.lt.s32.totalorder %s518, 5
      %s520 = scalar_select %p519, %s518, 5
      %p521 = scmp.lt.s32.totalorder %s520, 5
      %s522 = scalar_select %p521, %s520, 5
      %s523 = smul.addr %s522, 8
      %s524 = scalar_lea.vmem %s2, %s523
      %s525 = smul.u32 %s25, 3
      %s526 = sadd.s32 %s26, 1
      %s527 = sadd.s32 %s525, %s526
      %p528 = scmp.lt.s32.totalorder %s527, 5
      %s529 = scalar_select %p528, %s527, 5
      %s530 = ssub.s32 %s26, 1
      %p531 = scmp.gt.s32.totalorder %s530, 0
      %s532 = scalar_select %p531, %s530, 0
      %p533 = scmp.lt.s32.totalorder %s532, 2
      %s534 = scalar_select %p533, %s532, 2
      %s535 = scalar_lea.vmem %s3, %s534
      %s536 = ssub.s32 %s26, 1
      %p537 = scmp.gt.s32.totalorder %s536, 0
      %s538 = scalar_select %p537, %s536, 0
      %p539 = scmp.lt.s32.totalorder %s26, 2
      %s540 = scalar_select %p539, %s26, 2
      %s541 = scalar_lea.vmem %s4, %s540
      %s542 = sadd.s32 %s26, 1
      %p543 = scmp.lt.s32.totalorder %s542, 2
      %s544 = scalar_select %p543, %s542, 2
      %p545 = scmp.lt.s32.totalorder %s544, 2
      %s546 = scalar_select %p545, %s544, 2
      %s547 = scalar_lea.vmem %s5, %s546
      %s548 = sadd.s32 %s26, 1
      %p549 = scmp.lt.s32.totalorder %s548, 2
      %s550 = scalar_select %p549, %s548, 2
      %s551 = smul.u32 %s25, 3
      %s552 = sadd.s32 %s551, %s26
      %p553 = scmp.lt.s32.totalorder %s552, 5
      %s554 = scalar_select %p553, %s552, 5
      %s555 = smul.addr %s554, 8
      %s556 = scalar_lea.vmem %s8, %s555
      %s557 = smul.u32 %s25, 3
      %s558 = sadd.s32 %s557, %s26
      %p559 = scmp.lt.s32.totalorder %s25, 1
      %s560 = scalar_select %p559, %s25, 1
      %s561 = smul.addr %s560, 8
      %s562 = scalar_lea.vmem %s9, %s561
      %v563 = vld [vmem:[%s502] sm:$0xff]
      %v564 = vld [vmem:[%s513] sm:$0xff]
      %v565 = vld [vmem:[%s524] sm:$0xff]
      %v566 = vld [vmem:[%s535] sm:$0x1]
      %v567 = vld [vmem:[%s541] sm:$0x1]
      %v568 = vld [vmem:[%s547] sm:$0x1]
      %v569 = vld [vmem:[%s6] sm:$0xff]
      %571 = vset.pattern.permute.xlu0 0
      %572 = vperm.xlu0 %571, %v569
      %v573 = vpop.permute.xlu0 %572
      %v575 = vmul.f32 %v573, %v563
      %v576 = vmul.f32 %v573, %v564
      %v577 = vmul.f32 %v573, %v565
      %578 = vset.pattern.permute.xlu0 1
      %579 = vperm.xlu0 %578, %v569
      %v580 = vpop.permute.xlu0 %579
      %v582 = vadd.f32 %v575, %v580
      %v583 = vadd.f32 %v576, %v580
      %v584 = vadd.f32 %v577, %v580
      %vm585 = vcmp.gt.f32.partialorder %v582, 0.0
      %vm586 = vcmp.gt.f32.partialorder %v583, 0.0
      %vm587 = vcmp.gt.f32.partialorder %v584, 0.0
      %v588 = vmul.f32 %v582, 0.2
      %v589 = vmul.f32 %v583, 0.2
      %v590 = vmul.f32 %v584, 0.2
      %v591 = vsel %vm585, %v582, %v588
      %v592 = vsel %vm586, %v583, %v589
      %v593 = vsel %vm587, %v584, %v590
      %v594 = vlaneseq
      %v595 = vshrl.u32 %v594, 7
      %v596 = vsub.s32 0, %v595
      %v597 = vrot.slane %v566, %v596
      %v598 = vlaneseq
      %v599 = vshrl.u32 %v598, 7
      %v600 = vsub.s32 0, %v599
      %v601 = vrot.slane %v567, %v600
      %v602 = vlaneseq
      %v603 = vshrl.u32 %v602, 7
      %v604 = vsub.s32 0, %v603
      %v605 = vrot.slane %v568, %v604
      %v606 = vmul.f32 %v591, %v597
      %v607 = vmul.f32 %v592, %v601
      %v608 = vmul.f32 %v593, %v605
      %611 = vrot.lane.b32.xlu0 %v606, 127
      %v612 = vpop.permute.xlu0 %611
      %613 = vrot.lane.b32.xlu0 %v607, 127
      %v614 = vpop.permute.xlu0 %613
      %vm615 = vcmask 1039360
      %v616 = vsel %vm615, %v612, %v614
      %617 = vrot.lane.b32.xlu0 %v606, 126
      %v618 = vpop.permute.xlu0 %617
      %619 = vrot.lane.b32.xlu0 %v607, 126
      %v620 = vpop.permute.xlu0 %619
      %vm621 = vcmask 1031168
      %v622 = vsel %vm621, %v618, %v620
      %623 = vrot.lane.b32.xlu0 %v606, 110
      %v624 = vpop.permute.xlu0 %623
      %625 = vrot.lane.b32.xlu0 %v607, 110
      %v626 = vpop.permute.xlu0 %625
      %vm627 = vcmask 900096
      %v628 = vsel %vm627, %v624, %v626
      %629 = vrot.lane.b32.xlu0 %v607, 109
      %v630 = vpop.permute.xlu0 %629
      %632 = vrot.lane.b32.xlu0 %v607, 108
      %v633 = vpop.permute.xlu0 %632
      %634 = vrot.lane.b32.xlu0 %v608, 108
      %v635 = vpop.permute.xlu0 %634
      %vm636 = vcmask 883712
      %v637 = vsel %vm636, %v633, %v635
      %638 = vrot.lane.b32.xlu0 %v607, 92
      %v639 = vpop.permute.xlu0 %638
      %640 = vrot.lane.b32.xlu0 %v608, 92
      %v641 = vpop.permute.xlu0 %640
      %vm642 = vcmask 752640
      %v643 = vsel %vm642, %v639, %v641
      %644 = vrot.lane.b32.xlu0 %v607, 91
      %v645 = vpop.permute.xlu0 %644
      %646 = vrot.lane.b32.xlu0 %v608, 91
      %v647 = vpop.permute.xlu0 %646
      %vm648 = vcmask 744448
      %v649 = vsel %vm648, %v645, %v647
      %650 = vrot.lane.b32.xlu0 %v607, 90
      %v651 = vpop.permute.xlu0 %650
      %652 = vrot.lane.b32.xlu0 %v608, 90
      %v653 = vpop.permute.xlu0 %652
      %vm654 = vcmask 736256
      %v655 = vsel %vm654, %v651, %v653
      %v656 = vld [vmem:[%s7] sm:$0xff]
      %657 = vrot.lane.b32.xlu0 %v606, 19
      %v658 = vpop.permute.xlu0 %657
      %659 = vrot.lane.b32.xlu0 %v607, 19
      %v660 = vpop.permute.xlu0 %659
      %661 = vrot.lane.b32.xlu0 %v616, 19
      %v662 = vpop.permute.xlu0 %661
      %663 = vrot.lane.b32.xlu0 %v614, 19
      %v664 = vpop.permute.xlu0 %663
      %665 = vrot.lane.b32.xlu0 %v622, 19
      %v666 = vpop.permute.xlu0 %665
      %667 = vrot.lane.b32.xlu0 %v620, 19
      %v668 = vpop.permute.xlu0 %667
      %669 = vrot.lane.b32.xlu0 %v628, 19
      %v670 = vpop.permute.xlu0 %669
      %671 = vrot.lane.b32.xlu0 %v626, 19
      %v672 = vpop.permute.xlu0 %671
      %673 = vrot.lane.b32.xlu0 %v630, 19
      %v674 = vpop.permute.xlu0 %673
      %675 = vrot.lane.b32.xlu0 %v633, 19
      %v676 = vpop.permute.xlu0 %675
      %677 = vrot.lane.b32.xlu0 %v637, 19
      %v678 = vpop.permute.xlu0 %677
      %679 = vrot.lane.b32.xlu0 %v639, 19
      %v680 = vpop.permute.xlu0 %679
      %681 = vrot.lane.b32.xlu0 %v643, 19
      %v682 = vpop.permute.xlu0 %681
      %683 = vrot.lane.b32.xlu0 %v645, 19
      %v684 = vpop.permute.xlu0 %683
      %685 = vrot.lane.b32.xlu0 %v649, 19
      %v686 = vpop.permute.xlu0 %685
      %687 = vrot.lane.b32.xlu0 %v651, 19
      %v688 = vpop.permute.xlu0 %687
      %689 = vrot.lane.b32.xlu0 %v655, 19
      %v690 = vpop.permute.xlu0 %689
      %vm691 = vcmask 154624
      %v692 = vsel %vm691, %v658, %v660
      %v693 = vsel %vm691, %v662, %v664
      %v694 = vsel %vm691, %v666, %v668
      %v695 = vsel %vm691, %v670, %v672
      %v696 = vsel %vm691, %v676, %v678
      %v697 = vsel %vm691, %v680, %v682
      %v698 = vsel %vm691, %v684, %v686
      %v699 = vsel %vm691, %v688, %v690
      %vm709 = vcmask 588800
      %v711 = vsel %vm709, %v656, 0
      %713 = vmatprep.subr.mxu0 0.0
      %714 = vmatpush1.msra.mxu0 0.0
      %715 = vmatprep.subr.mxu0 0.0
      %716 = vmatpush1.msra.mxu0 0.0
      %717 = vmatprep.subr.mxu0 0.0
      %718 = vmatpush1.msra.mxu0 0.0
      %719 = vmatprep.subr.mxu0 0.0
      %720 = vmatpush1.msra.mxu0 0.0
      %721 = vmatprep.subr.mxu0 0.0
      %722 = vmatpush1.msra.mxu0 0.0
      %723 = vmatprep.subr.mxu0 0.0
      %724 = vmatpush1.msra.mxu0 0.0
      %725 = vmatprep.subr.mxu0 0.0
      %726 = vmatpush1.msra.mxu0 0.0
      %727 = vmatprep.subr.mxu0 0.0
      %728 = vmatpush1.msra.mxu0 %v699
      %729 = vmatprep.subr.mxu0 0.0
      %730 = vmatpush1.msra.mxu0 %v698
      %731 = vmatprep.subr.mxu0 0.0
      %732 = vmatpush1.msra.mxu0 %v697
      %733 = vmatprep.subr.mxu0 0.0
      %734 = vmatpush1.msra.mxu0 %v696
      %735 = vmatprep.subr.mxu0 0.0
      %736 = vmatpush1.msra.mxu0 %v674
      %737 = vmatprep.subr.mxu0 0.0
      %738 = vmatpush1.msra.mxu0 %v695
      %739 = vmatprep.subr.mxu0 0.0
      %740 = vmatpush1.msra.mxu0 %v694
      %741 = vmatprep.subr.mxu0 0.0
      %742 = vmatpush1.msra.mxu0 %v693
      %743 = vmatprep.subr.mxu0 0.0
      %744 = vmatpush1.msra.mxu0 %v692
      %745 = vmatprep.subr.mxu0 0.0
      %746 = vmatpush2.msra.mxu0 0.0
      %747 = vmatprep.subr.mxu0 0.0
      %748 = vmatpush2.msra.mxu0 0.0
      %749 = vmatprep.subr.mxu0 0.0
      %750 = vmatpush2.msra.mxu0 0.0
      %751 = vmatprep.subr.mxu0 0.0
      %752 = vmatpush2.msra.mxu0 0.0
      %753 = vmatprep.subr.mxu0 0.0
      %754 = vmatpush2.msra.mxu0 0.0
      %755 = vmatprep.subr.mxu0 0.0
      %756 = vmatpush2.msra.mxu0 0.0
      %757 = vmatprep.subr.mxu0 0.0
      %758 = vmatpush2.msra.mxu0 0.0
      %759 = vmatprep.subr.mxu0 0.0
      %760 = vmatpush2.msra.mxu0 0.0
      %761 = vmatprep.subr.mxu0 0.0
      %762 = vmatpush2.msra.mxu0 0.0
      %763 = vmatprep.subr.mxu0 0.0
      %764 = vmatpush2.msra.mxu0 0.0
      %765 = vmatprep.subr.mxu0 0.0
      %766 = vmatpush2.msra.mxu0 0.0
      %767 = vmatprep.subr.mxu0 0.0
      %768 = vmatpush2.msra.mxu0 0.0
      %769 = vmatprep.subr.mxu0 0.0
      %770 = vmatpush2.msra.mxu0 0.0
      %771 = vmatprep.subr.mxu0 0.0
      %772 = vmatpush2.msra.mxu0 0.0
      %773 = vmatprep.subr.mxu0 0.0
      %774 = vmatpush2.msra.mxu0 0.0
      %775 = vmatprep.subr.mxu0 0.0
      %776 = vmatpush2.msra.mxu0 0.0
      %777 = vmatprep.mubr.f32.mxu0 0.0
      %778 = vmatmul.mubr.f32.gmra.mxu0 %v711
      %v779 = vpop.f32.mrf.mxu0
      %v780 = vadd.f32 0.0, %v779
      %v781 = vpop.f32.mrf.mxu0
      %782 = vdwg.mxu0
      %v784 = vlaneseq
      %v785 = vshrl.u32 %v784, 7
      %v786 = vsub.s32 0, %v785
      %v787 = vrot.slane %v567, %v786
      %v789 = vmul.f32 %v780, %v787
      %790 = vst [vmem:[%s556] sm:$0xff] %v789
      %791 = vadd.xlane.f32.xlu0 %v789
      %v792 = vpop.xlane.xlu0 %791
      %v793 = vmul.f32 %v789, %v789
      %794 = vadd.xlane.f32.xlu0 %v793
      %v795 = vpop.xlane.xlu0 %794
      %vm796 = vcmask 7168
      %v797 = vsel %vm796, %v792, %v795
      %p798 = scmp.eq.s32.totalorder %s26, 0
      // Predicated region
      $region53: #{basic_block_forward.4} parent=51 // pred_check
        %p799 = pneg %p798
      $region54: #{basic_block_forward.4} parent=51 // pred_check_branch
        %801 = sbr.rel (%p799) target = $region56
      $region55: #{basic_block_forward.4} parent=51 // pred_region
        %vm802 = vcmask 15360
        %803 = vst.msk [vmem:[%s562] sm:$0xff] %vm802, 0.0
      $region56: #{basic_block_forward.4} parent=51 // pred_fallthru
        _
      %v804 = vld [vmem:[%s562] sm:$0xff]
      %v805 = vadd.f32 %v804, %v797
      %vm806 = vcmask 15360
      %807 = vst.msk [vmem:[%s562] sm:$0xff] %vm806, %v805
      %s808 = smul.u32 %s25, 3
      %s809 = sadd.s32 %s808, %s26
      %p810 = scmp.lt.s32.totalorder %s809, 5
      %s811 = scalar_select %p810, %s809, 5
      %s812 = smul.addr %s811, 8
      %s813 = scalar_lea.vmem %s8, %s812
      %p814 = scmp.lt.s32.totalorder %s25, 1
      %s815 = scalar_select %p814, %s25, 1
      %s816 = smul.addr %s815, 8
      %s817 = scalar_lea.vmem %s9, %s816
      // Predicated region
      $region57: #{basic_block_forward.4} parent=51 // pred_check
        %p818 = pneg %p289
      $region58: #{basic_block_forward.4} parent=51 // pred_check_branch
        %820 = sbr.rel (%p818) target = $region60
      $region59: #{basic_block_forward.4} parent=51 // pred_region
        %s821 = smul.u32 %s25, 3
        %s822 = sadd.s32 %s821, %s26
      $region60: #{basic_block_forward.4} parent=51 // pred_fallthru
        _
      // Predicated region
      $region61: #{basic_block_forward.4} parent=51 // pred_check
        %p823 = pneg %p315
      $region62: #{basic_block_forward.4} parent=51 // pred_check_branch
        %825 = sbr.rel (%p823) target = $region64
      $region63: #{basic_block_forward.4} parent=51 // pred_region
        _
      $region64: #{basic_block_forward.4} parent=51 // pred_fallthru
        _
    $region52: #{basic_block_forward.4} parent=5 // pred_fallthru
      _
    %p826 = scmp.le.s32.totalorder 2, %s16
    // Predicated region
    $region65: #{basic_block_forward.4} parent=5 // pred_check
      %p827 = pneg %p826
    $region66: #{basic_block_forward.4} parent=5 // pred_check_branch
      %829 = sbr.rel (%p827) target = $region68
    $region67: #{basic_block_forward.4} parent=5 // pred_region
      %s830 = ssub.s32 %s16, 2
      // Predicated region
      $region69: #{basic_block_forward.4} parent=67 // pred_check
        %p831 = pneg %p295
      $region70: #{basic_block_forward.4} parent=67 // pred_check_branch
        %833 = sbr.rel (%p831) target = $region72
      $region71: #{basic_block_forward.4} parent=67 // pred_region
        %s834 = smul.u32 %s27, 3
        %s835 = sadd.s32 %s834, %s28
        %p836 = scmp.lt.s32.totalorder %s835, 5
        %s837 = scalar_select %p836, %s835, 5
        %s838 = smul.addr %s837, 8
        %s839 = scalar_lea.vmem %s8, %s838
      $region72: #{basic_block_forward.4} parent=67 // pred_fallthru
        _
      // Predicated region
      $region73: #{basic_block_forward.4} parent=67 // pred_check
        %p840 = pneg %p321
      $region74: #{basic_block_forward.4} parent=67 // pred_check_branch
        %842 = sbr.rel (%p840) target = $region76
      $region75: #{basic_block_forward.4} parent=67 // pred_region
        %p843 = scmp.lt.s32.totalorder %s27, 1
        %s844 = scalar_select %p843, %s27, 1
        %s845 = smul.addr %s844, 8
        %s846 = scalar_lea.vmem %s9, %s845
      $region76: #{basic_block_forward.4} parent=67 // pred_fallthru
        _
    $region68: #{basic_block_forward.4} parent=5 // pred_fallthru
      _
  $region6: #{basic_block_forward.4} parent=0 // loop_footer
    %s20 = sadd.s32 1, %s16
  $region7: #{basic_block_forward.4} parent=0 // loop_footer_branch
    %15 = sbr.rel target = $region3
  $region8: #{basic_block_forward.4} parent=0 // loop_exit
    _

// kernel: basic_block_forward.5
$region0: #{basic_block_forward.5}
  #allocation0 [shape = 'u32[]', space=smem, size = 0x4, offset = 0x4, fixed_abs, tag = 'smem constant byte address 0x4 - core index']
  #allocation1 [shape = 'u32[144,128]{1,0:T(1,128)}', space=vmem, size = 0x12000, scoped, tag = 'internal scratch']
  #allocation2 [shape = 'f32[8,1]{1,0:T(8,128)}', space=vmem, size = 0x1000, scoped, tag = 'scratch operand']
  #allocation3 [shape = 'f32[8,1]{1,0:T(8,128)}', space=vmem, size = 0x1000, scoped, tag = 'scratch operand']
  #allocation4 [shape = 'f32[8,1]{1,0:T(8,128)}', space=vmem, size = 0x1000, scoped, tag = 'scratch operand']
  %s0 = inlined_call_operand.vmem [shape: f32[8,768], index: 0, kind: input, shape index: {}]
  %s1 = inlined_call_operand.vmem [shape: f32[8,768], index: 1, kind: input, shape index: {}]
  %s2 = inlined_call_operand.vmem [shape: f32[1,384], index: 2, kind: input, shape index: {}]
  %s3 = inlined_call_operand.vmem [shape: f32[8,2], index: 3, kind: input, shape index: {}]
  %s4 = inlined_call_operand.vmem [shape: f32[8,2], index: 4, kind: input, shape index: {}]
  %s5 = inlined_call_operand.vmem [shape: f32[2,8,1], index: 5, kind: input, shape index: {}]
  %s6 = inlined_call_operand.vmem [shape: f32[8,8], index: 6, kind: input, shape index: {}]
  %s7 = inlined_call_operand.vmem [shape: f32[8,1], index: 7, kind: input, shape index: {}]
  %s8 = inlined_call_operand.vmem [shape: f32[8,8], index: 8, kind: input, shape index: {}]
  %s9 = inlined_call_operand.vmem [shape: f32[8,1], index: 9, kind: input, shape index: {}]
  %s10 = inlined_call_operand.vmem [shape: f32[8,8], index: 10, kind: input, shape index: {}]
  %s11 = inlined_call_operand.vmem [shape: f32[8,896], index: 11, kind: output, shape index: {}]
  %s12 = sld [smem:[#allocation0]]
  $region93: #{basic_block_forward.5} parent=0
    _
  %s14 = ssub.s32 1, %s12
  %s15 = scalar_select 0, %s14, %s12
  loop: start=0, step=1, limit=14
  $region2: #{basic_block_forward.5} parent=0 // loop_pre_header
    _
  $region3: #{basic_block_forward.5} parent=0 // loop_header
    %s17 = sphi 0, %s21
    %p18 = scmp.ge.s32.totalorder %s17, 14
    %s24 = sphi 0, %s43
    %s25 = sphi 0, %s39
    %s26 = sphi 0, %s35
    %s27 = sphi 0, %s24
    %s28 = sphi 0, %s25
    %s29 = sphi 0, %s26
    %s30 = sphi 0, %s27
    %s31 = sphi 0, %s28
    %s32 = sphi 0, %s29
    %s50 = sphi 0, %s52
    %s53 = sphi 0, %s50
    %s54 = sphi 0, %s53
    %s70 = sphi 0, %s54
    %s82 = sphi 0, %s84
    %s85 = sphi 0, %s82
    %s86 = sphi 0, %s85
    %s102 = sphi 0, %s86
    %s108 = sphi 0, %s110
    %s111 = sphi 0, %s108
    %s112 = sphi 0, %s111
    %s128 = sphi 0, %s112
    %s132 = sphi 0, %s132
    %s134 = sphi 0, %s132
    %s135 = sphi 0, %s134
    %s149 = sphi 0, %s135
    %s153 = sphi 0, %s153
    %s155 = sphi 0, %s153
    %s156 = sphi 0, %s155
    %s170 = sphi 0, %s156
    %s176 = sphi 0, %s178
    %s179 = sphi 0, %s176
    %s180 = sphi 0, %s179
    %s196 = sphi 0, %s180
    %s200 = sphi 0, %s200
    %s202 = sphi 0, %s200
    %s203 = sphi 0, %s202
    %s217 = sphi 0, %s203
    %s221 = sphi 0, %s221
    %s223 = sphi 0, %s221
    %s224 = sphi 0, %s223
    %s238 = sphi 0, %s224
    %s242 = sphi 0, %s242
    %s244 = sphi 0, %s242
    %s245 = sphi 0, %s244
    %s259 = sphi 0, %s245
    %s263 = sphi 0, %s263
    %s265 = sphi 0, %s263
    %s266 = sphi 0, %s265
    %s280 = sphi 0, %s266
    %s284 = sphi 0, %s284
    %s286 = sphi 0, %s284
    %s287 = sphi 0, %s286
    %s301 = sphi 0, %s287
    %s319 = sphi 0, %s321
    %s322 = sphi 0, %s319
    %s323 = sphi 0, %s322
    %s339 = sphi 0, %s323
  $region4: #{basic_block_forward.5} parent=0 // loop_header_branch
    %20 = sbr.rel (%p18) target = $region8
  $region5: #{basic_block_forward.5} parent=0 // loop_body
    %s22 = ssub.s32 %s17, 1
    %s23 = ssub.s32 %s17, 2
    %s33 = sadd.s32 1, %s26
    %p34 = scmp.ge.s32.totalorder %s33, 3
    %s35 = scalar_select %p34, 0, %s33
    %s36 = sadd.s32 1, %s25
    %s37 = scalar_select %p34, %s36, %s25
    %p38 = scmp.ge.s32.totalorder %s37, 2
    %s39 = scalar_select %p38, 0, %s37
    %s40 = sadd.s32 1, %s24
    %s41 = scalar_select %p38, %s40, %s24
    %p42 = scmp.ge.s32.totalorder %s41, 2
    %s43 = scalar_select %p42, 0, %s41
    %s44 = smul.u32 %s24, 3
    %s45 = sadd.s32 %s44, %s26
    %s46 = smul.u32 %s43, 3
    %s47 = sadd.s32 %s46, %s35
    %s48 = ssub.s32 %s45, %s47
    %p49 = scmp.eq.s32.totalorder %s48, 0
    %s51 = sadd.s32 %s50, 1
    %s52 = scalar_select %p49, %s50, %s51
    %p55 = pneg %p49
    %p56 = scmp.eq.s32.totalorder %s17, 11
    %p57 = por %p55, %p56
    %p58 = scmp.ne.s32.totalorder %s50, %s53
    %p59 = scmp.eq.s32.totalorder %s17, 0
    %p60 = por %p58, %p59
    %p61 = scmp.ne.s32.totalorder %s50, %s53
    %p62 = scmp.eq.s32.totalorder %s22, 11
    %p63 = por %p61, %p62
    %p64 = scmp.ne.s32.totalorder %s53, %s54
    %p65 = scmp.eq.s32.totalorder %s22, 0
    %p66 = por %p64, %p65
    %p67 = scmp.ne.s32.totalorder %s53, %s54
    %p68 = scmp.eq.s32.totalorder %s23, 11
    %p69 = por %p67, %p68
    %p71 = scmp.ne.s32.totalorder %s54, %s70
    %p72 = scmp.eq.s32.totalorder %s23, 0
    %p73 = por %p71, %p72
    %s74 = smul.u32 %s24, 3
    %s75 = smul.u32 %s25, %s26
    %s76 = sadd.s32 %s74, %s75
    %s77 = smul.u32 %s43, 3
    %s78 = smul.u32 %s39, %s35
    %s79 = sadd.s32 %s77, %s78
    %s80 = ssub.s32 %s76, %s79
    %p81 = scmp.eq.s32.totalorder %s80, 0
    %s83 = sadd.s32 %s82, 1
    %s84 = scalar_select %p81, %s82, %s83
    %p87 = pneg %p81
    %p88 = scmp.eq.s32.totalorder %s17, 11
    %p89 = por %p87, %p88
    %p90 = scmp.ne.s32.totalorder %s82, %s85
    %p91 = scmp.eq.s32.totalorder %s17, 0
    %p92 = por %p90, %p91
    %p93 = scmp.ne.s32.totalorder %s82, %s85
    %p94 = scmp.eq.s32.totalorder %s22, 11
    %p95 = por %p93, %p94
    %p96 = scmp.ne.s32.totalorder %s85, %s86
    %p97 = scmp.eq.s32.totalorder %s22, 0
    %p98 = por %p96, %p97
    %p99 = scmp.ne.s32.totalorder %s85, %s86
    %p100 = scmp.eq.s32.totalorder %s23, 11
    %p101 = por %p99, %p100
    %p103 = scmp.ne.s32.totalorder %s86, %s102
    %p104 = scmp.eq.s32.totalorder %s23, 0
    %p105 = por %p103, %p104
    %s106 = ssub.s32 %s26, %s35
    %p107 = scmp.eq.s32.totalorder %s106, 0
    %s109 = sadd.s32 %s108, 1
    %s110 = scalar_select %p107, %s108, %s109
    %p113 = pneg %p107
    %p114 = scmp.eq.s32.totalorder %s17, 11
    %p115 = por %p113, %p114
    %p116 = scmp.ne.s32.totalorder %s108, %s111
    %p117 = scmp.eq.s32.totalorder %s17, 0
    %p118 = por %p116, %p117
    %p119 = scmp.ne.s32.totalorder %s108, %s111
    %p120 = scmp.eq.s32.totalorder %s22, 11
    %p121 = por %p119, %p120
    %p122 = scmp.ne.s32.totalorder %s111, %s112
    %p123 = scmp.eq.s32.totalorder %s22, 0
    %p124 = por %p122, %p123
    %p125 = scmp.ne.s32.totalorder %s111, %s112
    %p126 = scmp.eq.s32.totalorder %s23, 11
    %p127 = por %p125, %p126
    %p129 = scmp.ne.s32.totalorder %s112, %s128
    %p130 = scmp.eq.s32.totalorder %s23, 0
    %p131 = por %p129, %p130
    %s133 = sadd.s32 %s132, 1
    %p136 = scmp.eq.s32.totalorder %s17, 11
    %p137 = scmp.ne.s32.totalorder %s132, %s134
    %p138 = scmp.eq.s32.totalorder %s17, 0
    %p139 = por %p137, %p138
    %p140 = scmp.ne.s32.totalorder %s132, %s134
    %p141 = scmp.eq.s32.totalorder %s22, 11
    %p142 = por %p140, %p141
    %p143 = scmp.ne.s32.totalorder %s134, %s135
    %p144 = scmp.eq.s32.totalorder %s22, 0
    %p145 = por %p143, %p144
    %p146 = scmp.ne.s32.totalorder %s134, %s135
    %p147 = scmp.eq.s32.totalorder %s23, 11
    %p148 = por %p146, %p147
    %p150 = scmp.ne.s32.totalorder %s135, %s149
    %p151 = scmp.eq.s32.totalorder %s23, 0
    %p152 = por %p150, %p151
    %s154 = sadd.s32 %s153, 1
    %p157 = scmp.eq.s32.totalorder %s17, 11
    %p158 = scmp.ne.s32.totalorder %s153, %s155
    %p159 = scmp.eq.s32.totalorder %s17, 0
    %p160 = por %p158, %p159
    %p161 = scmp.ne.s32.totalorder %s153, %s155
    %p162 = scmp.eq.s32.totalorder %s22, 11
    %p163 = por %p161, %p162
    %p164 = scmp.ne.s32.totalorder %s155, %s156
    %p165 = scmp.eq.s32.totalorder %s22, 0
    %p166 = por %p164, %p165
    %p167 = scmp.ne.s32.totalorder %s155, %s156
    %p168 = scmp.eq.s32.totalorder %s23, 11
    %p169 = por %p167, %p168
    %p171 = scmp.ne.s32.totalorder %s156, %s170
    %p172 = scmp.eq.s32.totalorder %s23, 0
    %p173 = por %p171, %p172
    %s174 = ssub.s32 %s24, %s43
    %p175 = scmp.eq.s32.totalorder %s174, 0
    %s177 = sadd.s32 %s176, 1
    %s178 = scalar_select %p175, %s176, %s177
    %p181 = pneg %p175
    %p182 = scmp.eq.s32.totalorder %s17, 11
    %p183 = por %p181, %p182
    %p184 = scmp.ne.s32.totalorder %s176, %s179
    %p185 = scmp.eq.s32.totalorder %s17, 0
    %p186 = por %p184, %p185
    %p187 = scmp.ne.s32.totalorder %s176, %s179
    %p188 = scmp.eq.s32.totalorder %s22, 11
    %p189 = por %p187, %p188
    %p190 = scmp.ne.s32.totalorder %s179, %s180
    %p191 = scmp.eq.s32.totalorder %s22, 0
    %p192 = por %p190, %p191
    %p193 = scmp.ne.s32.totalorder %s179, %s180
    %p194 = scmp.eq.s32.totalorder %s23, 11
    %p195 = por %p193, %p194
    %p197 = scmp.ne.s32.totalorder %s180, %s196
    %p198 = scmp.eq.s32.totalorder %s23, 0
    %p199 = por %p197, %p198
    %s201 = sadd.s32 %s200, 1
    %p204 = scmp.eq.s32.totalorder %s17, 11
    %p205 = scmp.ne.s32.totalorder %s200, %s202
    %p206 = scmp.eq.s32.totalorder %s17, 0
    %p207 = por %p205, %p206
    %p208 = scmp.ne.s32.totalorder %s200, %s202
    %p209 = scmp.eq.s32.totalorder %s22, 11
    %p210 = por %p208, %p209
    %p211 = scmp.ne.s32.totalorder %s202, %s203
    %p212 = scmp.eq.s32.totalorder %s22, 0
    %p213 = por %p211, %p212
    %p214 = scmp.ne.s32.totalorder %s202, %s203
    %p215 = scmp.eq.s32.totalorder %s23, 11
    %p216 = por %p214, %p215
    %p218 = scmp.ne.s32.totalorder %s203, %s217
    %p219 = scmp.eq.s32.totalorder %s23, 0
    %p220 = por %p218, %p219
    %s222 = sadd.s32 %s221, 1
    %p225 = scmp.eq.s32.totalorder %s17, 11
    %p226 = scmp.ne.s32.totalorder %s221, %s223
    %p227 = scmp.eq.s32.totalorder %s17, 0
    %p228 = por %p226, %p227
    %p229 = scmp.ne.s32.totalorder %s221, %s223
    %p230 = scmp.eq.s32.totalorder %s22, 11
    %p231 = por %p229, %p230
    %p232 = scmp.ne.s32.totalorder %s223, %s224
    %p233 = scmp.eq.s32.totalorder %s22, 0
    %p234 = por %p232, %p233
    %p235 = scmp.ne.s32.totalorder %s223, %s224
    %p236 = scmp.eq.s32.totalorder %s23, 11
    %p237 = por %p235, %p236
    %p239 = scmp.ne.s32.totalorder %s224, %s238
    %p240 = scmp.eq.s32.totalorder %s23, 0
    %p241 = por %p239, %p240
    %s243 = sadd.s32 %s242, 1
    %p246 = scmp.eq.s32.totalorder %s17, 11
    %p247 = scmp.ne.s32.totalorder %s242, %s244
    %p248 = scmp.eq.s32.totalorder %s17, 0
    %p249 = por %p247, %p248
    %p250 = scmp.ne.s32.totalorder %s242, %s244
    %p251 = scmp.eq.s32.totalorder %s22, 11
    %p252 = por %p250, %p251
    %p253 = scmp.ne.s32.totalorder %s244, %s245
    %p254 = scmp.eq.s32.totalorder %s22, 0
    %p255 = por %p253, %p254
    %p256 = scmp.ne.s32.totalorder %s244, %s245
    %p257 = scmp.eq.s32.totalorder %s23, 11
    %p258 = por %p256, %p257
    %p260 = scmp.ne.s32.totalorder %s245, %s259
    %p261 = scmp.eq.s32.totalorder %s23, 0
    %p262 = por %p260, %p261
    %s264 = sadd.s32 %s263, 1
    %p267 = scmp.eq.s32.totalorder %s17, 11
    %p268 = scmp.ne.s32.totalorder %s263, %s265
    %p269 = scmp.eq.s32.totalorder %s17, 0
    %p270 = por %p268, %p269
    %p271 = scmp.ne.s32.totalorder %s263, %s265
    %p272 = scmp.eq.s32.totalorder %s22, 11
    %p273 = por %p271, %p272
    %p274 = scmp.ne.s32.totalorder %s265, %s266
    %p275 = scmp.eq.s32.totalorder %s22, 0
    %p276 = por %p274, %p275
    %p277 = scmp.ne.s32.totalorder %s265, %s266
    %p278 = scmp.eq.s32.totalorder %s23, 11
    %p279 = por %p277, %p278
    %p281 = scmp.ne.s32.totalorder %s266, %s280
    %p282 = scmp.eq.s32.totalorder %s23, 0
    %p283 = por %p281, %p282
    %s285 = sadd.s32 %s284, 1
    %p288 = scmp.eq.s32.totalorder %s17, 11
    %p289 = scmp.ne.s32.totalorder %s284, %s286
    %p290 = scmp.eq.s32.totalorder %s17, 0
    %p291 = por %p289, %p290
    %p292 = scmp.ne.s32.totalorder %s284, %s286
    %p293 = scmp.eq.s32.totalorder %s22, 11
    %p294 = por %p292, %p293
    %p295 = scmp.ne.s32.totalorder %s286, %s287
    %p296 = scmp.eq.s32.totalorder %s22, 0
    %p297 = por %p295, %p296
    %p298 = scmp.ne.s32.totalorder %s286, %s287
    %p299 = scmp.eq.s32.totalorder %s23, 11
    %p300 = por %p298, %p299
    %p302 = scmp.ne.s32.totalorder %s287, %s301
    %p303 = scmp.eq.s32.totalorder %s23, 0
    %p304 = por %p302, %p303
    %s305 = smul.u32 %s24, 3
    %s306 = sadd.s32 %s305, %s26
    %s307 = smul.u32 %s25, %s306
    %s308 = ssub.s32 1, %s25
    %s309 = smul.u32 %s308, 6
    %s310 = sadd.s32 %s307, %s309
    %s311 = smul.u32 %s43, 3
    %s312 = sadd.s32 %s311, %s35
    %s313 = smul.u32 %s39, %s312
    %s314 = ssub.s32 1, %s39
    %s315 = smul.u32 %s314, 6
    %s316 = sadd.s32 %s313, %s315
    %s317 = ssub.s32 %s310, %s316
    %p318 = scmp.eq.s32.totalorder %s317, 0
    %s320 = sadd.s32 %s319, 1
    %s321 = scalar_select %p318, %s319, %s320
    %p324 = pneg %p318
    %p325 = scmp.eq.s32.totalorder %s17, 11
    %p326 = por %p324, %p325
    %p327 = scmp.ne.s32.totalorder %s319, %s322
    %p328 = scmp.eq.s32.totalorder %s17, 0
    %p329 = por %p327, %p328
    %p330 = scmp.ne.s32.totalorder %s319, %s322
    %p331 = scmp.eq.s32.totalorder %s22, 11
    %p332 = por %p330, %p331
    %p333 = scmp.ne.s32.totalorder %s322, %s323
    %p334 = scmp.eq.s32.totalorder %s22, 0
    %p335 = por %p333, %p334
    %p336 = scmp.ne.s32.totalorder %s322, %s323
    %p337 = scmp.eq.s32.totalorder %s23, 11
    %p338 = por %p336, %p337
    %p340 = scmp.ne.s32.totalorder %s323, %s339
    %p341 = scmp.eq.s32.totalorder %s23, 0
    %p342 = por %p340, %p341
    %p343 = scmp.le.s32.totalorder 1, %s17
    %p344 = scmp.lt.s32.totalorder %s17, 13
    %p345 = pnand %p343, %p344
    %p346 = pneg %p345
    // Predicated region
    $region9: #{basic_block_forward.5} parent=5 // pred_check
      _
    $region10: #{basic_block_forward.5} parent=5 // pred_check_branch
      %348 = sbr.rel (%p345) target = $region12
    $region11: #{basic_block_forward.5} parent=5 // pred_region
      %s349 = ssub.s32 %s17, 1
      // Predicated region
      $region13: #{basic_block_forward.5} parent=11 // pred_check
        %p350 = pneg %p145
      $region14: #{basic_block_forward.5} parent=11 // pred_check_branch
        %352 = sbr.rel (%p350) target = $region16
      $region15: #{basic_block_forward.5} parent=11 // pred_region
        _
      $region16: #{basic_block_forward.5} parent=11 // pred_fallthru
        _
      // Predicated region
      $region17: #{basic_block_forward.5} parent=11 // pred_check
        %p353 = pneg %p166
      $region18: #{basic_block_forward.5} parent=11 // pred_check_branch
        %355 = sbr.rel (%p353) target = $region20
      $region19: #{basic_block_forward.5} parent=11 // pred_region
        _
      $region20: #{basic_block_forward.5} parent=11 // pred_fallthru
        _
      // Predicated region
      $region21: #{basic_block_forward.5} parent=11 // pred_check
        %p356 = pneg %p213
      $region22: #{basic_block_forward.5} parent=11 // pred_check_branch
        %358 = sbr.rel (%p356) target = $region24
      $region23: #{basic_block_forward.5} parent=11 // pred_region
        _
      $region24: #{basic_block_forward.5} parent=11 // pred_fallthru
        _
      // Predicated region
      $region25: #{basic_block_forward.5} parent=11 // pred_check
        %p359 = pneg %p234
      $region26: #{basic_block_forward.5} parent=11 // pred_check_branch
        %361 = sbr.rel (%p359) target = $region28
      $region27: #{basic_block_forward.5} parent=11 // pred_region
        _
      $region28: #{basic_block_forward.5} parent=11 // pred_fallthru
        _
      // Predicated region
      $region29: #{basic_block_forward.5} parent=11 // pred_check
        %p362 = pneg %p255
      $region30: #{basic_block_forward.5} parent=11 // pred_check_branch
        %364 = sbr.rel (%p362) target = $region32
      $region31: #{basic_block_forward.5} parent=11 // pred_region
        _
      $region32: #{basic_block_forward.5} parent=11 // pred_fallthru
        _
      // Predicated region
      $region33: #{basic_block_forward.5} parent=11 // pred_check
        %p365 = pneg %p276
      $region34: #{basic_block_forward.5} parent=11 // pred_check_branch
        %367 = sbr.rel (%p365) target = $region36
      $region35: #{basic_block_forward.5} parent=11 // pred_region
        _
      $region36: #{basic_block_forward.5} parent=11 // pred_fallthru
        _
      // Predicated region
      $region37: #{basic_block_forward.5} parent=11 // pred_check
        %p368 = pneg %p297
      $region38: #{basic_block_forward.5} parent=11 // pred_check_branch
        %370 = sbr.rel (%p368) target = $region40
      $region39: #{basic_block_forward.5} parent=11 // pred_region
        _
      $region40: #{basic_block_forward.5} parent=11 // pred_fallthru
        _
    $region12: #{basic_block_forward.5} parent=5 // pred_fallthru
      _
    %p371 = scmp.lt.s32.totalorder %s17, 12
    // Predicated region
    $region41: #{basic_block_forward.5} parent=5 // pred_check
      %p372 = pneg %p371
    $region42: #{basic_block_forward.5} parent=5 // pred_check_branch
      %374 = sbr.rel (%p372) target = $region44
    $region43: #{basic_block_forward.5} parent=5 // pred_region
      // Predicated region
      $region45: #{basic_block_forward.5} parent=43 // pred_check
        %p375 = pneg %p60
      $region46: #{basic_block_forward.5} parent=43 // pred_check_branch
        %377 = sbr.rel (%p375) target = $region48
      $region47: #{basic_block_forward.5} parent=43 // pred_region
        %s378 = smul.u32 %s24, 3
        %s379 = sadd.s32 %s378, %s26
        %p380 = scmp.lt.s32.totalorder %s379, 5
        %s381 = scalar_select %p380, %s379, 5
        %s382 = smul.addr %s381, 8
        %s383 = scalar_lea.vmem %s0, %s382
        %s384 = smul.u32 %s24, 3
        %s385 = sadd.s32 %s384, %s26
      $region48: #{basic_block_forward.5} parent=43 // pred_fallthru
        _
      // Predicated region
      $region49: #{basic_block_forward.5} parent=43 // pred_check
        %p386 = pneg %p92
      $region50: #{basic_block_forward.5} parent=43 // pred_check_branch
        %388 = sbr.rel (%p386) target = $region52
      $region51: #{basic_block_forward.5} parent=43 // pred_region
        %s389 = smul.u32 %s24, 3
        %s390 = smul.u32 %s25, %s26
        %s391 = sadd.s32 %s389, %s390
        %p392 = scmp.lt.s32.totalorder %s391, 5
        %s393 = scalar_select %p392, %s391, 5
        %s394 = smul.addr %s393, 8
        %s395 = scalar_lea.vmem %s1, %s394
        %s396 = smul.u32 %s24, 3
        %s397 = smul.u32 %s25, %s26
        %s398 = sadd.s32 %s396, %s397
      $region52: #{basic_block_forward.5} parent=43 // pred_fallthru
        _
      // Predicated region
      $region53: #{basic_block_forward.5} parent=43 // pred_check
        %p399 = pneg %p118
      $region54: #{basic_block_forward.5} parent=43 // pred_check_branch
        %401 = sbr.rel (%p399) target = $region56
      $region55: #{basic_block_forward.5} parent=43 // pred_region
        %p402 = scmp.lt.s32.totalorder %s26, 2
        %s403 = scalar_select %p402, %s26, 2
        %s404 = scalar_lea.vmem %s2, %s403
      $region56: #{basic_block_forward.5} parent=43 // pred_fallthru
        _
      // Predicated region
      $region57: #{basic_block_forward.5} parent=43 // pred_check
        %p405 = pneg %p186
      $region58: #{basic_block_forward.5} parent=43 // pred_check_branch
        %407 = sbr.rel (%p405) target = $region60
      $region59: #{basic_block_forward.5} parent=43 // pred_region
        %p408 = scmp.lt.s32.totalorder %s24, 1
        %s409 = scalar_select %p408, %s24, 1
        %s410 = smul.addr %s409, 8
        %s411 = scalar_lea.vmem %s5, %s410
      $region60: #{basic_block_forward.5} parent=43 // pred_fallthru
        _
    $region44: #{basic_block_forward.5} parent=5 // pred_fallthru
      _
    %p412 = scmp.le.s32.totalorder 1, %s17
    %p413 = scmp.lt.s32.totalorder %s17, 13
    %p414 = pnand %p412, %p413
    %p415 = pneg %p414
    // Predicated region
    $region61: #{basic_block_forward.5} parent=5 // pred_check
      _
    $region62: #{basic_block_forward.5} parent=5 // pred_check_branch
      %417 = sbr.rel (%p414) target = $region64
    $region63: #{basic_block_forward.5} parent=5 // pred_region
      %s418 = ssub.s32 %s17, 1
      %s419 = smul.u32 %s27, 3
      %s420 = sadd.s32 %s419, %s29
      %p421 = scmp.lt.s32.totalorder %s420, 5
      %s422 = scalar_select %p421, %s420, 5
      %s423 = smul.addr %s422, 8
      %s424 = scalar_lea.vmem %s0, %s423
      %p425 = pneg %p66
      %p426 = pneg %p63
      %s427 = smul.u32 %s27, 3
      %s428 = smul.u32 %s28, %s29
      %s429 = sadd.s32 %s427, %s428
      %p430 = scmp.lt.s32.totalorder %s429, 5
      %s431 = scalar_select %p430, %s429, 5
      %s432 = smul.addr %s431, 8
      %s433 = scalar_lea.vmem %s1, %s432
      %p434 = pneg %p98
      %p435 = pneg %p95
      %p436 = scmp.lt.s32.totalorder %s29, 2
      %s437 = scalar_select %p436, %s29, 2
      %s438 = scalar_lea.vmem %s2, %s437
      %p439 = pneg %p124
      %p440 = pneg %p121
      %p441 = pneg %p145
      %p442 = pneg %p142
      %p443 = pneg %p166
      %p444 = pneg %p163
      %p445 = scmp.lt.s32.totalorder %s27, 1
      %s446 = scalar_select %p445, %s27, 1
      %s447 = smul.addr %s446, 8
      %s448 = scalar_lea.vmem %s5, %s447
      %p449 = pneg %p192
      %p450 = pneg %p189
      %p451 = pneg %p213
      %p452 = pneg %p210
      %p453 = pneg %p234
      %p454 = pneg %p231
      %p455 = pneg %p255
      %p456 = pneg %p252
      %p457 = pneg %p276
      %p458 = pneg %p273
      %p459 = pneg %p297
      %p460 = pneg %p294
      %p461 = pneg %p335
      %p462 = pneg %p332
      %s463 = smul.u32 %s27, 3
      %s464 = sadd.s32 %s463, %s29
      %s465 = smul.u32 %s28, %s464
      %s466 = ssub.s32 1, %s28
      %s467 = smul.u32 %s466, 6
      %s468 = sadd.s32 %s465, %s467
      %p469 = scmp.lt.s32.totalorder %s468, 6
      %s470 = scalar_select %p469, %s468, 6
      %s471 = smul.addr %s470, 8
      %s472 = scalar_lea.vmem %s11, %s471
      %s473 = smul.u32 %s27, 3
      %s474 = sadd.s32 %s473, %s29
      %p475 = scmp.lt.s32.totalorder %s474, 5
      %s476 = scalar_select %p475, %s474, 5
      %s477 = smul.addr %s476, 8
      %s478 = scalar_lea.vmem %s0, %s477
      %s479 = smul.u32 %s27, 3
      %s480 = sadd.s32 %s479, %s29
      %s481 = smul.u32 %s27, 3
      %s482 = smul.u32 %s28, %s29
      %s483 = sadd.s32 %s481, %s482
      %p484 = scmp.lt.s32.totalorder %s483, 5
      %s485 = scalar_select %p484, %s483, 5
      %s486 = smul.addr %s485, 8
      %s487 = scalar_lea.vmem %s1, %s486
      %s488 = smul.u32 %s27, 3
      %s489 = smul.u32 %s28, %s29
      %s490 = sadd.s32 %s488, %s489
      %p491 = scmp.lt.s32.totalorder %s29, 2
      %s492 = scalar_select %p491, %s29, 2
      %s493 = scalar_lea.vmem %s2, %s492
      %p494 = scmp.lt.s32.totalorder %s27, 1
      %s495 = scalar_select %p494, %s27, 1
      %s496 = smul.addr %s495, 8
      %s497 = scalar_lea.vmem %s5, %s496
      %s498 = smul.u32 %s27, 3
      %s499 = sadd.s32 %s498, %s29
      %s500 = smul.u32 %s28, %s499
      %s501 = ssub.s32 1, %s28
      %s502 = smul.u32 %s501, 6
      %s503 = sadd.s32 %s500, %s502
      %p504 = scmp.lt.s32.totalorder %s503, 6
      %s505 = scalar_select %p504, %s503, 6
      %s506 = smul.addr %s505, 8
      %s507 = scalar_lea.vmem %s11, %s506
      %s508 = smul.u32 %s27, 3
      %s509 = sadd.s32 %s508, %s29
      %s510 = smul.u32 %s28, %s509
      %s511 = ssub.s32 1, %s28
      %s512 = smul.u32 %s511, 6
      %s513 = sadd.s32 %s510, %s512
      %v514 = vld [vmem:[%s3] sm:$0xff]
      %p515 = scmp.eq.s32.totalorder %s28, 0
      // Predicated region
      $region65: #{basic_block_forward.5} parent=63 // pred_check
        %p516 = pneg %p515
      $region66: #{basic_block_forward.5} parent=63 // pred_check_branch
        %518 = sbr.rel (%p516) target = $region68
      $region67: #{basic_block_forward.5} parent=63 // pred_region
        %v519 = vld [vmem:[%s478] sm:$0xff]
        %521 = vset.pattern.permute.xlu0 0
        %522 = vperm.xlu0 %521, %v514
        %v523 = vpop.permute.xlu0 %522
        %v525 = vmul.f32 %v523, %v519
        %526 = vset.pattern.permute.xlu0 1
        %527 = vperm.xlu0 %526, %v514
        %v528 = vpop.permute.xlu0 %527
        %v530 = vadd.f32 %v525, %v528
        %v531 = vld [vmem:[%s493] sm:$0x1]
        %v533 = vlaneseq
        %v534 = vshrl.u32 %v533, 7
        %v535 = vsub.s32 0, %v534
        %v536 = vrot.slane %v531, %v535
        %v538 = vmul.f32 %v530, %v536
        %p539 = scmp.eq.s32.totalorder %s29, 0
        // Predicated region
        $region69: #{basic_block_forward.5} parent=67 // pred_check
          %p540 = pneg %p539
        $region70: #{basic_block_forward.5} parent=67 // pred_check_branch
          %542 = sbr.rel (%p540) target = $region72
        $region71: #{basic_block_forward.5} parent=67 // pred_region
          %vm543 = vcmask 7168
          %544 = vst.msk [vmem:[#allocation2] sm:$0xff] %vm543, 0.0
        $region72: #{basic_block_forward.5} parent=67 // pred_fallthru
          _
        %v545 = vld [vmem:[#allocation2] sm:$0xff]
        %v546 = vand.u32 2147483647, %v538
        %547 = vadd.xlane.f32.xlu0 %v546
        %v548 = vpop.xlane.xlu0 %547
        %v549 = vadd.f32 %v545, %v548
        %vm550 = vcmask 7168
        %551 = vst.msk [vmem:[#allocation2] sm:$0xff] %vm550, %v549
      $region68: #{basic_block_forward.5} parent=63 // pred_fallthru
        _
      %p552 = scmp.eq.s32.totalorder %s28, 1
      // Predicated region
      $region73: #{basic_block_forward.5} parent=63 // pred_check
        %p553 = pneg %p552
      $region74: #{basic_block_forward.5} parent=63 // pred_check_branch
        %555 = sbr.rel (%p553) target = $region76
      $region75: #{basic_block_forward.5} parent=63 // pred_region
        %p556 = scmp.eq.s32.totalorder %s29, 0
        // Predicated region
        $region77: #{basic_block_forward.5} parent=75 // pred_check
          %p557 = pneg %p556
        $region78: #{basic_block_forward.5} parent=75 // pred_check_branch
          %559 = sbr.rel (%p557) target = $region80
        $region79: #{basic_block_forward.5} parent=75 // pred_region
          %v560 = vld [vmem:[#allocation2] sm:$0xff]
          %v561 = vmul.f32 %v560, 0.00390625
          %v562 = vld [vmem:[%s6] sm:$0xff]
          %v563 = vld [vmem:[%s7] sm:$0xff]
          %vm564 = vcmask 64512
          %v566 = vsel %vm564, %v562, 0
          %568 = vmatprep.subr.mxu0 0.0
          %569 = vmatpush1.msra.mxu0 0.0
          %570 = vmatprep.subr.mxu0 0.0
          %571 = vmatpush1.msra.mxu0 0.0
          %572 = vmatprep.subr.mxu0 0.0
          %573 = vmatpush1.msra.mxu0 0.0
          %574 = vmatprep.subr.mxu0 0.0
          %575 = vmatpush1.msra.mxu0 0.0
          %576 = vmatprep.subr.mxu0 0.0
          %577 = vmatpush1.msra.mxu0 0.0
          %578 = vmatprep.subr.mxu0 0.0
          %579 = vmatpush1.msra.mxu0 0.0
          %580 = vmatprep.subr.mxu0 0.0
          %581 = vmatpush1.msra.mxu0 0.0
          %582 = vmatprep.subr.mxu0 0.0
          %583 = vmatpush1.msra.mxu0 0.0
          %584 = vmatprep.subr.mxu0 0.0
          %585 = vmatpush1.msra.mxu0 0.0
          %586 = vmatprep.subr.mxu0 0.0
          %587 = vmatpush1.msra.mxu0 0.0
          %588 = vmatprep.subr.mxu0 0.0
          %589 = vmatpush1.msra.mxu0 0.0
          %590 = vmatprep.subr.mxu0 0.0
          %591 = vmatpush1.msra.mxu0 0.0
          %592 = vmatprep.subr.mxu0 0.0
          %593 = vmatpush1.msra.mxu0 0.0
          %594 = vmatprep.subr.mxu0 0.0
          %595 = vmatpush1.msra.mxu0 0.0
          %596 = vmatprep.subr.mxu0 0.0
          %597 = vmatpush1.msra.mxu0 0.0
          %598 = vmatprep.subr.mxu0 0.0
          %599 = vmatpush1.msra.mxu0 %v561
          %600 = vmatprep.subr.mxu0 0.0
          %601 = vmatpush2.msra.mxu0 0.0
          %602 = vmatprep.subr.mxu0 0.0
          %603 = vmatpush2.msra.mxu0 0.0
          %604 = vmatprep.subr.mxu0 0.0
          %605 = vmatpush2.msra.mxu0 0.0
          %606 = vmatprep.subr.mxu0 0.0
          %607 = vmatpush2.msra.mxu0 0.0
          %608 = vmatprep.subr.mxu0 0.0
          %609 = vmatpush2.msra.mxu0 0.0
          %610 = vmatprep.subr.mxu0 0.0
          %611 = vmatpush2.msra.mxu0 0.0
          %612 = vmatprep.subr.mxu0 0.0
          %613 = vmatpush2.msra.mxu0 0.0
          %614 = vmatprep.subr.mxu0 0.0
          %615 = vmatpush2.msra.mxu0 0.0
          %616 = vmatprep.subr.mxu0 0.0
          %617 = vmatpush2.msra.mxu0 0.0
          %618 = vmatprep.subr.mxu0 0.0
          %619 = vmatpush2.msra.mxu0 0.0
          %620 = vmatprep.subr.mxu0 0.0
          %621 = vmatpush2.msra.mxu0 0.0
          %622 = vmatprep.subr.mxu0 0.0
          %623 = vmatpush2.msra.mxu0 0.0
          %624 = vmatprep.subr.mxu0 0.0
          %625 = vmatpush2.msra.mxu0 0.0
          %626 = vmatprep.subr.mxu0 0.0
          %627 = vmatpush2.msra.mxu0 0.0
          %628 = vmatprep.subr.mxu0 0.0
          %629 = vmatpush2.msra.mxu0 0.0
          %630 = vmatprep.subr.mxu0 0.0
          %631 = vmatpush2.msra.mxu0 0.0
          %632 = vmatprep.mubr.f32.mxu0 0.0
          %633 = vmatmul.mubr.f32.gmra.mxu0 %v566
          %v634 = vpop.f32.mrf.mxu0
          %v635 = vadd.f32 %v563, %v634
          %v636 = vpop.f32.mrf.mxu0
          %637 = vdwg.mxu0
          %v638 = vxor.u32 %v635, 2147483648
          %v639 = vmul.f32 %v638, 1.442695
          %v640 = vpow.pop %v639
          %v641 = vadd.f32 %v640, 1.0
          %v642 = vrcp.pop %v641
          %v643 = vmul.f32 1.0, %v642
          %v644 = vmul.f32 %v561, %v643
          %vm645 = vcmask 7168
          %646 = vst.msk [vmem:[#allocation3] sm:$0xff] %vm645, %v644
          %v647 = vld [vmem:[%s8] sm:$0xff]
          %v648 = vld [vmem:[%s497] sm:$0xff]
          %v649 = vld [vmem:[%s9] sm:$0xff]
          %v651 = vsel %vm564, %v647, 0
          %653 = vmatprep.subr.mxu0 0.0
          %654 = vmatpush1.msra.mxu0 0.0
          %655 = vmatprep.subr.mxu0 0.0
          %656 = vmatpush1.msra.mxu0 0.0
          %657 = vmatprep.subr.mxu0 0.0
          %658 = vmatpush1.msra.mxu0 0.0
          %659 = vmatprep.subr.mxu0 0.0
          %660 = vmatpush1.msra.mxu0 0.0
          %661 = vmatprep.subr.mxu0 0.0
          %662 = vmatpush1.msra.mxu0 0.0
          %663 = vmatprep.subr.mxu0 0.0
          %664 = vmatpush1.msra.mxu0 0.0
          %665 = vmatprep.subr.mxu0 0.0
          %666 = vmatpush1.msra.mxu0 0.0
          %667 = vmatprep.subr.mxu0 0.0
          %668 = vmatpush1.msra.mxu0 0.0
          %669 = vmatprep.subr.mxu0 0.0
          %670 = vmatpush1.msra.mxu0 0.0
          %671 = vmatprep.subr.mxu0 0.0
          %672 = vmatpush1.msra.mxu0 0.0
          %673 = vmatprep.subr.mxu0 0.0
          %674 = vmatpush1.msra.mxu0 0.0
          %675 = vmatprep.subr.mxu0 0.0
          %676 = vmatpush1.msra.mxu0 0.0
          %677 = vmatprep.subr.mxu0 0.0
          %678 = vmatpush1.msra.mxu0 0.0
          %679 = vmatprep.subr.mxu0 0.0
          %680 = vmatpush1.msra.mxu0 0.0
          %681 = vmatprep.subr.mxu0 0.0
          %682 = vmatpush1.msra.mxu0 0.0
          %683 = vmatprep.subr.mxu0 0.0
          %684 = vmatpush1.msra.mxu0 %v648
          %685 = vmatprep.subr.mxu0 0.0
          %686 = vmatpush2.msra.mxu0 0.0
          %687 = vmatprep.subr.mxu0 0.0
          %688 = vmatpush2.msra.mxu0 0.0
          %689 = vmatprep.subr.mxu0 0.0
          %690 = vmatpush2.msra.mxu0 0.0
          %691 = vmatprep.subr.mxu0 0.0
          %692 = vmatpush2.msra.mxu0 0.0
          %693 = vmatprep.subr.mxu0 0.0
          %694 = vmatpush2.msra.mxu0 0.0
          %695 = vmatprep.subr.mxu0 0.0
          %696 = vmatpush2.msra.mxu0 0.0
          %697 = vmatprep.subr.mxu0 0.0
          %698 = vmatpush2.msra.mxu0 0.0
          %699 = vmatprep.subr.mxu0 0.0
          %700 = vmatpush2.msra.mxu0 0.0
          %701 = vmatprep.subr.mxu0 0.0
          %702 = vmatpush2.msra.mxu0 0.0
          %703 = vmatprep.subr.mxu0 0.0
          %704 = vmatpush2.msra.mxu0 0.0
          %705 = vmatprep.subr.mxu0 0.0
          %706 = vmatpush2.msra.mxu0 0.0
          %707 = vmatprep.subr.mxu0 0.0
          %708 = vmatpush2.msra.mxu0 0.0
          %709 = vmatprep.subr.mxu0 0.0
          %710 = vmatpush2.msra.mxu0 0.0
          %711 = vmatprep.subr.mxu0 0.0
          %712 = vmatpush2.msra.mxu0 0.0
          %713 = vmatprep.subr.mxu0 0.0
          %714 = vmatpush2.msra.mxu0 0.0
          %715 = vmatprep.subr.mxu0 0.0
          %716 = vmatpush2.msra.mxu0 0.0
          %717 = vmatprep.mubr.f32.mxu0 0.0
          %718 = vmatmul.mubr.f32.gmra.mxu0 %v651
          %v719 = vpop.f32.mrf.mxu0
          %v720 = vadd.f32 %v649, %v719
          %v721 = vpop.f32.mrf.mxu0
          %722 = vdwg.mxu0
          %v723 = vtanh.pop %v720
          %724 = vst.msk [vmem:[#allocation4] sm:$0xff] %vm645, %v723
        $region80: #{basic_block_forward.5} parent=75 // pred_fallthru
          _
        %v725 = vld [vmem:[%s478] sm:$0xff]
        %727 = vset.pattern.permute.xlu0 0
        %728 = vperm.xlu0 %727, %v514
        %v729 = vpop.permute.xlu0 %728
        %v731 = vmul.f32 %v729, %v725
        %732 = vset.pattern.permute.xlu0 1
        %733 = vperm.xlu0 %732, %v514
        %v734 = vpop.permute.xlu0 %733
        %v736 = vadd.f32 %v731, %v734
        %v737 = vld [vmem:[%s10] sm:$0xff]
        %v738 = vld [vmem:[%s487] sm:$0xff]
        %vm739 = vcmask 64512
        %v741 = vsel %vm739, %v737, 0
        %743 = vmatprep.subr.mxu0 0.0
        %744 = vmatpush1.msra.mxu0 0.0
        %745 = vmatprep.subr.mxu0 0.0
        %746 = vmatpush1.msra.mxu0 0.0
        %747 = vmatprep.subr.mxu0 0.0
        %748 = vmatpush1.msra.mxu0 0.0
        %749 = vmatprep.subr.mxu0 0.0
        %750 = vmatpush1.msra.mxu0 0.0
        %751 = vmatprep.subr.mxu0 0.0
        %752 = vmatpush1.msra.mxu0 0.0
        %753 = vmatprep.subr.mxu0 0.0
        %754 = vmatpush1.msra.mxu0 0.0
        %755 = vmatprep.subr.mxu0 0.0
        %756 = vmatpush1.msra.mxu0 0.0
        %757 = vmatprep.subr.mxu0 0.0
        %758 = vmatpush1.msra.mxu0 0.0
        %759 = vmatprep.subr.mxu0 0.0
        %760 = vmatpush1.msra.mxu0 0.0
        %761 = vmatprep.subr.mxu0 0.0
        %762 = vmatpush1.msra.mxu0 0.0
        %763 = vmatprep.subr.mxu0 0.0
        %764 = vmatpush1.msra.mxu0 0.0
        %765 = vmatprep.subr.mxu0 0.0
        %766 = vmatpush1.msra.mxu0 0.0
        %767 = vmatprep.subr.mxu0 0.0
        %768 = vmatpush1.msra.mxu0 0.0
        %769 = vmatprep.subr.mxu0 0.0
        %770 = vmatpush1.msra.mxu0 0.0
        %771 = vmatprep.subr.mxu0 0.0
        %772 = vmatpush1.msra.mxu0 0.0
        %773 = vmatprep.subr.mxu0 0.0
        %774 = vmatpush1.msra.mxu0 %v738
        %775 = vmatprep.subr.mxu0 0.0
        %776 = vmatpush2.msra.mxu0 0.0
        %777 = vmatprep.subr.mxu0 0.0
        %778 = vmatpush2.msra.mxu0 0.0
        %779 = vmatprep.subr.mxu0 0.0
        %780 = vmatpush2.msra.mxu0 0.0
        %781 = vmatprep.subr.mxu0 0.0
        %782 = vmatpush2.msra.mxu0 0.0
        %783 = vmatprep.subr.mxu0 0.0
        %784 = vmatpush2.msra.mxu0 0.0
        %785 = vmatprep.subr.mxu0 0.0
        %786 = vmatpush2.msra.mxu0 0.0
        %787 = vmatprep.subr.mxu0 0.0
        %788 = vmatpush2.msra.mxu0 0.0
        %789 = vmatprep.subr.mxu0 0.0
        %790 = vmatpush2.msra.mxu0 0.0
        %791 = vmatprep.subr.mxu0 0.0
        %792 = vmatpush2.msra.mxu0 0.0
        %793 = vmatprep.subr.mxu0 0.0
        %794 = vmatpush2.msra.mxu0 0.0
        %795 = vmatprep.subr.mxu0 0.0
        %796 = vmatpush2.msra.mxu0 0.0
        %797 = vmatprep.subr.mxu0 0.0
        %798 = vmatpush2.msra.mxu0 0.0
        %799 = vmatprep.subr.mxu0 0.0
        %800 = vmatpush2.msra.mxu0 0.0
        %801 = vmatprep.subr.mxu0 0.0
        %802 = vmatpush2.msra.mxu0 0.0
        %803 = vmatprep.subr.mxu0 0.0
        %804 = vmatpush2.msra.mxu0 0.0
        %805 = vmatprep.subr.mxu0 0.0
        %806 = vmatpush2.msra.mxu0 0.0
        %807 = vmatprep.mubr.f32.mxu0 0.0
        %808 = vmatmul.mubr.f32.gmra.mxu0 %v741
        %v809 = vpop.f32.mrf.mxu0
        %v810 = vadd.f32 0.0, %v809
        %v811 = vpop.f32.mrf.mxu0
        %812 = vdwg.mxu0
        %v813 = vld [vmem:[%s4] sm:$0xff]
        %815 = vset.pattern.permute.xlu0 0
        %816 = vperm.xlu0 %815, %v813
        %v817 = vpop.permute.xlu0 %816
        %v819 = vmul.f32 %v817, %v810
        %820 = vset.pattern.permute.xlu0 1
        %821 = vperm.xlu0 %820, %v813
        %v822 = vpop.permute.xlu0 %821
        %v824 = vadd.f32 %v819, %v822
        %v825 = vld [vmem:[#allocation3] sm:$0xff]
        %v826 = vand.u32 2147483647, %v736
        %828 = vset.pattern.permute.xlu0 0
        %829 = vperm.xlu0 %828, %v825
        %v830 = vpop.permute.xlu0 %829
        %v832 = vsub.f32 %v826, %v830
        %v833 = vmax.f32 %v832, 0.0
        %v834 = vld [vmem:[#allocation4] sm:$0xff]
        %836 = vset.pattern.permute.xlu0 0
        %837 = vperm.xlu0 %836, %v834
        %v838 = vpop.permute.xlu0 %837
        %v840 = vmul.f32 %v736, %v838
        %vm841 = vcmp.ge.f32.partialorder %v736, 0.0
        %v842 = vsub.f32 0.0, %v833
        %v843 = vsel %vm841, %v833, %v842
        %v844 = vadd.f32 %v840, %v843
        %v845 = vadd.f32 %v844, %v824
        %vm846 = vcmp.gt.f32.partialorder %v845, 0.0
        %v847 = vmul.f32 %v845, 0.2
        %v848 = vsel %vm846, %v845, %v847
        %849 = vst [vmem:[%s507] sm:$0xff] %v848
      $region76: #{basic_block_forward.5} parent=63 // pred_fallthru
        _
      %s850 = smul.u32 %s27, 3
      %s851 = sadd.s32 %s850, %s29
      %s852 = smul.u32 %s28, %s851
      %s853 = ssub.s32 1, %s28
      %s854 = smul.u32 %s853, 6
      %s855 = sadd.s32 %s852, %s854
      %p856 = scmp.lt.s32.totalorder %s855, 6
      %s857 = scalar_select %p856, %s855, 6
      %s858 = smul.addr %s857, 8
      %s859 = scalar_lea.vmem %s11, %s858
      // Predicated region
      $region81: #{basic_block_forward.5} parent=63 // pred_check
        %p860 = pneg %p332
      $region82: #{basic_block_forward.5} parent=63 // pred_check_branch
        %862 = sbr.rel (%p860) target = $region84
      $region83: #{basic_block_forward.5} parent=63 // pred_region
        %s863 = smul.u32 %s27, 3
        %s864 = sadd.s32 %s863, %s29
        %s865 = smul.u32 %s28, %s864
        %s866 = ssub.s32 1, %s28
        %s867 = smul.u32 %s866, 6
        %s868 = sadd.s32 %s865, %s867
      $region84: #{basic_block_forward.5} parent=63 // pred_fallthru
        _
    $region64: #{basic_block_forward.5} parent=5 // pred_fallthru
      _
    %p869 = scmp.le.s32.totalorder 2, %s17
    // Predicated region
    $region85: #{basic_block_forward.5} parent=5 // pred_check
      %p870 = pneg %p869
    $region86: #{basic_block_forward.5} parent=5 // pred_check_branch
      %872 = sbr.rel (%p870) target = $region88
    $region87: #{basic_block_forward.5} parent=5 // pred_region
      %s873 = ssub.s32 %s17, 2
      // Predicated region
      $region89: #{basic_block_forward.5} parent=87 // pred_check
        %p874 = pneg %p338
      $region90: #{basic_block_forward.5} parent=87 // pred_check_branch
        %876 = sbr.rel (%p874) target = $region92
      $region91: #{basic_block_forward.5} parent=87 // pred_region
        %s877 = smul.u32 %s30, 3
        %s878 = sadd.s32 %s877, %s32
        %s879 = smul.u32 %s31, %s878
        %s880 = ssub.s32 1, %s31
        %s881 = smul.u32 %s880, 6
        %s882 = sadd.s32 %s879, %s881
        %p883 = scmp.lt.s32.totalorder %s882, 6
        %s884 = scalar_select %p883, %s882, 6
        %s885 = smul.addr %s884, 8
        %s886 = scalar_lea.vmem %s11, %s885
      $region92: #{basic_block_forward.5} parent=87 // pred_fallthru
        _
    $region88: #{basic_block_forward.5} parent=5 // pred_fallthru
      _
  $region6: #{basic_block_forward.5} parent=0 // loop_footer
    %s21 = sadd.s32 1, %s17
  $region7: #{basic_block_forward.5} parent=0 // loop_footer_branch
    %16 = sbr.rel target = $region3
  $region8: #{basic_block_forward.5} parent=0 // loop_exit
    _

</llo_original>
